<compile_context>
chip_gen: v6e
topology: v6e:2x2x1
jax: 0.10.0
libtpu: 0.0.40
codegen_flags: <defaults>
</compile_context>

<pallas_src>
import functools
import math

import jax
import jax.numpy as jnp
import numpy as np
from jax.experimental import pallas as pl
from jax.experimental.pallas import tpu as pltpu

HIDDEN = 4096
POOL_OUT = 10          # AdaptiveAvgPool2d((10, 10))
LANE = 128
TM_MAX = 256           # batch tile cap (v6e/v5e could push 384-512 for huge N)


def _round_up(x, m):
    return ((x + m - 1) // m) * m


@functools.lru_cache(maxsize=None)
def _adaptive_pool_matrix_np(c):
    """(C, 100) matrix P so that  x_flat @ P ==
    flatten(AdaptiveAvgPool2d((10,10))(x.view(N, 1, C, 1)), 1).  Cached per C."""
    P = np.zeros((c, POOL_OUT * POOL_OUT), dtype=np.float32)
    for i in range(POOL_OUT):
        start = (i * c) // POOL_OUT
        end = math.ceil((i + 1) * c / POOL_OUT)
        w = 1.0 / (end - start)
        for j in range(POOL_OUT):   # width pools a size-1 extent -> replication
            P[start:end, i * POOL_OUT + j] = w
    return P


@functools.lru_cache(maxsize=None)
def _bf16_valu_ok():
    """bf16 epilogue only on generations with a bf16 VALU (v6e / v7x)."""
    try:
        kind = jax.devices()[0].device_kind.lower()
    except Exception:
        return False
    return not any(g in kind for g in ("v2", "v3", "v4", "v5"))


def prepare_params(params, channels):
    """One-time fold/pad/cast of the parameters for the kernel.

    C <= 128: fold the pooling matrix into W1 (W1_eff = P @ W1, plain XLA, once).
    C  > 128: keep P separate (padded (C, 128)) and pad the original W1 to
    (128, 4096) so the first-weight HBM traffic stays ~constant in C.
    The class dim is zero-padded to 128 for lane-dense output stores.
    """
    w1, b1, w2, b2 = params
    classes = w2.shape[1]
    classes_pad = _round_up(classes, LANE)

    p = jnp.asarray(_adaptive_pool_matrix_np(channels))              # (C, 100) f32
    k_in = POOL_OUT * POOL_OUT                                       # 100

    if channels <= LANE:
        pool = None
        w1k = jnp.dot(p, w1)                                         # (C, 4096) f32 fold
    else:
        pool = jnp.pad(p, ((0, 0), (0, LANE - k_in))).astype(jnp.bfloat16)   # (C, 128)
        w1k = jnp.pad(w1, ((0, LANE - k_in), (0, 0)))                # (128, 4096)

    w2p = jnp.pad(w2, ((0, 0), (0, classes_pad - classes)))
    b2p = jnp.pad(b2, ((0, 0), (0, classes_pad - classes)))          # zero pad lanes

    # TODO(synk): fp8 (v7x) / int8 (v5e-v6e) weight quantization with per-column
    # f32 scales would halve the dominant HBM weight bytes; needs accuracy checks.
    return dict(
        fold=pool is None,
        pool=pool,
        w1=w1k.astype(jnp.bfloat16),
        b1=b1.astype(jnp.float32),
        w2=w2p.astype(jnp.bfloat16),
        b2=b2p.astype(jnp.float32),
        classes=classes,
        channels=channels,
    )


def _mcc_kernel(*refs, fold, f32_epilogue):
    if fold:
        x_ref, w1_ref, b1_ref, w2_ref, b2_ref, o_ref = refs
        xk = x_ref[...]                                   # (tm, C) bf16
    else:
        x_ref, p_ref, w1_ref, b1_ref, w2_ref, b2_ref, o_ref = refs
        # Pool as a tiny matmul: (tm, C) @ (C, 128) -> (tm, 128); cols >= 100 are zero.
        xk = jnp.dot(x_ref[...], p_ref[...],
                     preferred_element_type=jnp.float32).astype(jnp.bfloat16)

    # fc[0]: Linear(100, 4096)  (pool pre-folded into w1 when fold=True).
    h32 = jnp.dot(xk, w1_ref[...], preferred_element_type=jnp.float32)

    # fc[1..2]: bias + ReLU (Dropout is identity at inference).
    if f32_epilogue:       # v5e and older: no bf16 VALU
        h = jnp.maximum(h32 + b1_ref[...], 0.0).astype(jnp.bfloat16)
    else:                  # v6e / v7x: packed bf16 VALU halves the add/relu work
        h = jnp.maximum(h32.astype(jnp.bfloat16) + b1_ref[...].astype(jnp.bfloat16), 0)

    # fc[3]: Linear(4096, classes), lane-dense (class-padded) f32 store.
    o_ref[...] = jnp.dot(h, w2_ref[...], preferred_element_type=jnp.float32) + b2_ref[...]


def minority_class_classifier(x, prepared, mod="Res"):
    """x: (N, C, 1, 1) float32.  `prepared` from prepare_params.
    Returns (N, classes) float32."""
    assert "Res" in mod
    # TODO(synk): 'VGG' branch (AdaptiveAvgPool2d((7,7)), input_size=512*7*7) not wired.
    n, c, hh, ww = x.shape
    assert hh == 1 and ww == 1, "fc(100,...) in the 'Res' branch requires (N, C, 1, 1)"
    assert c == prepared["channels"]

    # bf16 cast in the wrapper (half the x DMA bytes); no zero-pad along C.
    x_flat = x.reshape(n, c).astype(jnp.bfloat16)

    # Batch tiling: multiple of 16 (bf16 sublane packing), capped at TM_MAX.
    tm_cap = min(TM_MAX, _round_up(n, 16))
    n_tiles = pl.cdiv(n, tm_cap)
    # Give the "parallel" axis >= 2 steps for megacore once the batch is big
    # enough that compute (not weight streaming) dominates.
    if n >= 128 and n_tiles < 2:
        n_tiles = 2
    tm = _round_up(pl.cdiv(n, n_tiles), 16)
    n_pad = tm * n_tiles
    if n_pad != n:
        x_flat = jnp.pad(x_flat, ((0, n_pad - n), (0, 0)))

    fold = prepared["fold"]
    w1, b1, w2, b2 = prepared["w1"], prepared["b1"], prepared["w2"], prepared["b2"]
    classes = prepared["classes"]
    classes_pad = w2.shape[1]

    whole = lambda i: (0, 0)   # weights/biases: constant block index -> fetched once
    in_specs = [pl.BlockSpec((tm, c), lambda i: (i, 0))]
    inputs = [x_flat]
    if not fold:
        in_specs.append(pl.BlockSpec(prepared["pool"].shape, whole))
        inputs.append(prepared["pool"])
    in_specs += [pl.BlockSpec(w1.shape, whole), pl.BlockSpec(b1.shape, whole),
                 pl.BlockSpec(w2.shape, whole), pl.BlockSpec(b2.shape, whole)]
    inputs += [w1, b1, w2, b2]

    # TODO(synk): if profiling shows the constant-index weight blocks are
    # double-buffered, single-buffer them (pipeline_mode=pl.Buffered(1)) to halve
    # their VMEM footprint; also tile HIDDEN ('arbitrary' axis + f32 accumulator)
    # if `classes` ever grows large enough to pressure v7x's 64 MiB VMEM.
    kernel = functools.partial(_mcc_kernel, fold=fold,
                               f32_epilogue=not _bf16_valu_ok())

    out = pl.pallas_call(
        kernel,
        out_shape=jax.ShapeDtypeStruct((n_pad, classes_pad), jnp.float32),
        grid=(n_tiles,),
        in_specs=in_specs,
        out_specs=pl.BlockSpec((tm, classes_pad), lambda i: (i, 0)),
        compiler_params=pltpu.CompilerParams(
            dimension_semantics=("parallel",)),   # batch tiles shard across TCs
    )(*inputs)

    return out[:n, :classes]


def init_params(key, classes):
    """Deterministic params mimicking torch.nn.Linear default init
    (U[-1/sqrt(fan_in), 1/sqrt(fan_in)]); weights stored as (in, out)."""
    k1, k2, k3, k4 = jax.random.split(key, 4)
    in1 = POOL_OUT * POOL_OUT  # 100
    bound1 = 1.0 / math.sqrt(in1)
    bound2 = 1.0 / math.sqrt(HIDDEN)
    w1 = jax.random.uniform(k1, (in1, HIDDEN), jnp.float32, -bound1, bound1)
    b1 = jax.random.uniform(k2, (1, HIDDEN), jnp.float32, -bound1, bound1)
    w2 = jax.random.uniform(k3, (HIDDEN, classes), jnp.float32, -bound2, bound2)
    b2 = jax.random.uniform(k4, (1, classes), jnp.float32, -bound2, bound2)
    return (w1, b1, w2, b2)


def _reference(x, params):
    """Pure-JAX f32 reference of the original forward (pool as explicit matmul)."""
    n = x.shape[0]
    x_flat = x.reshape(n, -1).astype(jnp.float32)
    p = jnp.asarray(_adaptive_pool_matrix_np(x_flat.shape[1]))
    w1, b1, w2, b2 = params
    h = jnp.maximum(x_flat @ p @ w1 + b1, 0.0)
    return h @ w2 + b2


if __name__ == "__main__":
    key = jax.random.PRNGKey(0)
    k_x1, k_x2, k_p1, k_p2 = jax.random.split(key, 4)

    # Case 1: C <= 128 -> pool folded into W1.
    batch, channels, classes = 2, 64, 10
    x = jax.random.normal(k_x1, (batch, channels, 1, 1), jnp.float32)
    params = init_params(k_p1, classes)
    prepared = prepare_params(params, channels)
    out = jax.block_until_ready(minority_class_classifier(x, prepared, mod="Res"))
    ref = _reference(x, params)
    assert out.shape == (batch, classes)
    assert jnp.allclose(out, ref, atol=3e-2, rtol=3e-2), "fold-path mismatch vs reference"

    # Case 2: C > 128 -> pool kept as a tiny in-kernel matmul, original W1 streamed.
    batch2, channels2, classes2 = 2, 160, 10
    x2 = jax.random.normal(k_x2, (batch2, channels2, 1, 1), jnp.float32)
    params2 = init_params(k_p2, classes2)
    prepared2 = prepare_params(params2, channels2)
    out2 = jax.block_until_ready(minority_class_classifier(x2, prepared2, mod="Res"))
    ref2 = _reference(x2, params2)
    assert out2.shape == (batch2, classes2)
    assert jnp.allclose(out2, ref2, atol=3e-2, rtol=3e-2), "unfold-path mismatch vs reference"

    print("KERNEL_OK")
</pallas_src>

<mosaic_0001>
module attributes {stable_mosaic.version = 11 : i64} {
  func.func @_mcc_kernel(%arg0: i32, %arg1: memref<16x64xbf16, #tpu.memory_space<vmem>>, %arg2: memref<64x4096xbf16, #tpu.memory_space<vmem>>, %arg3: memref<1x4096xf32, #tpu.memory_space<vmem>>, %arg4: memref<4096x128xbf16, #tpu.memory_space<vmem>>, %arg5: memref<1x128xf32, #tpu.memory_space<vmem>>, %arg6: memref<16x128xf32, #tpu.memory_space<vmem>>) attributes {dimension_semantics = [#tpu.dimension_semantics<parallel>], iteration_bounds = array<i64: 1>, scalar_prefetch = 0 : i64, scratch_operands = 0 : i64, tpu.core_type = #tpu.core_type<tc>, window_params = [{transform_indices = @transform_0, window_bounds = array<i64: 16, 64>}, {pipeline_mode = #tpu.pipeline_mode<synchronous>, transform_indices = @transform_1, window_bounds = array<i64: 64, 4096>}, {pipeline_mode = #tpu.pipeline_mode<synchronous>, transform_indices = @transform_2, window_bounds = array<i64: 1, 4096>}, {pipeline_mode = #tpu.pipeline_mode<synchronous>, transform_indices = @transform_3, window_bounds = array<i64: 4096, 128>}, {pipeline_mode = #tpu.pipeline_mode<synchronous>, transform_indices = @transform_4, window_bounds = array<i64: 1, 128>}, {transform_indices = @transform_5, window_bounds = array<i64: 16, 128>}]} {
    %c0 = arith.constant 0 : index
    %c0_0 = arith.constant 0 : index
    %0 = vector.load %arg1[%c0, %c0_0] : memref<16x64xbf16, #tpu.memory_space<vmem>>, vector<16x64xbf16>
    %c0_1 = arith.constant 0 : index
    %c0_2 = arith.constant 0 : index
    %1 = vector.load %arg2[%c0_1, %c0_2] : memref<64x4096xbf16, #tpu.memory_space<vmem>>, vector<64x4096xbf16>
    %cst = arith.constant dense<0.000000e+00> : vector<16x4096xf32>
    %2 = tpu.matmul %0, %1, %cst {dimension_numbers = #tpu.dot_dimension_numbers<[1], [0], [0], [1], [0, 0, 1, 1], [], []>} : vector<16x64xbf16>, vector<64x4096xbf16>, vector<16x4096xf32> -> vector<16x4096xf32>
    %3 = arith.truncf %2 : vector<16x4096xf32> to vector<16x4096xbf16>
    %c0_3 = arith.constant 0 : index
    %c0_4 = arith.constant 0 : index
    %4 = vector.load %arg3[%c0_3, %c0_4] : memref<1x4096xf32, #tpu.memory_space<vmem>>, vector<1x4096xf32>
    %5 = arith.truncf %4 : vector<1x4096xf32> to vector<1x4096xbf16>
    %6 = vector.broadcast %5 : vector<1x4096xbf16> to vector<16x4096xbf16>
    %7 = arith.addf %3, %6 : vector<16x4096xbf16>
    %cst_5 = arith.constant 0.000000e+00 : bf16
    %8 = vector.broadcast %cst_5 : bf16 to vector<16x4096xbf16>
    %9 = arith.maximumf %7, %8 : vector<16x4096xbf16>
    %c0_6 = arith.constant 0 : index
    %c0_7 = arith.constant 0 : index
    %10 = vector.load %arg4[%c0_6, %c0_7] : memref<4096x128xbf16, #tpu.memory_space<vmem>>, vector<4096x128xbf16>
    %cst_8 = arith.constant dense<0.000000e+00> : vector<16x128xf32>
    %11 = tpu.matmul %9, %10, %cst_8 {dimension_numbers = #tpu.dot_dimension_numbers<[1], [0], [0], [1], [0, 0, 1, 1], [], []>} : vector<16x4096xbf16>, vector<4096x128xbf16>, vector<16x128xf32> -> vector<16x128xf32>
    %c0_9 = arith.constant 0 : index
    %c0_10 = arith.constant 0 : index
    %12 = vector.load %arg5[%c0_9, %c0_10] : memref<1x128xf32, #tpu.memory_space<vmem>>, vector<1x128xf32>
    %13 = vector.broadcast %12 : vector<1x128xf32> to vector<16x128xf32>
    %14 = arith.addf %11, %13 : vector<16x128xf32>
    %c0_11 = arith.constant 0 : index
    %c0_12 = arith.constant 0 : index
    %15 = vector.load %arg6[%c0_11, %c0_12] : memref<16x128xf32, #tpu.memory_space<vmem>>, vector<16x128xf32>
    tpu.vector_store %arg6[%c0_11, %c0_12], %14 {strides = array<i32>} : memref<16x128xf32, #tpu.memory_space<vmem>>, vector<16x128xf32>,
    return
  }
  func.func @transform_0(%arg0: i32) -> (i32, i32) {
    %c0_i32 = arith.constant 0 : i32
    %c0_i32_0 = arith.constant 0 : i32
    return %arg0, %c0_i32 : i32, i32
  }
  func.func @transform_1(%arg0: i32) -> (i32, i32) {
    %c0_i32 = arith.constant 0 : i32
    %c0_i32_0 = arith.constant 0 : i32
    %c0_i32_1 = arith.constant 0 : i32
    return %c0_i32, %c0_i32_0 : i32, i32
  }
  func.func @transform_2(%arg0: i32) -> (i32, i32) {
    %c0_i32 = arith.constant 0 : i32
    %c0_i32_0 = arith.constant 0 : i32
    %c0_i32_1 = arith.constant 0 : i32
    return %c0_i32, %c0_i32_0 : i32, i32
  }
  func.func @transform_3(%arg0: i32) -> (i32, i32) {
    %c0_i32 = arith.constant 0 : i32
    %c0_i32_0 = arith.constant 0 : i32
    %c0_i32_1 = arith.constant 0 : i32
    return %c0_i32, %c0_i32_0 : i32, i32
  }
  func.func @transform_4(%arg0: i32) -> (i32, i32) {
    %c0_i32 = arith.constant 0 : i32
    %c0_i32_0 = arith.constant 0 : i32
    %c0_i32_1 = arith.constant 0 : i32
    return %c0_i32, %c0_i32_0 : i32, i32
  }
  func.func @transform_5(%arg0: i32) -> (i32, i32) {
    %c0_i32 = arith.constant 0 : i32
    %c0_i32_0 = arith.constant 0 : i32
    return %arg0, %c0_i32 : i32, i32
  }
}

</mosaic_0001>

<llo_original>
// kernel: tpu_custom_call.1
$region0: #{tpu_custom_call.1}
  #allocation0 [shape = 'u32[]', space=smem, size = 0x4, offset = 0x4, fixed_abs, tag = 'smem constant byte address 0x4 - core index']
  #allocation1 [shape = 'u32[144,128]{1,0:T(1,128)}', space=vmem, size = 0x12000, scoped, tag = 'internal scratch']
  %s0 = inlined_call_operand.hbm [shape: bf16[16,64], index: 0, kind: input, shape index: {}]
  %s1 = inlined_call_operand.hbm [shape: bf16[64,4096], index: 1, kind: input, shape index: {}]
  %s2 = inlined_call_operand.hbm [shape: f32[1,4096], index: 2, kind: input, shape index: {}]
  %s3 = inlined_call_operand.hbm [shape: bf16[4096,128], index: 3, kind: input, shape index: {}]
  %s4 = inlined_call_operand.vmem [shape: f32[1,128], index: 4, kind: input, shape index: {}]
  %s5 = inlined_call_operand.hbm [shape: f32[16,128], index: 5, kind: output, shape index: {}]
  %s6 = sld [smem:[#allocation0]]
  $region46: #{tpu_custom_call.1} parent=0
    _
  %s8 = ssub.s32 1, %s6
  %s9 = scalar_select 0, %s8, %s6
  $region1: #{tpu_custom_call.1} parent=0
    #allocation2 [shape = 'u8[4096]{0}', space=vmem, size = 0x1000, scoped, tag = 'input window, operand 0, single buffered']
    #allocation3 [shape = 's32[1]{0}', space=sflag, size = 0x4, scoped, tag = 'scoped memory for tpu_custom_call.1']
    #allocation4 [shape = 's32[1]{0}', space=sflag, size = 0x4, scoped, tag = 'scoped memory for tpu_custom_call.1']
    #allocation5 [shape = 'u8[524288]{0}', space=vmem, size = 0x80000, scoped, tag = 'input window, operand 1, single buffered']
    #allocation6 [shape = 's32[1]{0}', space=sflag, size = 0x4, scoped, tag = 'scoped memory for tpu_custom_call.1']
    #allocation7 [shape = 'u8[16384]{0}', space=vmem, size = 0x4000, scoped, tag = 'input window, operand 2, single buffered']
    #allocation8 [shape = 'u8[1048576]{0}', space=vmem, size = 0x100000, scoped, tag = 'input window, operand 3, single buffered']
    #allocation9 [shape = 's32[1]{0}', space=sflag, size = 0x4, scoped, tag = 'scoped memory for tpu_custom_call.1']
    #allocation10 [shape = 'u8[8192]{0}', space=vmem, size = 0x2000, scoped, tag = 'output window, operand 0, single buffered']
    %10 = vsyncpa [#allocation3], 0
    %11 = vsyncpa [#allocation6], 0
    %12 = vsyncpa [#allocation9], 0
    %13 = vsyncpa [#allocation4], 0
    // Predicated region
    $region2: #{tpu_custom_call.1} parent=1 // pred_check
      _
    $region3: #{tpu_custom_call.1} parent=1 // pred_check_branch
      %15 = sbr.rel (0) target = $region5
    $region4: #{tpu_custom_call.1} parent=1 // pred_region
      %s17 = ssub.s32 128, 128
      %18 = vsyncadd [#allocation3], %s17
      %s19 = sshll.u32 [#allocation2], 4
      %s20 = int_to_ptr.vmem [resolvable:$true] %s19
      %25 = dma.hbm_to_vmem [thread:$0]  %s0, 128, %s20, [#allocation3], 64, 64, 4
    $region5: #{tpu_custom_call.1} parent=1 // pred_fallthru
      _
    // Predicated region
    $region6: #{tpu_custom_call.1} parent=1 // pred_check
      _
    $region7: #{tpu_custom_call.1} parent=1 // pred_check_branch
      %27 = sbr.rel (0) target = $region9
    $region8: #{tpu_custom_call.1} parent=1 // pred_region
      %s29 = ssub.s32 16384, 16384
      %30 = vsyncadd [#allocation6], %s29
      %s31 = sshll.u32 [#allocation5], 4
      %s32 = int_to_ptr.vmem [resolvable:$true] %s31
      %37 = dma.hbm_to_vmem [thread:$0]  %s1, 16384, %s32, [#allocation6], 2048, 2048, 128
    $region9: #{tpu_custom_call.1} parent=1 // pred_fallthru
      _
    // Predicated region
    $region10: #{tpu_custom_call.1} parent=1 // pred_check
      _
    $region11: #{tpu_custom_call.1} parent=1 // pred_check_branch
      %39 = sbr.rel (0) target = $region13
    $region12: #{tpu_custom_call.1} parent=1 // pred_region
      %s41 = ssub.s32 512, 512
      %42 = vsyncadd [#allocation6], %s41
      %s44 = sshll.u32 [#allocation7], 4
      %s45 = int_to_ptr.vmem [resolvable:$true] %s44
      %47 = dma.hbm_to_vmem [thread:$0]  %s2, 512, %s45, [#allocation6]
    $region13: #{tpu_custom_call.1} parent=1 // pred_fallthru
      _
    // Predicated region
    $region14: #{tpu_custom_call.1} parent=1 // pred_check
      _
    $region15: #{tpu_custom_call.1} parent=1 // pred_check_branch
      %49 = sbr.rel (0) target = $region17
    $region16: #{tpu_custom_call.1} parent=1 // pred_region
      %s51 = ssub.s32 32768, 32768
      %52 = vsyncadd [#allocation9], %s51
      %s53 = sshll.u32 [#allocation8], 4
      %s54 = int_to_ptr.vmem [resolvable:$true] %s53
      %59 = dma.hbm_to_vmem [thread:$0]  %s3, 32768, %s54, [#allocation9], 64, 64, 4
    $region17: #{tpu_custom_call.1} parent=1 // pred_fallthru
      _
    // Predicated region
    $region18: #{tpu_custom_call.1} parent=1 // pred_check
      _
    $region19: #{tpu_custom_call.1} parent=1 // pred_check_branch
      %61 = sbr.rel (0) target = $region21
    $region20: #{tpu_custom_call.1} parent=1 // pred_region
      _
    $region21: #{tpu_custom_call.1} parent=1 // pred_fallthru
      _
    // Predicated region
    $region22: #{tpu_custom_call.1} parent=1 // pred_check
      _
    $region23: #{tpu_custom_call.1} parent=1 // pred_check_branch
      %63 = sbr.rel (0) target = $region25
    $region24: #{tpu_custom_call.1} parent=1 // pred_region
      %64 = dma.done [#allocation3], 128
    $region25: #{tpu_custom_call.1} parent=1 // pred_fallthru
      _
    // Predicated region
    $region26: #{tpu_custom_call.1} parent=1 // pred_check
      _
    $region27: #{tpu_custom_call.1} parent=1 // pred_check_branch
      %66 = sbr.rel (0) target = $region29
    $region28: #{tpu_custom_call.1} parent=1 // pred_region
      %67 = dma.done [#allocation6], 16384
    $region29: #{tpu_custom_call.1} parent=1 // pred_fallthru
      _
    // Predicated region
    $region30: #{tpu_custom_call.1} parent=1 // pred_check
      _
    $region31: #{tpu_custom_call.1} parent=1 // pred_check_branch
      %69 = sbr.rel (0) target = $region33
    $region32: #{tpu_custom_call.1} parent=1 // pred_region
      %70 = dma.done [#allocation6], 512
    $region33: #{tpu_custom_call.1} parent=1 // pred_fallthru
      _
    // Predicated region
    $region34: #{tpu_custom_call.1} parent=1 // pred_check
      _
    $region35: #{tpu_custom_call.1} parent=1 // pred_check_branch
      %72 = sbr.rel (0) target = $region37
    $region36: #{tpu_custom_call.1} parent=1 // pred_region
      %73 = dma.done [#allocation9], 32768
    $region37: #{tpu_custom_call.1} parent=1 // pred_fallthru
      _
    %v75 = vld [vmem:[#allocation2] sm:$0xf]
    %v76 = vld [vmem:[#allocation2 + $0x4] sm:$0xf]
    %v77 = vld [vmem:[#allocation5] sm:$0xff]
    %v78 = vld [vmem:[#allocation5 + $0x8] sm:$0xff]
    %v79 = vld [vmem:[#allocation5 + $0x10] sm:$0xff]
    %v80 = vld [vmem:[#allocation5 + $0x18] sm:$0xff]
    %v81 = vld [vmem:[#allocation5 + $0x20] sm:$0xff]
    %v82 = vld [vmem:[#allocation5 + $0x28] sm:$0xff]
    %v83 = vld [vmem:[#allocation5 + $0x30] sm:$0xff]
    %v84 = vld [vmem:[#allocation5 + $0x38] sm:$0xff]
    %v85 = vld [vmem:[#allocation5 + $0x40] sm:$0xff]
    %v86 = vld [vmem:[#allocation5 + $0x48] sm:$0xff]
    %v87 = vld [vmem:[#allocation5 + $0x50] sm:$0xff]
    %v88 = vld [vmem:[#allocation5 + $0x58] sm:$0xff]
    %v89 = vld [vmem:[#allocation5 + $0x60] sm:$0xff]
    %v90 = vld [vmem:[#allocation5 + $0x68] sm:$0xff]
    %v91 = vld [vmem:[#allocation5 + $0x70] sm:$0xff]
    %v92 = vld [vmem:[#allocation5 + $0x78] sm:$0xff]
    %v93 = vld [vmem:[#allocation5 + $0x80] sm:$0xff]
    %v94 = vld [vmem:[#allocation5 + $0x88] sm:$0xff]
    %v95 = vld [vmem:[#allocation5 + $0x90] sm:$0xff]
    %v96 = vld [vmem:[#allocation5 + $0x98] sm:$0xff]
    %v97 = vld [vmem:[#allocation5 + $0xa0] sm:$0xff]
    %v98 = vld [vmem:[#allocation5 + $0xa8] sm:$0xff]
    %v99 = vld [vmem:[#allocation5 + $0xb0] sm:$0xff]
    %v100 = vld [vmem:[#allocation5 + $0xb8] sm:$0xff]
    %v101 = vld [vmem:[#allocation5 + $0xc0] sm:$0xff]
    %v102 = vld [vmem:[#allocation5 + $0xc8] sm:$0xff]
    %v103 = vld [vmem:[#allocation5 + $0xd0] sm:$0xff]
    %v104 = vld [vmem:[#allocation5 + $0xd8] sm:$0xff]
    %v105 = vld [vmem:[#allocation5 + $0xe0] sm:$0xff]
    %v106 = vld [vmem:[#allocation5 + $0xe8] sm:$0xff]
    %v107 = vld [vmem:[#allocation5 + $0xf0] sm:$0xff]
    %v108 = vld [vmem:[#allocation5 + $0xf8] sm:$0xff]
    %v109 = vld [vmem:[#allocation5 + $0x100] sm:$0xff]
    %v110 = vld [vmem:[#allocation5 + $0x108] sm:$0xff]
    %v111 = vld [vmem:[#allocation5 + $0x110] sm:$0xff]
    %v112 = vld [vmem:[#allocation5 + $0x118] sm:$0xff]
    %v113 = vld [vmem:[#allocation5 + $0x120] sm:$0xff]
    %v114 = vld [vmem:[#allocation5 + $0x128] sm:$0xff]
    %v115 = vld [vmem:[#allocation5 + $0x130] sm:$0xff]
    %v116 = vld [vmem:[#allocation5 + $0x138] sm:$0xff]
    %v117 = vld [vmem:[#allocation5 + $0x140] sm:$0xff]
    %v118 = vld [vmem:[#allocation5 + $0x148] sm:$0xff]
    %v119 = vld [vmem:[#allocation5 + $0x150] sm:$0xff]
    %v120 = vld [vmem:[#allocation5 + $0x158] sm:$0xff]
    %v121 = vld [vmem:[#allocation5 + $0x160] sm:$0xff]
    %v122 = vld [vmem:[#allocation5 + $0x168] sm:$0xff]
    %v123 = vld [vmem:[#allocation5 + $0x170] sm:$0xff]
    %v124 = vld [vmem:[#allocation5 + $0x178] sm:$0xff]
    %v125 = vld [vmem:[#allocation5 + $0x180] sm:$0xff]
    %v126 = vld [vmem:[#allocation5 + $0x188] sm:$0xff]
    %v127 = vld [vmem:[#allocation5 + $0x190] sm:$0xff]
    %v128 = vld [vmem:[#allocation5 + $0x198] sm:$0xff]
    %v129 = vld [vmem:[#allocation5 + $0x1a0] sm:$0xff]
    %v130 = vld [vmem:[#allocation5 + $0x1a8] sm:$0xff]
    %v131 = vld [vmem:[#allocation5 + $0x1b0] sm:$0xff]
    %v132 = vld [vmem:[#allocation5 + $0x1b8] sm:$0xff]
    %v133 = vld [vmem:[#allocation5 + $0x1c0] sm:$0xff]
    %v134 = vld [vmem:[#allocation5 + $0x1c8] sm:$0xff]
    %v135 = vld [vmem:[#allocation5 + $0x1d0] sm:$0xff]
    %v136 = vld [vmem:[#allocation5 + $0x1d8] sm:$0xff]
    %v137 = vld [vmem:[#allocation5 + $0x1e0] sm:$0xff]
    %v138 = vld [vmem:[#allocation5 + $0x1e8] sm:$0xff]
    %v139 = vld [vmem:[#allocation5 + $0x1f0] sm:$0xff]
    %v140 = vld [vmem:[#allocation5 + $0x1f8] sm:$0xff]
    %v141 = vld [vmem:[#allocation5 + $0x200] sm:$0xff]
    %v142 = vld [vmem:[#allocation5 + $0x208] sm:$0xff]
    %v143 = vld [vmem:[#allocation5 + $0x210] sm:$0xff]
    %v144 = vld [vmem:[#allocation5 + $0x218] sm:$0xff]
    %v145 = vld [vmem:[#allocation5 + $0x220] sm:$0xff]
    %v146 = vld [vmem:[#allocation5 + $0x228] sm:$0xff]
    %v147 = vld [vmem:[#allocation5 + $0x230] sm:$0xff]
    %v148 = vld [vmem:[#allocation5 + $0x238] sm:$0xff]
    %v149 = vld [vmem:[#allocation5 + $0x240] sm:$0xff]
    %v150 = vld [vmem:[#allocation5 + $0x248] sm:$0xff]
    %v151 = vld [vmem:[#allocation5 + $0x250] sm:$0xff]
    %v152 = vld [vmem:[#allocation5 + $0x258] sm:$0xff]
    %v153 = vld [vmem:[#allocation5 + $0x260] sm:$0xff]
    %v154 = vld [vmem:[#allocation5 + $0x268] sm:$0xff]
    %v155 = vld [vmem:[#allocation5 + $0x270] sm:$0xff]
    %v156 = vld [vmem:[#allocation5 + $0x278] sm:$0xff]
    %v157 = vld [vmem:[#allocation5 + $0x280] sm:$0xff]
    %v158 = vld [vmem:[#allocation5 + $0x288] sm:$0xff]
    %v159 = vld [vmem:[#allocation5 + $0x290] sm:$0xff]
    %v160 = vld [vmem:[#allocation5 + $0x298] sm:$0xff]
    %v161 = vld [vmem:[#allocation5 + $0x2a0] sm:$0xff]
    %v162 = vld [vmem:[#allocation5 + $0x2a8] sm:$0xff]
    %v163 = vld [vmem:[#allocation5 + $0x2b0] sm:$0xff]
    %v164 = vld [vmem:[#allocation5 + $0x2b8] sm:$0xff]
    %v165 = vld [vmem:[#allocation5 + $0x2c0] sm:$0xff]
    %v166 = vld [vmem:[#allocation5 + $0x2c8] sm:$0xff]
    %v167 = vld [vmem:[#allocation5 + $0x2d0] sm:$0xff]
    %v168 = vld [vmem:[#allocation5 + $0x2d8] sm:$0xff]
    %v169 = vld [vmem:[#allocation5 + $0x2e0] sm:$0xff]
    %v170 = vld [vmem:[#allocation5 + $0x2e8] sm:$0xff]
    %v171 = vld [vmem:[#allocation5 + $0x2f0] sm:$0xff]
    %v172 = vld [vmem:[#allocation5 + $0x2f8] sm:$0xff]
    %v173 = vld [vmem:[#allocation5 + $0x300] sm:$0xff]
    %v174 = vld [vmem:[#allocation5 + $0x308] sm:$0xff]
    %v175 = vld [vmem:[#allocation5 + $0x310] sm:$0xff]
    %v176 = vld [vmem:[#allocation5 + $0x318] sm:$0xff]
    %v177 = vld [vmem:[#allocation5 + $0x320] sm:$0xff]
    %v178 = vld [vmem:[#allocation5 + $0x328] sm:$0xff]
    %v179 = vld [vmem:[#allocation5 + $0x330] sm:$0xff]
    %v180 = vld [vmem:[#allocation5 + $0x338] sm:$0xff]
    %v181 = vld [vmem:[#allocation5 + $0x340] sm:$0xff]
    %v182 = vld [vmem:[#allocation5 + $0x348] sm:$0xff]
    %v183 = vld [vmem:[#allocation5 + $0x350] sm:$0xff]
    %v184 = vld [vmem:[#allocation5 + $0x358] sm:$0xff]
    %v185 = vld [vmem:[#allocation5 + $0x360] sm:$0xff]
    %v186 = vld [vmem:[#allocation5 + $0x368] sm:$0xff]
    %v187 = vld [vmem:[#allocation5 + $0x370] sm:$0xff]
    %v188 = vld [vmem:[#allocation5 + $0x378] sm:$0xff]
    %v189 = vld [vmem:[#allocation5 + $0x380] sm:$0xff]
    %v190 = vld [vmem:[#allocation5 + $0x388] sm:$0xff]
    %v191 = vld [vmem:[#allocation5 + $0x390] sm:$0xff]
    %v192 = vld [vmem:[#allocation5 + $0x398] sm:$0xff]
    %v193 = vld [vmem:[#allocation5 + $0x3a0] sm:$0xff]
    %v194 = vld [vmem:[#allocation5 + $0x3a8] sm:$0xff]
    %v195 = vld [vmem:[#allocation5 + $0x3b0] sm:$0xff]
    %v196 = vld [vmem:[#allocation5 + $0x3b8] sm:$0xff]
    %v197 = vld [vmem:[#allocation5 + $0x3c0] sm:$0xff]
    %v198 = vld [vmem:[#allocation5 + $0x3c8] sm:$0xff]
    %v199 = vld [vmem:[#allocation5 + $0x3d0] sm:$0xff]
    %v200 = vld [vmem:[#allocation5 + $0x3d8] sm:$0xff]
    %v201 = vld [vmem:[#allocation5 + $0x3e0] sm:$0xff]
    %v202 = vld [vmem:[#allocation5 + $0x3e8] sm:$0xff]
    %v203 = vld [vmem:[#allocation5 + $0x3f0] sm:$0xff]
    %v204 = vld [vmem:[#allocation5 + $0x3f8] sm:$0xff]
    %v207 = vunpack.c.l.b16 %v75
    %v208 = vunpack.c.l.b16 %v76
    %v209 = vpack.c.b16 %v208, %v207
    %v338 = vunpack.c.l.b16 %v77
    %v339 = vunpack.c.h.b16 %v77
    %v340 = vunpack.c.l.b16 %v78
    %v341 = vunpack.c.h.b16 %v78
    %v342 = vunpack.c.l.b16 %v79
    %v343 = vunpack.c.h.b16 %v79
    %v344 = vunpack.c.l.b16 %v80
    %v345 = vunpack.c.h.b16 %v80
    %v346 = vunpack.c.l.b16 %v81
    %v347 = vunpack.c.h.b16 %v81
    %v348 = vunpack.c.l.b16 %v82
    %v349 = vunpack.c.h.b16 %v82
    %v350 = vunpack.c.l.b16 %v83
    %v351 = vunpack.c.h.b16 %v83
    %v352 = vunpack.c.l.b16 %v84
    %v353 = vunpack.c.h.b16 %v84
    %v354 = vunpack.c.l.b16 %v85
    %v355 = vunpack.c.h.b16 %v85
    %v356 = vunpack.c.l.b16 %v86
    %v357 = vunpack.c.h.b16 %v86
    %v358 = vunpack.c.l.b16 %v87
    %v359 = vunpack.c.h.b16 %v87
    %v360 = vunpack.c.l.b16 %v88
    %v361 = vunpack.c.h.b16 %v88
    %v362 = vunpack.c.l.b16 %v89
    %v363 = vunpack.c.h.b16 %v89
    %v364 = vunpack.c.l.b16 %v90
    %v365 = vunpack.c.h.b16 %v90
    %v366 = vunpack.c.l.b16 %v91
    %v367 = vunpack.c.h.b16 %v91
    %v368 = vunpack.c.l.b16 %v92
    %v369 = vunpack.c.h.b16 %v92
    %v370 = vunpack.c.l.b16 %v93
    %v371 = vunpack.c.h.b16 %v93
    %v372 = vunpack.c.l.b16 %v94
    %v373 = vunpack.c.h.b16 %v94
    %v374 = vunpack.c.l.b16 %v95
    %v375 = vunpack.c.h.b16 %v95
    %v376 = vunpack.c.l.b16 %v96
    %v377 = vunpack.c.h.b16 %v96
    %v378 = vunpack.c.l.b16 %v97
    %v379 = vunpack.c.h.b16 %v97
    %v380 = vunpack.c.l.b16 %v98
    %v381 = vunpack.c.h.b16 %v98
    %v382 = vunpack.c.l.b16 %v99
    %v383 = vunpack.c.h.b16 %v99
    %v384 = vunpack.c.l.b16 %v100
    %v385 = vunpack.c.h.b16 %v100
    %v386 = vunpack.c.l.b16 %v101
    %v387 = vunpack.c.h.b16 %v101
    %v388 = vunpack.c.l.b16 %v102
    %v389 = vunpack.c.h.b16 %v102
    %v390 = vunpack.c.l.b16 %v103
    %v391 = vunpack.c.h.b16 %v103
    %v392 = vunpack.c.l.b16 %v104
    %v393 = vunpack.c.h.b16 %v104
    %v394 = vunpack.c.l.b16 %v105
    %v395 = vunpack.c.h.b16 %v105
    %v396 = vunpack.c.l.b16 %v106
    %v397 = vunpack.c.h.b16 %v106
    %v398 = vunpack.c.l.b16 %v107
    %v399 = vunpack.c.h.b16 %v107
    %v400 = vunpack.c.l.b16 %v108
    %v401 = vunpack.c.h.b16 %v108
    %v402 = vunpack.c.l.b16 %v109
    %v403 = vunpack.c.h.b16 %v109
    %v404 = vunpack.c.l.b16 %v110
    %v405 = vunpack.c.h.b16 %v110
    %v406 = vunpack.c.l.b16 %v111
    %v407 = vunpack.c.h.b16 %v111
    %v408 = vunpack.c.l.b16 %v112
    %v409 = vunpack.c.h.b16 %v112
    %v410 = vunpack.c.l.b16 %v113
    %v411 = vunpack.c.h.b16 %v113
    %v412 = vunpack.c.l.b16 %v114
    %v413 = vunpack.c.h.b16 %v114
    %v414 = vunpack.c.l.b16 %v115
    %v415 = vunpack.c.h.b16 %v115
    %v416 = vunpack.c.l.b16 %v116
    %v417 = vunpack.c.h.b16 %v116
    %v418 = vunpack.c.l.b16 %v117
    %v419 = vunpack.c.h.b16 %v117
    %v420 = vunpack.c.l.b16 %v118
    %v421 = vunpack.c.h.b16 %v118
    %v422 = vunpack.c.l.b16 %v119
    %v423 = vunpack.c.h.b16 %v119
    %v424 = vunpack.c.l.b16 %v120
    %v425 = vunpack.c.h.b16 %v120
    %v426 = vunpack.c.l.b16 %v121
    %v427 = vunpack.c.h.b16 %v121
    %v428 = vunpack.c.l.b16 %v122
    %v429 = vunpack.c.h.b16 %v122
    %v430 = vunpack.c.l.b16 %v123
    %v431 = vunpack.c.h.b16 %v123
    %v432 = vunpack.c.l.b16 %v124
    %v433 = vunpack.c.h.b16 %v124
    %v434 = vunpack.c.l.b16 %v125
    %v435 = vunpack.c.h.b16 %v125
    %v436 = vunpack.c.l.b16 %v126
    %v437 = vunpack.c.h.b16 %v126
    %v438 = vunpack.c.l.b16 %v127
    %v439 = vunpack.c.h.b16 %v127
    %v440 = vunpack.c.l.b16 %v128
    %v441 = vunpack.c.h.b16 %v128
    %v442 = vunpack.c.l.b16 %v129
    %v443 = vunpack.c.h.b16 %v129
    %v444 = vunpack.c.l.b16 %v130
    %v445 = vunpack.c.h.b16 %v130
    %v446 = vunpack.c.l.b16 %v131
    %v447 = vunpack.c.h.b16 %v131
    %v448 = vunpack.c.l.b16 %v132
    %v449 = vunpack.c.h.b16 %v132
    %v450 = vunpack.c.l.b16 %v133
    %v451 = vunpack.c.h.b16 %v133
    %v452 = vunpack.c.l.b16 %v134
    %v453 = vunpack.c.h.b16 %v134
    %v454 = vunpack.c.l.b16 %v135
    %v455 = vunpack.c.h.b16 %v135
    %v456 = vunpack.c.l.b16 %v136
    %v457 = vunpack.c.h.b16 %v136
    %v458 = vunpack.c.l.b16 %v137
    %v459 = vunpack.c.h.b16 %v137
    %v460 = vunpack.c.l.b16 %v138
    %v461 = vunpack.c.h.b16 %v138
    %v462 = vunpack.c.l.b16 %v139
    %v463 = vunpack.c.h.b16 %v139
    %v464 = vunpack.c.l.b16 %v140
    %v465 = vunpack.c.h.b16 %v140
    %v466 = vunpack.c.l.b16 %v141
    %v467 = vunpack.c.h.b16 %v141
    %v468 = vunpack.c.l.b16 %v142
    %v469 = vunpack.c.h.b16 %v142
    %v470 = vunpack.c.l.b16 %v143
    %v471 = vunpack.c.h.b16 %v143
    %v472 = vunpack.c.l.b16 %v144
    %v473 = vunpack.c.h.b16 %v144
    %v474 = vunpack.c.l.b16 %v145
    %v475 = vunpack.c.h.b16 %v145
    %v476 = vunpack.c.l.b16 %v146
    %v477 = vunpack.c.h.b16 %v146
    %v478 = vunpack.c.l.b16 %v147
    %v479 = vunpack.c.h.b16 %v147
    %v480 = vunpack.c.l.b16 %v148
    %v481 = vunpack.c.h.b16 %v148
    %v482 = vunpack.c.l.b16 %v149
    %v483 = vunpack.c.h.b16 %v149
    %v484 = vunpack.c.l.b16 %v150
    %v485 = vunpack.c.h.b16 %v150
    %v486 = vunpack.c.l.b16 %v151
    %v487 = vunpack.c.h.b16 %v151
    %v488 = vunpack.c.l.b16 %v152
    %v489 = vunpack.c.h.b16 %v152
    %v490 = vunpack.c.l.b16 %v153
    %v491 = vunpack.c.h.b16 %v153
    %v492 = vunpack.c.l.b16 %v154
    %v493 = vunpack.c.h.b16 %v154
    %v494 = vunpack.c.l.b16 %v155
    %v495 = vunpack.c.h.b16 %v155
    %v496 = vunpack.c.l.b16 %v156
    %v497 = vunpack.c.h.b16 %v156
    %v498 = vunpack.c.l.b16 %v157
    %v499 = vunpack.c.h.b16 %v157
    %v500 = vunpack.c.l.b16 %v158
    %v501 = vunpack.c.h.b16 %v158
    %v502 = vunpack.c.l.b16 %v159
    %v503 = vunpack.c.h.b16 %v159
    %v504 = vunpack.c.l.b16 %v160
    %v505 = vunpack.c.h.b16 %v160
    %v506 = vunpack.c.l.b16 %v161
    %v507 = vunpack.c.h.b16 %v161
    %v508 = vunpack.c.l.b16 %v162
    %v509 = vunpack.c.h.b16 %v162
    %v510 = vunpack.c.l.b16 %v163
    %v511 = vunpack.c.h.b16 %v163
    %v512 = vunpack.c.l.b16 %v164
    %v513 = vunpack.c.h.b16 %v164
    %v514 = vunpack.c.l.b16 %v165
    %v515 = vunpack.c.h.b16 %v165
    %v516 = vunpack.c.l.b16 %v166
    %v517 = vunpack.c.h.b16 %v166
    %v518 = vunpack.c.l.b16 %v167
    %v519 = vunpack.c.h.b16 %v167
    %v520 = vunpack.c.l.b16 %v168
    %v521 = vunpack.c.h.b16 %v168
    %v522 = vunpack.c.l.b16 %v169
    %v523 = vunpack.c.h.b16 %v169
    %v524 = vunpack.c.l.b16 %v170
    %v525 = vunpack.c.h.b16 %v170
    %v526 = vunpack.c.l.b16 %v171
    %v527 = vunpack.c.h.b16 %v171
    %v528 = vunpack.c.l.b16 %v172
    %v529 = vunpack.c.h.b16 %v172
    %v530 = vunpack.c.l.b16 %v173
    %v531 = vunpack.c.h.b16 %v173
    %v532 = vunpack.c.l.b16 %v174
    %v533 = vunpack.c.h.b16 %v174
    %v534 = vunpack.c.l.b16 %v175
    %v535 = vunpack.c.h.b16 %v175
    %v536 = vunpack.c.l.b16 %v176
    %v537 = vunpack.c.h.b16 %v176
    %v538 = vunpack.c.l.b16 %v177
    %v539 = vunpack.c.h.b16 %v177
    %v540 = vunpack.c.l.b16 %v178
    %v541 = vunpack.c.h.b16 %v178
    %v542 = vunpack.c.l.b16 %v179
    %v543 = vunpack.c.h.b16 %v179
    %v544 = vunpack.c.l.b16 %v180
    %v545 = vunpack.c.h.b16 %v180
    %v546 = vunpack.c.l.b16 %v181
    %v547 = vunpack.c.h.b16 %v181
    %v548 = vunpack.c.l.b16 %v182
    %v549 = vunpack.c.h.b16 %v182
    %v550 = vunpack.c.l.b16 %v183
    %v551 = vunpack.c.h.b16 %v183
    %v552 = vunpack.c.l.b16 %v184
    %v553 = vunpack.c.h.b16 %v184
    %v554 = vunpack.c.l.b16 %v185
    %v555 = vunpack.c.h.b16 %v185
    %v556 = vunpack.c.l.b16 %v186
    %v557 = vunpack.c.h.b16 %v186
    %v558 = vunpack.c.l.b16 %v187
    %v559 = vunpack.c.h.b16 %v187
    %v560 = vunpack.c.l.b16 %v188
    %v561 = vunpack.c.h.b16 %v188
    %v562 = vunpack.c.l.b16 %v189
    %v563 = vunpack.c.h.b16 %v189
    %v564 = vunpack.c.l.b16 %v190
    %v565 = vunpack.c.h.b16 %v190
    %v566 = vunpack.c.l.b16 %v191
    %v567 = vunpack.c.h.b16 %v191
    %v568 = vunpack.c.l.b16 %v192
    %v569 = vunpack.c.h.b16 %v192
    %v570 = vunpack.c.l.b16 %v193
    %v571 = vunpack.c.h.b16 %v193
    %v572 = vunpack.c.l.b16 %v194
    %v573 = vunpack.c.h.b16 %v194
    %v574 = vunpack.c.l.b16 %v195
    %v575 = vunpack.c.h.b16 %v195
    %v576 = vunpack.c.l.b16 %v196
    %v577 = vunpack.c.h.b16 %v196
    %v578 = vunpack.c.l.b16 %v197
    %v579 = vunpack.c.h.b16 %v197
    %v580 = vunpack.c.l.b16 %v198
    %v581 = vunpack.c.h.b16 %v198
    %v582 = vunpack.c.l.b16 %v199
    %v583 = vunpack.c.h.b16 %v199
    %v584 = vunpack.c.l.b16 %v200
    %v585 = vunpack.c.h.b16 %v200
    %v586 = vunpack.c.l.b16 %v201
    %v587 = vunpack.c.h.b16 %v201
    %v588 = vunpack.c.l.b16 %v202
    %v589 = vunpack.c.h.b16 %v202
    %v590 = vunpack.c.l.b16 %v203
    %v591 = vunpack.c.h.b16 %v203
    %v592 = vunpack.c.l.b16 %v204
    %v593 = vunpack.c.h.b16 %v204
    %v594 = vpack.c.b16 %v370, %v338
    %v595 = vpack.c.b16 %v371, %v339
    %v596 = vpack.c.b16 %v372, %v340
    %v597 = vpack.c.b16 %v373, %v341
    %v598 = vpack.c.b16 %v374, %v342
    %v599 = vpack.c.b16 %v375, %v343
    %v600 = vpack.c.b16 %v376, %v344
    %v601 = vpack.c.b16 %v377, %v345
    %v602 = vpack.c.b16 %v378, %v346
    %v603 = vpack.c.b16 %v379, %v347
    %v604 = vpack.c.b16 %v380, %v348
    %v605 = vpack.c.b16 %v381, %v349
    %v606 = vpack.c.b16 %v382, %v350
    %v607 = vpack.c.b16 %v383, %v351
    %v608 = vpack.c.b16 %v384, %v352
    %v609 = vpack.c.b16 %v385, %v353
    %v610 = vpack.c.b16 %v386, %v354
    %v611 = vpack.c.b16 %v387, %v355
    %v612 = vpack.c.b16 %v388, %v356
    %v613 = vpack.c.b16 %v389, %v357
    %v614 = vpack.c.b16 %v390, %v358
    %v615 = vpack.c.b16 %v391, %v359
    %v616 = vpack.c.b16 %v392, %v360
    %v617 = vpack.c.b16 %v393, %v361
    %v618 = vpack.c.b16 %v394, %v362
    %v619 = vpack.c.b16 %v395, %v363
    %v620 = vpack.c.b16 %v396, %v364
    %v621 = vpack.c.b16 %v397, %v365
    %v622 = vpack.c.b16 %v398, %v366
    %v623 = vpack.c.b16 %v399, %v367
    %v624 = vpack.c.b16 %v400, %v368
    %v625 = vpack.c.b16 %v401, %v369
    %v626 = vpack.c.b16 %v434, %v402
    %v627 = vpack.c.b16 %v435, %v403
    %v628 = vpack.c.b16 %v436, %v404
    %v629 = vpack.c.b16 %v437, %v405
    %v630 = vpack.c.b16 %v438, %v406
    %v631 = vpack.c.b16 %v439, %v407
    %v632 = vpack.c.b16 %v440, %v408
    %v633 = vpack.c.b16 %v441, %v409
    %v634 = vpack.c.b16 %v442, %v410
    %v635 = vpack.c.b16 %v443, %v411
    %v636 = vpack.c.b16 %v444, %v412
    %v637 = vpack.c.b16 %v445, %v413
    %v638 = vpack.c.b16 %v446, %v414
    %v639 = vpack.c.b16 %v447, %v415
    %v640 = vpack.c.b16 %v448, %v416
    %v641 = vpack.c.b16 %v449, %v417
    %v642 = vpack.c.b16 %v450, %v418
    %v643 = vpack.c.b16 %v451, %v419
    %v644 = vpack.c.b16 %v452, %v420
    %v645 = vpack.c.b16 %v453, %v421
    %v646 = vpack.c.b16 %v454, %v422
    %v647 = vpack.c.b16 %v455, %v423
    %v648 = vpack.c.b16 %v456, %v424
    %v649 = vpack.c.b16 %v457, %v425
    %v650 = vpack.c.b16 %v458, %v426
    %v651 = vpack.c.b16 %v459, %v427
    %v652 = vpack.c.b16 %v460, %v428
    %v653 = vpack.c.b16 %v461, %v429
    %v654 = vpack.c.b16 %v462, %v430
    %v655 = vpack.c.b16 %v463, %v431
    %v656 = vpack.c.b16 %v464, %v432
    %v657 = vpack.c.b16 %v465, %v433
    %v658 = vpack.c.b16 %v498, %v466
    %v659 = vpack.c.b16 %v499, %v467
    %v660 = vpack.c.b16 %v500, %v468
    %v661 = vpack.c.b16 %v501, %v469
    %v662 = vpack.c.b16 %v502, %v470
    %v663 = vpack.c.b16 %v503, %v471
    %v664 = vpack.c.b16 %v504, %v472
    %v665 = vpack.c.b16 %v505, %v473
    %v666 = vpack.c.b16 %v506, %v474
    %v667 = vpack.c.b16 %v507, %v475
    %v668 = vpack.c.b16 %v508, %v476
    %v669 = vpack.c.b16 %v509, %v477
    %v670 = vpack.c.b16 %v510, %v478
    %v671 = vpack.c.b16 %v511, %v479
    %v672 = vpack.c.b16 %v512, %v480
    %v673 = vpack.c.b16 %v513, %v481
    %v674 = vpack.c.b16 %v514, %v482
    %v675 = vpack.c.b16 %v515, %v483
    %v676 = vpack.c.b16 %v516, %v484
    %v677 = vpack.c.b16 %v517, %v485
    %v678 = vpack.c.b16 %v518, %v486
    %v679 = vpack.c.b16 %v519, %v487
    %v680 = vpack.c.b16 %v520, %v488
    %v681 = vpack.c.b16 %v521, %v489
    %v682 = vpack.c.b16 %v522, %v490
    %v683 = vpack.c.b16 %v523, %v491
    %v684 = vpack.c.b16 %v524, %v492
    %v685 = vpack.c.b16 %v525, %v493
    %v686 = vpack.c.b16 %v526, %v494
    %v687 = vpack.c.b16 %v527, %v495
    %v688 = vpack.c.b16 %v528, %v496
    %v689 = vpack.c.b16 %v529, %v497
    %v690 = vpack.c.b16 %v562, %v530
    %v691 = vpack.c.b16 %v563, %v531
    %v692 = vpack.c.b16 %v564, %v532
    %v693 = vpack.c.b16 %v565, %v533
    %v694 = vpack.c.b16 %v566, %v534
    %v695 = vpack.c.b16 %v567, %v535
    %v696 = vpack.c.b16 %v568, %v536
    %v697 = vpack.c.b16 %v569, %v537
    %v698 = vpack.c.b16 %v570, %v538
    %v699 = vpack.c.b16 %v571, %v539
    %v700 = vpack.c.b16 %v572, %v540
    %v701 = vpack.c.b16 %v573, %v541
    %v702 = vpack.c.b16 %v574, %v542
    %v703 = vpack.c.b16 %v575, %v543
    %v704 = vpack.c.b16 %v576, %v544
    %v705 = vpack.c.b16 %v577, %v545
    %v706 = vpack.c.b16 %v578, %v546
    %v707 = vpack.c.b16 %v579, %v547
    %v708 = vpack.c.b16 %v580, %v548
    %v709 = vpack.c.b16 %v581, %v549
    %v710 = vpack.c.b16 %v582, %v550
    %v711 = vpack.c.b16 %v583, %v551
    %v712 = vpack.c.b16 %v584, %v552
    %v713 = vpack.c.b16 %v585, %v553
    %v714 = vpack.c.b16 %v586, %v554
    %v715 = vpack.c.b16 %v587, %v555
    %v716 = vpack.c.b16 %v588, %v556
    %v717 = vpack.c.b16 %v589, %v557
    %v718 = vpack.c.b16 %v590, %v558
    %v719 = vpack.c.b16 %v591, %v559
    %v720 = vpack.c.b16 %v592, %v560
    %v721 = vpack.c.b16 %v593, %v561
    %vm850 = vcmask 523264
    %v852 = vsel %vm850, %v209, 0
    %854 = vmatprep.subr.bf16.mxu0 0
    %855 = vmatpush1.bf16.msra.mxu0 0
    %856 = vmatprep.subr.bf16.mxu0 0
    %857 = vmatpush1.bf16.msra.mxu0 0
    %858 = vmatprep.subr.bf16.mxu0 0
    %859 = vmatpush1.bf16.msra.mxu0 0
    %860 = vmatprep.subr.bf16.mxu0 0
    %861 = vmatpush1.bf16.msra.mxu0 0
    %862 = vmatprep.subr.bf16.mxu0 %v691
    %863 = vmatpush1.bf16.msra.mxu0 %v690
    %864 = vmatprep.subr.bf16.mxu0 %v659
    %865 = vmatpush1.bf16.msra.mxu0 %v658
    %866 = vmatprep.subr.bf16.mxu0 %v627
    %867 = vmatpush1.bf16.msra.mxu0 %v626
    %868 = vmatprep.subr.bf16.mxu0 %v595
    %869 = vmatpush1.bf16.msra.mxu0 %v594
    %870 = vmatprep.subr.bf16.mxu0 0
    %871 = vmatpush2.bf16.msra.mxu0 0
    %872 = vmatprep.subr.bf16.mxu0 0
    %873 = vmatpush2.bf16.msra.mxu0 0
    %874 = vmatprep.subr.bf16.mxu0 0
    %875 = vmatpush2.bf16.msra.mxu0 0
    %876 = vmatprep.subr.bf16.mxu0 0
    %877 = vmatpush2.bf16.msra.mxu0 0
    %878 = vmatprep.subr.bf16.mxu0 0
    %879 = vmatpush2.bf16.msra.mxu0 0
    %880 = vmatprep.subr.bf16.mxu0 0
    %881 = vmatpush2.bf16.msra.mxu0 0
    %882 = vmatprep.subr.bf16.mxu0 0
    %883 = vmatpush2.bf16.msra.mxu0 0
    %884 = vmatprep.subr.bf16.mxu0 0
    %885 = vmatpush2.bf16.msra.mxu0 0
    %886 = vmatprep.mubr.bf16.mxu0 0
    %887 = vmatmul.mubr.bf16.gmra.mxu0 %v852
    %v888 = vpop.f32.mrf.mxu0
    %v889 = vadd.f32 0.0, %v888
    %v890 = vpop.f32.mrf.mxu0
    %v891 = vadd.f32 0.0, %v890
    %v892 = vpop.f32.mrf.mxu0
    %v893 = vadd.f32 0.0, %v892
    %v894 = vpop.f32.mrf.mxu0
    %v895 = vadd.f32 0.0, %v894
    %896 = vdwg.mxu0
    %897 = vmatprep.subr.bf16.mxu0 0
    %898 = vmatpush1.bf16.msra.mxu0 0
    %899 = vmatprep.subr.bf16.mxu0 0
    %900 = vmatpush1.bf16.msra.mxu0 0
    %901 = vmatprep.subr.bf16.mxu0 0
    %902 = vmatpush1.bf16.msra.mxu0 0
    %903 = vmatprep.subr.bf16.mxu0 0
    %904 = vmatpush1.bf16.msra.mxu0 0
    %905 = vmatprep.subr.bf16.mxu0 %v693
    %906 = vmatpush1.bf16.msra.mxu0 %v692
    %907 = vmatprep.subr.bf16.mxu0 %v661
    %908 = vmatpush1.bf16.msra.mxu0 %v660
    %909 = vmatprep.subr.bf16.mxu0 %v629
    %910 = vmatpush1.bf16.msra.mxu0 %v628
    %911 = vmatprep.subr.bf16.mxu0 %v597
    %912 = vmatpush1.bf16.msra.mxu0 %v596
    %913 = vmatprep.subr.bf16.mxu0 0
    %914 = vmatpush2.bf16.msra.mxu0 0
    %915 = vmatprep.subr.bf16.mxu0 0
    %916 = vmatpush2.bf16.msra.mxu0 0
    %917 = vmatprep.subr.bf16.mxu0 0
    %918 = vmatpush2.bf16.msra.mxu0 0
    %919 = vmatprep.subr.bf16.mxu0 0
    %920 = vmatpush2.bf16.msra.mxu0 0
    %921 = vmatprep.subr.bf16.mxu0 0
    %922 = vmatpush2.bf16.msra.mxu0 0
    %923 = vmatprep.subr.bf16.mxu0 0
    %924 = vmatpush2.bf16.msra.mxu0 0
    %925 = vmatprep.subr.bf16.mxu0 0
    %926 = vmatpush2.bf16.msra.mxu0 0
    %927 = vmatprep.subr.bf16.mxu0 0
    %928 = vmatpush2.bf16.msra.mxu0 0
    %929 = vmatprep.mubr.bf16.mxu0 0
    %930 = vmatmul.mubr.bf16.gmra.mxu0 %v852
    %v931 = vpop.f32.mrf.mxu0
    %v932 = vadd.f32 0.0, %v931
    %v933 = vpop.f32.mrf.mxu0
    %v934 = vadd.f32 0.0, %v933
    %v935 = vpop.f32.mrf.mxu0
    %v936 = vadd.f32 0.0, %v935
    %v937 = vpop.f32.mrf.mxu0
    %v938 = vadd.f32 0.0, %v937
    %939 = vdwg.mxu0
    %940 = vmatprep.subr.bf16.mxu0 0
    %941 = vmatpush1.bf16.msra.mxu0 0
    %942 = vmatprep.subr.bf16.mxu0 0
    %943 = vmatpush1.bf16.msra.mxu0 0
    %944 = vmatprep.subr.bf16.mxu0 0
    %945 = vmatpush1.bf16.msra.mxu0 0
    %946 = vmatprep.subr.bf16.mxu0 0
    %947 = vmatpush1.bf16.msra.mxu0 0
    %948 = vmatprep.subr.bf16.mxu0 %v695
    %949 = vmatpush1.bf16.msra.mxu0 %v694
    %950 = vmatprep.subr.bf16.mxu0 %v663
    %951 = vmatpush1.bf16.msra.mxu0 %v662
    %952 = vmatprep.subr.bf16.mxu0 %v631
    %953 = vmatpush1.bf16.msra.mxu0 %v630
    %954 = vmatprep.subr.bf16.mxu0 %v599
    %955 = vmatpush1.bf16.msra.mxu0 %v598
    %956 = vmatprep.subr.bf16.mxu0 0
    %957 = vmatpush2.bf16.msra.mxu0 0
    %958 = vmatprep.subr.bf16.mxu0 0
    %959 = vmatpush2.bf16.msra.mxu0 0
    %960 = vmatprep.subr.bf16.mxu0 0
    %961 = vmatpush2.bf16.msra.mxu0 0
    %962 = vmatprep.subr.bf16.mxu0 0
    %963 = vmatpush2.bf16.msra.mxu0 0
    %964 = vmatprep.subr.bf16.mxu0 0
    %965 = vmatpush2.bf16.msra.mxu0 0
    %966 = vmatprep.subr.bf16.mxu0 0
    %967 = vmatpush2.bf16.msra.mxu0 0
    %968 = vmatprep.subr.bf16.mxu0 0
    %969 = vmatpush2.bf16.msra.mxu0 0
    %970 = vmatprep.subr.bf16.mxu0 0
    %971 = vmatpush2.bf16.msra.mxu0 0
    %972 = vmatprep.mubr.bf16.mxu0 0
    %973 = vmatmul.mubr.bf16.gmra.mxu0 %v852
    %v974 = vpop.f32.mrf.mxu0
    %v975 = vadd.f32 0.0, %v974
    %v976 = vpop.f32.mrf.mxu0
    %v977 = vadd.f32 0.0, %v976
    %v978 = vpop.f32.mrf.mxu0
    %v979 = vadd.f32 0.0, %v978
    %v980 = vpop.f32.mrf.mxu0
    %v981 = vadd.f32 0.0, %v980
    %982 = vdwg.mxu0
    %983 = vmatprep.subr.bf16.mxu0 0
    %984 = vmatpush1.bf16.msra.mxu0 0
    %985 = vmatprep.subr.bf16.mxu0 0
    %986 = vmatpush1.bf16.msra.mxu0 0
    %987 = vmatprep.subr.bf16.mxu0 0
    %988 = vmatpush1.bf16.msra.mxu0 0
    %989 = vmatprep.subr.bf16.mxu0 0
    %990 = vmatpush1.bf16.msra.mxu0 0
    %991 = vmatprep.subr.bf16.mxu0 %v697
    %992 = vmatpush1.bf16.msra.mxu0 %v696
    %993 = vmatprep.subr.bf16.mxu0 %v665
    %994 = vmatpush1.bf16.msra.mxu0 %v664
    %995 = vmatprep.subr.bf16.mxu0 %v633
    %996 = vmatpush1.bf16.msra.mxu0 %v632
    %997 = vmatprep.subr.bf16.mxu0 %v601
    %998 = vmatpush1.bf16.msra.mxu0 %v600
    %999 = vmatprep.subr.bf16.mxu0 0
    %1000 = vmatpush2.bf16.msra.mxu0 0
    %1001 = vmatprep.subr.bf16.mxu0 0
    %1002 = vmatpush2.bf16.msra.mxu0 0
    %1003 = vmatprep.subr.bf16.mxu0 0
    %1004 = vmatpush2.bf16.msra.mxu0 0
    %1005 = vmatprep.subr.bf16.mxu0 0
    %1006 = vmatpush2.bf16.msra.mxu0 0
    %1007 = vmatprep.subr.bf16.mxu0 0
    %1008 = vmatpush2.bf16.msra.mxu0 0
    %1009 = vmatprep.subr.bf16.mxu0 0
    %1010 = vmatpush2.bf16.msra.mxu0 0
    %1011 = vmatprep.subr.bf16.mxu0 0
    %1012 = vmatpush2.bf16.msra.mxu0 0
    %1013 = vmatprep.subr.bf16.mxu0 0
    %1014 = vmatpush2.bf16.msra.mxu0 0
    %1015 = vmatprep.mubr.bf16.mxu0 0
    %1016 = vmatmul.mubr.bf16.gmra.mxu0 %v852
    %v1017 = vpop.f32.mrf.mxu0
    %v1018 = vadd.f32 0.0, %v1017
    %v1019 = vpop.f32.mrf.mxu0
    %v1020 = vadd.f32 0.0, %v1019
    %v1021 = vpop.f32.mrf.mxu0
    %v1022 = vadd.f32 0.0, %v1021
    %v1023 = vpop.f32.mrf.mxu0
    %v1024 = vadd.f32 0.0, %v1023
    %1025 = vdwg.mxu0
    %1026 = vmatprep.subr.bf16.mxu0 0
    %1027 = vmatpush1.bf16.msra.mxu0 0
    %1028 = vmatprep.subr.bf16.mxu0 0
    %1029 = vmatpush1.bf16.msra.mxu0 0
    %1030 = vmatprep.subr.bf16.mxu0 0
    %1031 = vmatpush1.bf16.msra.mxu0 0
    %1032 = vmatprep.subr.bf16.mxu0 0
    %1033 = vmatpush1.bf16.msra.mxu0 0
    %1034 = vmatprep.subr.bf16.mxu0 %v699
    %1035 = vmatpush1.bf16.msra.mxu0 %v698
    %1036 = vmatprep.subr.bf16.mxu0 %v667
    %1037 = vmatpush1.bf16.msra.mxu0 %v666
    %1038 = vmatprep.subr.bf16.mxu0 %v635
    %1039 = vmatpush1.bf16.msra.mxu0 %v634
    %1040 = vmatprep.subr.bf16.mxu0 %v603
    %1041 = vmatpush1.bf16.msra.mxu0 %v602
    %1042 = vmatprep.subr.bf16.mxu0 0
    %1043 = vmatpush2.bf16.msra.mxu0 0
    %1044 = vmatprep.subr.bf16.mxu0 0
    %1045 = vmatpush2.bf16.msra.mxu0 0
    %1046 = vmatprep.subr.bf16.mxu0 0
    %1047 = vmatpush2.bf16.msra.mxu0 0
    %1048 = vmatprep.subr.bf16.mxu0 0
    %1049 = vmatpush2.bf16.msra.mxu0 0
    %1050 = vmatprep.subr.bf16.mxu0 0
    %1051 = vmatpush2.bf16.msra.mxu0 0
    %1052 = vmatprep.subr.bf16.mxu0 0
    %1053 = vmatpush2.bf16.msra.mxu0 0
    %1054 = vmatprep.subr.bf16.mxu0 0
    %1055 = vmatpush2.bf16.msra.mxu0 0
    %1056 = vmatprep.subr.bf16.mxu0 0
    %1057 = vmatpush2.bf16.msra.mxu0 0
    %1058 = vmatprep.mubr.bf16.mxu0 0
    %1059 = vmatmul.mubr.bf16.gmra.mxu0 %v852
    %v1060 = vpop.f32.mrf.mxu0
    %v1061 = vadd.f32 0.0, %v1060
    %v1062 = vpop.f32.mrf.mxu0
    %v1063 = vadd.f32 0.0, %v1062
    %v1064 = vpop.f32.mrf.mxu0
    %v1065 = vadd.f32 0.0, %v1064
    %v1066 = vpop.f32.mrf.mxu0
    %v1067 = vadd.f32 0.0, %v1066
    %1068 = vdwg.mxu0
    %1069 = vmatprep.subr.bf16.mxu0 0
    %1070 = vmatpush1.bf16.msra.mxu0 0
    %1071 = vmatprep.subr.bf16.mxu0 0
    %1072 = vmatpush1.bf16.msra.mxu0 0
    %1073 = vmatprep.subr.bf16.mxu0 0
    %1074 = vmatpush1.bf16.msra.mxu0 0
    %1075 = vmatprep.subr.bf16.mxu0 0
    %1076 = vmatpush1.bf16.msra.mxu0 0
    %1077 = vmatprep.subr.bf16.mxu0 %v701
    %1078 = vmatpush1.bf16.msra.mxu0 %v700
    %1079 = vmatprep.subr.bf16.mxu0 %v669
    %1080 = vmatpush1.bf16.msra.mxu0 %v668
    %1081 = vmatprep.subr.bf16.mxu0 %v637
    %1082 = vmatpush1.bf16.msra.mxu0 %v636
    %1083 = vmatprep.subr.bf16.mxu0 %v605
    %1084 = vmatpush1.bf16.msra.mxu0 %v604
    %1085 = vmatprep.subr.bf16.mxu0 0
    %1086 = vmatpush2.bf16.msra.mxu0 0
    %1087 = vmatprep.subr.bf16.mxu0 0
    %1088 = vmatpush2.bf16.msra.mxu0 0
    %1089 = vmatprep.subr.bf16.mxu0 0
    %1090 = vmatpush2.bf16.msra.mxu0 0
    %1091 = vmatprep.subr.bf16.mxu0 0
    %1092 = vmatpush2.bf16.msra.mxu0 0
    %1093 = vmatprep.subr.bf16.mxu0 0
    %1094 = vmatpush2.bf16.msra.mxu0 0
    %1095 = vmatprep.subr.bf16.mxu0 0
    %1096 = vmatpush2.bf16.msra.mxu0 0
    %1097 = vmatprep.subr.bf16.mxu0 0
    %1098 = vmatpush2.bf16.msra.mxu0 0
    %1099 = vmatprep.subr.bf16.mxu0 0
    %1100 = vmatpush2.bf16.msra.mxu0 0
    %1101 = vmatprep.mubr.bf16.mxu0 0
    %1102 = vmatmul.mubr.bf16.gmra.mxu0 %v852
    %v1103 = vpop.f32.mrf.mxu0
    %v1104 = vadd.f32 0.0, %v1103
    %v1105 = vpop.f32.mrf.mxu0
    %v1106 = vadd.f32 0.0, %v1105
    %v1107 = vpop.f32.mrf.mxu0
    %v1108 = vadd.f32 0.0, %v1107
    %v1109 = vpop.f32.mrf.mxu0
    %v1110 = vadd.f32 0.0, %v1109
    %1111 = vdwg.mxu0
    %1112 = vmatprep.subr.bf16.mxu0 0
    %1113 = vmatpush1.bf16.msra.mxu0 0
    %1114 = vmatprep.subr.bf16.mxu0 0
    %1115 = vmatpush1.bf16.msra.mxu0 0
    %1116 = vmatprep.subr.bf16.mxu0 0
    %1117 = vmatpush1.bf16.msra.mxu0 0
    %1118 = vmatprep.subr.bf16.mxu0 0
    %1119 = vmatpush1.bf16.msra.mxu0 0
    %1120 = vmatprep.subr.bf16.mxu0 %v703
    %1121 = vmatpush1.bf16.msra.mxu0 %v702
    %1122 = vmatprep.subr.bf16.mxu0 %v671
    %1123 = vmatpush1.bf16.msra.mxu0 %v670
    %1124 = vmatprep.subr.bf16.mxu0 %v639
    %1125 = vmatpush1.bf16.msra.mxu0 %v638
    %1126 = vmatprep.subr.bf16.mxu0 %v607
    %1127 = vmatpush1.bf16.msra.mxu0 %v606
    %1128 = vmatprep.subr.bf16.mxu0 0
    %1129 = vmatpush2.bf16.msra.mxu0 0
    %1130 = vmatprep.subr.bf16.mxu0 0
    %1131 = vmatpush2.bf16.msra.mxu0 0
    %1132 = vmatprep.subr.bf16.mxu0 0
    %1133 = vmatpush2.bf16.msra.mxu0 0
    %1134 = vmatprep.subr.bf16.mxu0 0
    %1135 = vmatpush2.bf16.msra.mxu0 0
    %1136 = vmatprep.subr.bf16.mxu0 0
    %1137 = vmatpush2.bf16.msra.mxu0 0
    %1138 = vmatprep.subr.bf16.mxu0 0
    %1139 = vmatpush2.bf16.msra.mxu0 0
    %1140 = vmatprep.subr.bf16.mxu0 0
    %1141 = vmatpush2.bf16.msra.mxu0 0
    %1142 = vmatprep.subr.bf16.mxu0 0
    %1143 = vmatpush2.bf16.msra.mxu0 0
    %1144 = vmatprep.mubr.bf16.mxu0 0
    %1145 = vmatmul.mubr.bf16.gmra.mxu0 %v852
    %v1146 = vpop.f32.mrf.mxu0
    %v1147 = vadd.f32 0.0, %v1146
    %v1148 = vpop.f32.mrf.mxu0
    %v1149 = vadd.f32 0.0, %v1148
    %v1150 = vpop.f32.mrf.mxu0
    %v1151 = vadd.f32 0.0, %v1150
    %v1152 = vpop.f32.mrf.mxu0
    %v1153 = vadd.f32 0.0, %v1152
    %1154 = vdwg.mxu0
    %1155 = vmatprep.subr.bf16.mxu0 0
    %1156 = vmatpush1.bf16.msra.mxu0 0
    %1157 = vmatprep.subr.bf16.mxu0 0
    %1158 = vmatpush1.bf16.msra.mxu0 0
    %1159 = vmatprep.subr.bf16.mxu0 0
    %1160 = vmatpush1.bf16.msra.mxu0 0
    %1161 = vmatprep.subr.bf16.mxu0 0
    %1162 = vmatpush1.bf16.msra.mxu0 0
    %1163 = vmatprep.subr.bf16.mxu0 %v705
    %1164 = vmatpush1.bf16.msra.mxu0 %v704
    %1165 = vmatprep.subr.bf16.mxu0 %v673
    %1166 = vmatpush1.bf16.msra.mxu0 %v672
    %1167 = vmatprep.subr.bf16.mxu0 %v641
    %1168 = vmatpush1.bf16.msra.mxu0 %v640
    %1169 = vmatprep.subr.bf16.mxu0 %v609
    %1170 = vmatpush1.bf16.msra.mxu0 %v608
    %1171 = vmatprep.subr.bf16.mxu0 0
    %1172 = vmatpush2.bf16.msra.mxu0 0
    %1173 = vmatprep.subr.bf16.mxu0 0
    %1174 = vmatpush2.bf16.msra.mxu0 0
    %1175 = vmatprep.subr.bf16.mxu0 0
    %1176 = vmatpush2.bf16.msra.mxu0 0
    %1177 = vmatprep.subr.bf16.mxu0 0
    %1178 = vmatpush2.bf16.msra.mxu0 0
    %1179 = vmatprep.subr.bf16.mxu0 0
    %1180 = vmatpush2.bf16.msra.mxu0 0
    %1181 = vmatprep.subr.bf16.mxu0 0
    %1182 = vmatpush2.bf16.msra.mxu0 0
    %1183 = vmatprep.subr.bf16.mxu0 0
    %1184 = vmatpush2.bf16.msra.mxu0 0
    %1185 = vmatprep.subr.bf16.mxu0 0
    %1186 = vmatpush2.bf16.msra.mxu0 0
    %1187 = vmatprep.mubr.bf16.mxu0 0
    %1188 = vmatmul.mubr.bf16.gmra.mxu0 %v852
    %v1189 = vpop.f32.mrf.mxu0
    %v1190 = vadd.f32 0.0, %v1189
    %v1191 = vpop.f32.mrf.mxu0
    %v1192 = vadd.f32 0.0, %v1191
    %v1193 = vpop.f32.mrf.mxu0
    %v1194 = vadd.f32 0.0, %v1193
    %v1195 = vpop.f32.mrf.mxu0
    %v1196 = vadd.f32 0.0, %v1195
    %1197 = vdwg.mxu0
    %1198 = vmatprep.subr.bf16.mxu0 0
    %1199 = vmatpush1.bf16.msra.mxu0 0
    %1200 = vmatprep.subr.bf16.mxu0 0
    %1201 = vmatpush1.bf16.msra.mxu0 0
    %1202 = vmatprep.subr.bf16.mxu0 0
    %1203 = vmatpush1.bf16.msra.mxu0 0
    %1204 = vmatprep.subr.bf16.mxu0 0
    %1205 = vmatpush1.bf16.msra.mxu0 0
    %1206 = vmatprep.subr.bf16.mxu0 %v707
    %1207 = vmatpush1.bf16.msra.mxu0 %v706
    %1208 = vmatprep.subr.bf16.mxu0 %v675
    %1209 = vmatpush1.bf16.msra.mxu0 %v674
    %1210 = vmatprep.subr.bf16.mxu0 %v643
    %1211 = vmatpush1.bf16.msra.mxu0 %v642
    %1212 = vmatprep.subr.bf16.mxu0 %v611
    %1213 = vmatpush1.bf16.msra.mxu0 %v610
    %1214 = vmatprep.subr.bf16.mxu0 0
    %1215 = vmatpush2.bf16.msra.mxu0 0
    %1216 = vmatprep.subr.bf16.mxu0 0
    %1217 = vmatpush2.bf16.msra.mxu0 0
    %1218 = vmatprep.subr.bf16.mxu0 0
    %1219 = vmatpush2.bf16.msra.mxu0 0
    %1220 = vmatprep.subr.bf16.mxu0 0
    %1221 = vmatpush2.bf16.msra.mxu0 0
    %1222 = vmatprep.subr.bf16.mxu0 0
    %1223 = vmatpush2.bf16.msra.mxu0 0
    %1224 = vmatprep.subr.bf16.mxu0 0
    %1225 = vmatpush2.bf16.msra.mxu0 0
    %1226 = vmatprep.subr.bf16.mxu0 0
    %1227 = vmatpush2.bf16.msra.mxu0 0
    %1228 = vmatprep.subr.bf16.mxu0 0
    %1229 = vmatpush2.bf16.msra.mxu0 0
    %1230 = vmatprep.mubr.bf16.mxu0 0
    %1231 = vmatmul.mubr.bf16.gmra.mxu0 %v852
    %v1232 = vpop.f32.mrf.mxu0
    %v1233 = vadd.f32 0.0, %v1232
    %v1234 = vpop.f32.mrf.mxu0
    %v1235 = vadd.f32 0.0, %v1234
    %v1236 = vpop.f32.mrf.mxu0
    %v1237 = vadd.f32 0.0, %v1236
    %v1238 = vpop.f32.mrf.mxu0
    %v1239 = vadd.f32 0.0, %v1238
    %1240 = vdwg.mxu0
    %1241 = vmatprep.subr.bf16.mxu0 0
    %1242 = vmatpush1.bf16.msra.mxu0 0
    %1243 = vmatprep.subr.bf16.mxu0 0
    %1244 = vmatpush1.bf16.msra.mxu0 0
    %1245 = vmatprep.subr.bf16.mxu0 0
    %1246 = vmatpush1.bf16.msra.mxu0 0
    %1247 = vmatprep.subr.bf16.mxu0 0
    %1248 = vmatpush1.bf16.msra.mxu0 0
    %1249 = vmatprep.subr.bf16.mxu0 %v709
    %1250 = vmatpush1.bf16.msra.mxu0 %v708
    %1251 = vmatprep.subr.bf16.mxu0 %v677
    %1252 = vmatpush1.bf16.msra.mxu0 %v676
    %1253 = vmatprep.subr.bf16.mxu0 %v645
    %1254 = vmatpush1.bf16.msra.mxu0 %v644
    %1255 = vmatprep.subr.bf16.mxu0 %v613
    %1256 = vmatpush1.bf16.msra.mxu0 %v612
    %1257 = vmatprep.subr.bf16.mxu0 0
    %1258 = vmatpush2.bf16.msra.mxu0 0
    %1259 = vmatprep.subr.bf16.mxu0 0
    %1260 = vmatpush2.bf16.msra.mxu0 0
    %1261 = vmatprep.subr.bf16.mxu0 0
    %1262 = vmatpush2.bf16.msra.mxu0 0
    %1263 = vmatprep.subr.bf16.mxu0 0
    %1264 = vmatpush2.bf16.msra.mxu0 0
    %1265 = vmatprep.subr.bf16.mxu0 0
    %1266 = vmatpush2.bf16.msra.mxu0 0
    %1267 = vmatprep.subr.bf16.mxu0 0
    %1268 = vmatpush2.bf16.msra.mxu0 0
    %1269 = vmatprep.subr.bf16.mxu0 0
    %1270 = vmatpush2.bf16.msra.mxu0 0
    %1271 = vmatprep.subr.bf16.mxu0 0
    %1272 = vmatpush2.bf16.msra.mxu0 0
    %1273 = vmatprep.mubr.bf16.mxu0 0
    %1274 = vmatmul.mubr.bf16.gmra.mxu0 %v852
    %v1275 = vpop.f32.mrf.mxu0
    %v1276 = vadd.f32 0.0, %v1275
    %v1277 = vpop.f32.mrf.mxu0
    %v1278 = vadd.f32 0.0, %v1277
    %v1279 = vpop.f32.mrf.mxu0
    %v1280 = vadd.f32 0.0, %v1279
    %v1281 = vpop.f32.mrf.mxu0
    %v1282 = vadd.f32 0.0, %v1281
    %1283 = vdwg.mxu0
    %1284 = vmatprep.subr.bf16.mxu0 0
    %1285 = vmatpush1.bf16.msra.mxu0 0
    %1286 = vmatprep.subr.bf16.mxu0 0
    %1287 = vmatpush1.bf16.msra.mxu0 0
    %1288 = vmatprep.subr.bf16.mxu0 0
    %1289 = vmatpush1.bf16.msra.mxu0 0
    %1290 = vmatprep.subr.bf16.mxu0 0
    %1291 = vmatpush1.bf16.msra.mxu0 0
    %1292 = vmatprep.subr.bf16.mxu0 %v711
    %1293 = vmatpush1.bf16.msra.mxu0 %v710
    %1294 = vmatprep.subr.bf16.mxu0 %v679
    %1295 = vmatpush1.bf16.msra.mxu0 %v678
    %1296 = vmatprep.subr.bf16.mxu0 %v647
    %1297 = vmatpush1.bf16.msra.mxu0 %v646
    %1298 = vmatprep.subr.bf16.mxu0 %v615
    %1299 = vmatpush1.bf16.msra.mxu0 %v614
    %1300 = vmatprep.subr.bf16.mxu0 0
    %1301 = vmatpush2.bf16.msra.mxu0 0
    %1302 = vmatprep.subr.bf16.mxu0 0
    %1303 = vmatpush2.bf16.msra.mxu0 0
    %1304 = vmatprep.subr.bf16.mxu0 0
    %1305 = vmatpush2.bf16.msra.mxu0 0
    %1306 = vmatprep.subr.bf16.mxu0 0
    %1307 = vmatpush2.bf16.msra.mxu0 0
    %1308 = vmatprep.subr.bf16.mxu0 0
    %1309 = vmatpush2.bf16.msra.mxu0 0
    %1310 = vmatprep.subr.bf16.mxu0 0
    %1311 = vmatpush2.bf16.msra.mxu0 0
    %1312 = vmatprep.subr.bf16.mxu0 0
    %1313 = vmatpush2.bf16.msra.mxu0 0
    %1314 = vmatprep.subr.bf16.mxu0 0
    %1315 = vmatpush2.bf16.msra.mxu0 0
    %1316 = vmatprep.mubr.bf16.mxu0 0
    %1317 = vmatmul.mubr.bf16.gmra.mxu0 %v852
    %v1318 = vpop.f32.mrf.mxu0
    %v1319 = vadd.f32 0.0, %v1318
    %v1320 = vpop.f32.mrf.mxu0
    %v1321 = vadd.f32 0.0, %v1320
    %v1322 = vpop.f32.mrf.mxu0
    %v1323 = vadd.f32 0.0, %v1322
    %v1324 = vpop.f32.mrf.mxu0
    %v1325 = vadd.f32 0.0, %v1324
    %1326 = vdwg.mxu0
    %1327 = vmatprep.subr.bf16.mxu0 0
    %1328 = vmatpush1.bf16.msra.mxu0 0
    %1329 = vmatprep.subr.bf16.mxu0 0
    %1330 = vmatpush1.bf16.msra.mxu0 0
    %1331 = vmatprep.subr.bf16.mxu0 0
    %1332 = vmatpush1.bf16.msra.mxu0 0
    %1333 = vmatprep.subr.bf16.mxu0 0
    %1334 = vmatpush1.bf16.msra.mxu0 0
    %1335 = vmatprep.subr.bf16.mxu0 %v713
    %1336 = vmatpush1.bf16.msra.mxu0 %v712
    %1337 = vmatprep.subr.bf16.mxu0 %v681
    %1338 = vmatpush1.bf16.msra.mxu0 %v680
    %1339 = vmatprep.subr.bf16.mxu0 %v649
    %1340 = vmatpush1.bf16.msra.mxu0 %v648
    %1341 = vmatprep.subr.bf16.mxu0 %v617
    %1342 = vmatpush1.bf16.msra.mxu0 %v616
    %1343 = vmatprep.subr.bf16.mxu0 0
    %1344 = vmatpush2.bf16.msra.mxu0 0
    %1345 = vmatprep.subr.bf16.mxu0 0
    %1346 = vmatpush2.bf16.msra.mxu0 0
    %1347 = vmatprep.subr.bf16.mxu0 0
    %1348 = vmatpush2.bf16.msra.mxu0 0
    %1349 = vmatprep.subr.bf16.mxu0 0
    %1350 = vmatpush2.bf16.msra.mxu0 0
    %1351 = vmatprep.subr.bf16.mxu0 0
    %1352 = vmatpush2.bf16.msra.mxu0 0
    %1353 = vmatprep.subr.bf16.mxu0 0
    %1354 = vmatpush2.bf16.msra.mxu0 0
    %1355 = vmatprep.subr.bf16.mxu0 0
    %1356 = vmatpush2.bf16.msra.mxu0 0
    %1357 = vmatprep.subr.bf16.mxu0 0
    %1358 = vmatpush2.bf16.msra.mxu0 0
    %1359 = vmatprep.mubr.bf16.mxu0 0
    %1360 = vmatmul.mubr.bf16.gmra.mxu0 %v852
    %v1361 = vpop.f32.mrf.mxu0
    %v1362 = vadd.f32 0.0, %v1361
    %v1363 = vpop.f32.mrf.mxu0
    %v1364 = vadd.f32 0.0, %v1363
    %v1365 = vpop.f32.mrf.mxu0
    %v1366 = vadd.f32 0.0, %v1365
    %v1367 = vpop.f32.mrf.mxu0
    %v1368 = vadd.f32 0.0, %v1367
    %1369 = vdwg.mxu0
    %1370 = vmatprep.subr.bf16.mxu0 0
    %1371 = vmatpush1.bf16.msra.mxu0 0
    %1372 = vmatprep.subr.bf16.mxu0 0
    %1373 = vmatpush1.bf16.msra.mxu0 0
    %1374 = vmatprep.subr.bf16.mxu0 0
    %1375 = vmatpush1.bf16.msra.mxu0 0
    %1376 = vmatprep.subr.bf16.mxu0 0
    %1377 = vmatpush1.bf16.msra.mxu0 0
    %1378 = vmatprep.subr.bf16.mxu0 %v715
    %1379 = vmatpush1.bf16.msra.mxu0 %v714
    %1380 = vmatprep.subr.bf16.mxu0 %v683
    %1381 = vmatpush1.bf16.msra.mxu0 %v682
    %1382 = vmatprep.subr.bf16.mxu0 %v651
    %1383 = vmatpush1.bf16.msra.mxu0 %v650
    %1384 = vmatprep.subr.bf16.mxu0 %v619
    %1385 = vmatpush1.bf16.msra.mxu0 %v618
    %1386 = vmatprep.subr.bf16.mxu0 0
    %1387 = vmatpush2.bf16.msra.mxu0 0
    %1388 = vmatprep.subr.bf16.mxu0 0
    %1389 = vmatpush2.bf16.msra.mxu0 0
    %1390 = vmatprep.subr.bf16.mxu0 0
    %1391 = vmatpush2.bf16.msra.mxu0 0
    %1392 = vmatprep.subr.bf16.mxu0 0
    %1393 = vmatpush2.bf16.msra.mxu0 0
    %1394 = vmatprep.subr.bf16.mxu0 0
    %1395 = vmatpush2.bf16.msra.mxu0 0
    %1396 = vmatprep.subr.bf16.mxu0 0
    %1397 = vmatpush2.bf16.msra.mxu0 0
    %1398 = vmatprep.subr.bf16.mxu0 0
    %1399 = vmatpush2.bf16.msra.mxu0 0
    %1400 = vmatprep.subr.bf16.mxu0 0
    %1401 = vmatpush2.bf16.msra.mxu0 0
    %1402 = vmatprep.mubr.bf16.mxu0 0
    %1403 = vmatmul.mubr.bf16.gmra.mxu0 %v852
    %v1404 = vpop.f32.mrf.mxu0
    %v1405 = vadd.f32 0.0, %v1404
    %v1406 = vpop.f32.mrf.mxu0
    %v1407 = vadd.f32 0.0, %v1406
    %v1408 = vpop.f32.mrf.mxu0
    %v1409 = vadd.f32 0.0, %v1408
    %v1410 = vpop.f32.mrf.mxu0
    %v1411 = vadd.f32 0.0, %v1410
    %1412 = vdwg.mxu0
    %1413 = vmatprep.subr.bf16.mxu0 0
    %1414 = vmatpush1.bf16.msra.mxu0 0
    %1415 = vmatprep.subr.bf16.mxu0 0
    %1416 = vmatpush1.bf16.msra.mxu0 0
    %1417 = vmatprep.subr.bf16.mxu0 0
    %1418 = vmatpush1.bf16.msra.mxu0 0
    %1419 = vmatprep.subr.bf16.mxu0 0
    %1420 = vmatpush1.bf16.msra.mxu0 0
    %1421 = vmatprep.subr.bf16.mxu0 %v717
    %1422 = vmatpush1.bf16.msra.mxu0 %v716
    %1423 = vmatprep.subr.bf16.mxu0 %v685
    %1424 = vmatpush1.bf16.msra.mxu0 %v684
    %1425 = vmatprep.subr.bf16.mxu0 %v653
    %1426 = vmatpush1.bf16.msra.mxu0 %v652
    %1427 = vmatprep.subr.bf16.mxu0 %v621
    %1428 = vmatpush1.bf16.msra.mxu0 %v620
    %1429 = vmatprep.subr.bf16.mxu0 0
    %1430 = vmatpush2.bf16.msra.mxu0 0
    %1431 = vmatprep.subr.bf16.mxu0 0
    %1432 = vmatpush2.bf16.msra.mxu0 0
    %1433 = vmatprep.subr.bf16.mxu0 0
    %1434 = vmatpush2.bf16.msra.mxu0 0
    %1435 = vmatprep.subr.bf16.mxu0 0
    %1436 = vmatpush2.bf16.msra.mxu0 0
    %1437 = vmatprep.subr.bf16.mxu0 0
    %1438 = vmatpush2.bf16.msra.mxu0 0
    %1439 = vmatprep.subr.bf16.mxu0 0
    %1440 = vmatpush2.bf16.msra.mxu0 0
    %1441 = vmatprep.subr.bf16.mxu0 0
    %1442 = vmatpush2.bf16.msra.mxu0 0
    %1443 = vmatprep.subr.bf16.mxu0 0
    %1444 = vmatpush2.bf16.msra.mxu0 0
    %1445 = vmatprep.mubr.bf16.mxu0 0
    %1446 = vmatmul.mubr.bf16.gmra.mxu0 %v852
    %v1447 = vpop.f32.mrf.mxu0
    %v1448 = vadd.f32 0.0, %v1447
    %v1449 = vpop.f32.mrf.mxu0
    %v1450 = vadd.f32 0.0, %v1449
    %v1451 = vpop.f32.mrf.mxu0
    %v1452 = vadd.f32 0.0, %v1451
    %v1453 = vpop.f32.mrf.mxu0
    %v1454 = vadd.f32 0.0, %v1453
    %1455 = vdwg.mxu0
    %1456 = vmatprep.subr.bf16.mxu0 0
    %1457 = vmatpush1.bf16.msra.mxu0 0
    %1458 = vmatprep.subr.bf16.mxu0 0
    %1459 = vmatpush1.bf16.msra.mxu0 0
    %1460 = vmatprep.subr.bf16.mxu0 0
    %1461 = vmatpush1.bf16.msra.mxu0 0
    %1462 = vmatprep.subr.bf16.mxu0 0
    %1463 = vmatpush1.bf16.msra.mxu0 0
    %1464 = vmatprep.subr.bf16.mxu0 %v719
    %1465 = vmatpush1.bf16.msra.mxu0 %v718
    %1466 = vmatprep.subr.bf16.mxu0 %v687
    %1467 = vmatpush1.bf16.msra.mxu0 %v686
    %1468 = vmatprep.subr.bf16.mxu0 %v655
    %1469 = vmatpush1.bf16.msra.mxu0 %v654
    %1470 = vmatprep.subr.bf16.mxu0 %v623
    %1471 = vmatpush1.bf16.msra.mxu0 %v622
    %1472 = vmatprep.subr.bf16.mxu0 0
    %1473 = vmatpush2.bf16.msra.mxu0 0
    %1474 = vmatprep.subr.bf16.mxu0 0
    %1475 = vmatpush2.bf16.msra.mxu0 0
    %1476 = vmatprep.subr.bf16.mxu0 0
    %1477 = vmatpush2.bf16.msra.mxu0 0
    %1478 = vmatprep.subr.bf16.mxu0 0
    %1479 = vmatpush2.bf16.msra.mxu0 0
    %1480 = vmatprep.subr.bf16.mxu0 0
    %1481 = vmatpush2.bf16.msra.mxu0 0
    %1482 = vmatprep.subr.bf16.mxu0 0
    %1483 = vmatpush2.bf16.msra.mxu0 0
    %1484 = vmatprep.subr.bf16.mxu0 0
    %1485 = vmatpush2.bf16.msra.mxu0 0
    %1486 = vmatprep.subr.bf16.mxu0 0
    %1487 = vmatpush2.bf16.msra.mxu0 0
    %1488 = vmatprep.mubr.bf16.mxu0 0
    %1489 = vmatmul.mubr.bf16.gmra.mxu0 %v852
    %v1490 = vpop.f32.mrf.mxu0
    %v1491 = vadd.f32 0.0, %v1490
    %v1492 = vpop.f32.mrf.mxu0
    %v1493 = vadd.f32 0.0, %v1492
    %v1494 = vpop.f32.mrf.mxu0
    %v1495 = vadd.f32 0.0, %v1494
    %v1496 = vpop.f32.mrf.mxu0
    %v1497 = vadd.f32 0.0, %v1496
    %1498 = vdwg.mxu0
    %1499 = vmatprep.subr.bf16.mxu0 0
    %1500 = vmatpush1.bf16.msra.mxu0 0
    %1501 = vmatprep.subr.bf16.mxu0 0
    %1502 = vmatpush1.bf16.msra.mxu0 0
    %1503 = vmatprep.subr.bf16.mxu0 0
    %1504 = vmatpush1.bf16.msra.mxu0 0
    %1505 = vmatprep.subr.bf16.mxu0 0
    %1506 = vmatpush1.bf16.msra.mxu0 0
    %1507 = vmatprep.subr.bf16.mxu0 %v721
    %1508 = vmatpush1.bf16.msra.mxu0 %v720
    %1509 = vmatprep.subr.bf16.mxu0 %v689
    %1510 = vmatpush1.bf16.msra.mxu0 %v688
    %1511 = vmatprep.subr.bf16.mxu0 %v657
    %1512 = vmatpush1.bf16.msra.mxu0 %v656
    %1513 = vmatprep.subr.bf16.mxu0 %v625
    %1514 = vmatpush1.bf16.msra.mxu0 %v624
    %1515 = vmatprep.subr.bf16.mxu0 0
    %1516 = vmatpush2.bf16.msra.mxu0 0
    %1517 = vmatprep.subr.bf16.mxu0 0
    %1518 = vmatpush2.bf16.msra.mxu0 0
    %1519 = vmatprep.subr.bf16.mxu0 0
    %1520 = vmatpush2.bf16.msra.mxu0 0
    %1521 = vmatprep.subr.bf16.mxu0 0
    %1522 = vmatpush2.bf16.msra.mxu0 0
    %1523 = vmatprep.subr.bf16.mxu0 0
    %1524 = vmatpush2.bf16.msra.mxu0 0
    %1525 = vmatprep.subr.bf16.mxu0 0
    %1526 = vmatpush2.bf16.msra.mxu0 0
    %1527 = vmatprep.subr.bf16.mxu0 0
    %1528 = vmatpush2.bf16.msra.mxu0 0
    %1529 = vmatprep.subr.bf16.mxu0 0
    %1530 = vmatpush2.bf16.msra.mxu0 0
    %1531 = vmatprep.mubr.bf16.mxu0 0
    %1532 = vmatmul.mubr.bf16.gmra.mxu0 %v852
    %v1533 = vpop.f32.mrf.mxu0
    %v1534 = vadd.f32 0.0, %v1533
    %v1535 = vpop.f32.mrf.mxu0
    %v1536 = vadd.f32 0.0, %v1535
    %v1537 = vpop.f32.mrf.mxu0
    %v1538 = vadd.f32 0.0, %v1537
    %v1539 = vpop.f32.mrf.mxu0
    %v1540 = vadd.f32 0.0, %v1539
    %1541 = vdwg.mxu0
    %v1542 = vpack.c.bf16 %v893, %v889
    %v1543 = vpack.c.bf16 %v895, %v891
    %v1544 = vpack.c.bf16 %v936, %v932
    %v1545 = vpack.c.bf16 %v938, %v934
    %v1546 = vpack.c.bf16 %v979, %v975
    %v1547 = vpack.c.bf16 %v981, %v977
    %v1548 = vpack.c.bf16 %v1022, %v1018
    %v1549 = vpack.c.bf16 %v1024, %v1020
    %v1550 = vpack.c.bf16 %v1065, %v1061
    %v1551 = vpack.c.bf16 %v1067, %v1063
    %v1552 = vpack.c.bf16 %v1108, %v1104
    %v1553 = vpack.c.bf16 %v1110, %v1106
    %v1554 = vpack.c.bf16 %v1151, %v1147
    %v1555 = vpack.c.bf16 %v1153, %v1149
    %v1556 = vpack.c.bf16 %v1194, %v1190
    %v1557 = vpack.c.bf16 %v1196, %v1192
    %v1558 = vpack.c.bf16 %v1237, %v1233
    %v1559 = vpack.c.bf16 %v1239, %v1235
    %v1560 = vpack.c.bf16 %v1280, %v1276
    %v1561 = vpack.c.bf16 %v1282, %v1278
    %v1562 = vpack.c.bf16 %v1323, %v1319
    %v1563 = vpack.c.bf16 %v1325, %v1321
    %v1564 = vpack.c.bf16 %v1366, %v1362
    %v1565 = vpack.c.bf16 %v1368, %v1364
    %v1566 = vpack.c.bf16 %v1409, %v1405
    %v1567 = vpack.c.bf16 %v1411, %v1407
    %v1568 = vpack.c.bf16 %v1452, %v1448
    %v1569 = vpack.c.bf16 %v1454, %v1450
    %v1570 = vpack.c.bf16 %v1495, %v1491
    %v1571 = vpack.c.bf16 %v1497, %v1493
    %v1572 = vpack.c.bf16 %v1538, %v1534
    %v1573 = vpack.c.bf16 %v1540, %v1536
    %v1574 = vld [vmem:[#allocation7] sm:$0xff]
    %v1575 = vld [vmem:[#allocation7 + $0x8] sm:$0xff]
    %v1576 = vld [vmem:[#allocation7 + $0x10] sm:$0xff]
    %v1577 = vld [vmem:[#allocation7 + $0x18] sm:$0xff]
    %v1582 = vlaneseq
    %v1583 = vshrl.u32 %v1582, 7
    %v1584 = vsub.s32 0, %v1583
    %v1585 = vrot.slane %v1574, %v1584
    %v1586 = vlaneseq
    %v1587 = vshrl.u32 %v1586, 7
    %v1588 = vsub.s32 1, %v1587
    %v1589 = vrot.slane %v1574, %v1588
    %v1590 = vlaneseq
    %v1591 = vshrl.u32 %v1590, 7
    %v1592 = vsub.s32 2, %v1591
    %v1593 = vrot.slane %v1574, %v1592
    %v1594 = vlaneseq
    %v1595 = vshrl.u32 %v1594, 7
    %v1596 = vsub.s32 3, %v1595
    %v1597 = vrot.slane %v1574, %v1596
    %v1598 = vlaneseq
    %v1599 = vshrl.u32 %v1598, 7
    %v1600 = vsub.s32 4, %v1599
    %v1601 = vrot.slane %v1574, %v1600
    %v1602 = vlaneseq
    %v1603 = vshrl.u32 %v1602, 7
    %v1604 = vsub.s32 5, %v1603
    %v1605 = vrot.slane %v1574, %v1604
    %v1606 = vlaneseq
    %v1607 = vshrl.u32 %v1606, 7
    %v1608 = vsub.s32 6, %v1607
    %v1609 = vrot.slane %v1574, %v1608
    %v1610 = vlaneseq
    %v1611 = vshrl.u32 %v1610, 7
    %v1612 = vsub.s32 7, %v1611
    %v1613 = vrot.slane %v1574, %v1612
    %v1614 = vlaneseq
    %v1615 = vshrl.u32 %v1614, 7
    %v1616 = vsub.s32 0, %v1615
    %v1617 = vrot.slane %v1575, %v1616
    %v1618 = vlaneseq
    %v1619 = vshrl.u32 %v1618, 7
    %v1620 = vsub.s32 1, %v1619
    %v1621 = vrot.slane %v1575, %v1620
    %v1622 = vlaneseq
    %v1623 = vshrl.u32 %v1622, 7
    %v1624 = vsub.s32 2, %v1623
    %v1625 = vrot.slane %v1575, %v1624
    %v1626 = vlaneseq
    %v1627 = vshrl.u32 %v1626, 7
    %v1628 = vsub.s32 3, %v1627
    %v1629 = vrot.slane %v1575, %v1628
    %v1630 = vlaneseq
    %v1631 = vshrl.u32 %v1630, 7
    %v1632 = vsub.s32 4, %v1631
    %v1633 = vrot.slane %v1575, %v1632
    %v1634 = vlaneseq
    %v1635 = vshrl.u32 %v1634, 7
    %v1636 = vsub.s32 5, %v1635
    %v1637 = vrot.slane %v1575, %v1636
    %v1638 = vlaneseq
    %v1639 = vshrl.u32 %v1638, 7
    %v1640 = vsub.s32 6, %v1639
    %v1641 = vrot.slane %v1575, %v1640
    %v1642 = vlaneseq
    %v1643 = vshrl.u32 %v1642, 7
    %v1644 = vsub.s32 7, %v1643
    %v1645 = vrot.slane %v1575, %v1644
    %v1646 = vlaneseq
    %v1647 = vshrl.u32 %v1646, 7
    %v1648 = vsub.s32 0, %v1647
    %v1649 = vrot.slane %v1576, %v1648
    %v1650 = vlaneseq
    %v1651 = vshrl.u32 %v1650, 7
    %v1652 = vsub.s32 1, %v1651
    %v1653 = vrot.slane %v1576, %v1652
    %v1654 = vlaneseq
    %v1655 = vshrl.u32 %v1654, 7
    %v1656 = vsub.s32 2, %v1655
    %v1657 = vrot.slane %v1576, %v1656
    %v1658 = vlaneseq
    %v1659 = vshrl.u32 %v1658, 7
    %v1660 = vsub.s32 3, %v1659
    %v1661 = vrot.slane %v1576, %v1660
    %v1662 = vlaneseq
    %v1663 = vshrl.u32 %v1662, 7
    %v1664 = vsub.s32 4, %v1663
    %v1665 = vrot.slane %v1576, %v1664
    %v1666 = vlaneseq
    %v1667 = vshrl.u32 %v1666, 7
    %v1668 = vsub.s32 5, %v1667
    %v1669 = vrot.slane %v1576, %v1668
    %v1670 = vlaneseq
    %v1671 = vshrl.u32 %v1670, 7
    %v1672 = vsub.s32 6, %v1671
    %v1673 = vrot.slane %v1576, %v1672
    %v1674 = vlaneseq
    %v1675 = vshrl.u32 %v1674, 7
    %v1676 = vsub.s32 7, %v1675
    %v1677 = vrot.slane %v1576, %v1676
    %v1678 = vlaneseq
    %v1679 = vshrl.u32 %v1678, 7
    %v1680 = vsub.s32 0, %v1679
    %v1681 = vrot.slane %v1577, %v1680
    %v1682 = vlaneseq
    %v1683 = vshrl.u32 %v1682, 7
    %v1684 = vsub.s32 1, %v1683
    %v1685 = vrot.slane %v1577, %v1684
    %v1686 = vlaneseq
    %v1687 = vshrl.u32 %v1686, 7
    %v1688 = vsub.s32 2, %v1687
    %v1689 = vrot.slane %v1577, %v1688
    %v1690 = vlaneseq
    %v1691 = vshrl.u32 %v1690, 7
    %v1692 = vsub.s32 3, %v1691
    %v1693 = vrot.slane %v1577, %v1692
    %v1694 = vlaneseq
    %v1695 = vshrl.u32 %v1694, 7
    %v1696 = vsub.s32 4, %v1695
    %v1697 = vrot.slane %v1577, %v1696
    %v1698 = vlaneseq
    %v1699 = vshrl.u32 %v1698, 7
    %v1700 = vsub.s32 5, %v1699
    %v1701 = vrot.slane %v1577, %v1700
    %v1702 = vlaneseq
    %v1703 = vshrl.u32 %v1702, 7
    %v1704 = vsub.s32 6, %v1703
    %v1705 = vrot.slane %v1577, %v1704
    %v1706 = vlaneseq
    %v1707 = vshrl.u32 %v1706, 7
    %v1708 = vsub.s32 7, %v1707
    %v1709 = vrot.slane %v1577, %v1708
    %v1742 = vpack.c.bf16 %v1585, %v1585
    %v1743 = vpack.c.bf16 %v1589, %v1589
    %v1744 = vpack.c.bf16 %v1593, %v1593
    %v1745 = vpack.c.bf16 %v1597, %v1597
    %v1746 = vpack.c.bf16 %v1601, %v1601
    %v1747 = vpack.c.bf16 %v1605, %v1605
    %v1748 = vpack.c.bf16 %v1609, %v1609
    %v1749 = vpack.c.bf16 %v1613, %v1613
    %v1750 = vpack.c.bf16 %v1617, %v1617
    %v1751 = vpack.c.bf16 %v1621, %v1621
    %v1752 = vpack.c.bf16 %v1625, %v1625
    %v1753 = vpack.c.bf16 %v1629, %v1629
    %v1754 = vpack.c.bf16 %v1633, %v1633
    %v1755 = vpack.c.bf16 %v1637, %v1637
    %v1756 = vpack.c.bf16 %v1641, %v1641
    %v1757 = vpack.c.bf16 %v1645, %v1645
    %v1758 = vpack.c.bf16 %v1649, %v1649
    %v1759 = vpack.c.bf16 %v1653, %v1653
    %v1760 = vpack.c.bf16 %v1657, %v1657
    %v1761 = vpack.c.bf16 %v1661, %v1661
    %v1762 = vpack.c.bf16 %v1665, %v1665
    %v1763 = vpack.c.bf16 %v1669, %v1669
    %v1764 = vpack.c.bf16 %v1673, %v1673
    %v1765 = vpack.c.bf16 %v1677, %v1677
    %v1766 = vpack.c.bf16 %v1681, %v1681
    %v1767 = vpack.c.bf16 %v1685, %v1685
    %v1768 = vpack.c.bf16 %v1689, %v1689
    %v1769 = vpack.c.bf16 %v1693, %v1693
    %v1770 = vpack.c.bf16 %v1697, %v1697
    %v1771 = vpack.c.bf16 %v1701, %v1701
    %v1772 = vpack.c.bf16 %v1705, %v1705
    %v1773 = vpack.c.bf16 %v1709, %v1709
    %v1775 = vpack.i.b16 %v1742, %v1742
    %v1777 = vlaneseq
    %v1778 = vshrl.u32 %v1777, 7
    %v1779 = vsub.s32 0, %v1778
    %v1780 = vrot.slane %v1775, %v1779
    %v1782 = vpack.i.b16 %v1743, %v1743
    %v1784 = vlaneseq
    %v1785 = vshrl.u32 %v1784, 7
    %v1786 = vsub.s32 0, %v1785
    %v1787 = vrot.slane %v1782, %v1786
    %v1789 = vpack.i.b16 %v1744, %v1744
    %v1791 = vlaneseq
    %v1792 = vshrl.u32 %v1791, 7
    %v1793 = vsub.s32 0, %v1792
    %v1794 = vrot.slane %v1789, %v1793
    %v1796 = vpack.i.b16 %v1745, %v1745
    %v1798 = vlaneseq
    %v1799 = vshrl.u32 %v1798, 7
    %v1800 = vsub.s32 0, %v1799
    %v1801 = vrot.slane %v1796, %v1800
    %v1803 = vpack.i.b16 %v1746, %v1746
    %v1805 = vlaneseq
    %v1806 = vshrl.u32 %v1805, 7
    %v1807 = vsub.s32 0, %v1806
    %v1808 = vrot.slane %v1803, %v1807
    %v1810 = vpack.i.b16 %v1747, %v1747
    %v1812 = vlaneseq
    %v1813 = vshrl.u32 %v1812, 7
    %v1814 = vsub.s32 0, %v1813
    %v1815 = vrot.slane %v1810, %v1814
    %v1817 = vpack.i.b16 %v1748, %v1748
    %v1819 = vlaneseq
    %v1820 = vshrl.u32 %v1819, 7
    %v1821 = vsub.s32 0, %v1820
    %v1822 = vrot.slane %v1817, %v1821
    %v1824 = vpack.i.b16 %v1749, %v1749
    %v1826 = vlaneseq
    %v1827 = vshrl.u32 %v1826, 7
    %v1828 = vsub.s32 0, %v1827
    %v1829 = vrot.slane %v1824, %v1828
    %v1831 = vpack.i.b16 %v1750, %v1750
    %v1833 = vlaneseq
    %v1834 = vshrl.u32 %v1833, 7
    %v1835 = vsub.s32 0, %v1834
    %v1836 = vrot.slane %v1831, %v1835
    %v1838 = vpack.i.b16 %v1751, %v1751
    %v1840 = vlaneseq
    %v1841 = vshrl.u32 %v1840, 7
    %v1842 = vsub.s32 0, %v1841
    %v1843 = vrot.slane %v1838, %v1842
    %v1845 = vpack.i.b16 %v1752, %v1752
    %v1847 = vlaneseq
    %v1848 = vshrl.u32 %v1847, 7
    %v1849 = vsub.s32 0, %v1848
    %v1850 = vrot.slane %v1845, %v1849
    %v1852 = vpack.i.b16 %v1753, %v1753
    %v1854 = vlaneseq
    %v1855 = vshrl.u32 %v1854, 7
    %v1856 = vsub.s32 0, %v1855
    %v1857 = vrot.slane %v1852, %v1856
    %v1859 = vpack.i.b16 %v1754, %v1754
    %v1861 = vlaneseq
    %v1862 = vshrl.u32 %v1861, 7
    %v1863 = vsub.s32 0, %v1862
    %v1864 = vrot.slane %v1859, %v1863
    %v1866 = vpack.i.b16 %v1755, %v1755
    %v1868 = vlaneseq
    %v1869 = vshrl.u32 %v1868, 7
    %v1870 = vsub.s32 0, %v1869
    %v1871 = vrot.slane %v1866, %v1870
    %v1873 = vpack.i.b16 %v1756, %v1756
    %v1875 = vlaneseq
    %v1876 = vshrl.u32 %v1875, 7
    %v1877 = vsub.s32 0, %v1876
    %v1878 = vrot.slane %v1873, %v1877
    %v1880 = vpack.i.b16 %v1757, %v1757
    %v1882 = vlaneseq
    %v1883 = vshrl.u32 %v1882, 7
    %v1884 = vsub.s32 0, %v1883
    %v1885 = vrot.slane %v1880, %v1884
    %v1887 = vpack.i.b16 %v1758, %v1758
    %v1889 = vlaneseq
    %v1890 = vshrl.u32 %v1889, 7
    %v1891 = vsub.s32 0, %v1890
    %v1892 = vrot.slane %v1887, %v1891
    %v1894 = vpack.i.b16 %v1759, %v1759
    %v1896 = vlaneseq
    %v1897 = vshrl.u32 %v1896, 7
    %v1898 = vsub.s32 0, %v1897
    %v1899 = vrot.slane %v1894, %v1898
    %v1901 = vpack.i.b16 %v1760, %v1760
    %v1903 = vlaneseq
    %v1904 = vshrl.u32 %v1903, 7
    %v1905 = vsub.s32 0, %v1904
    %v1906 = vrot.slane %v1901, %v1905
    %v1908 = vpack.i.b16 %v1761, %v1761
    %v1910 = vlaneseq
    %v1911 = vshrl.u32 %v1910, 7
    %v1912 = vsub.s32 0, %v1911
    %v1913 = vrot.slane %v1908, %v1912
    %v1915 = vpack.i.b16 %v1762, %v1762
    %v1917 = vlaneseq
    %v1918 = vshrl.u32 %v1917, 7
    %v1919 = vsub.s32 0, %v1918
    %v1920 = vrot.slane %v1915, %v1919
    %v1922 = vpack.i.b16 %v1763, %v1763
    %v1924 = vlaneseq
    %v1925 = vshrl.u32 %v1924, 7
    %v1926 = vsub.s32 0, %v1925
    %v1927 = vrot.slane %v1922, %v1926
    %v1929 = vpack.i.b16 %v1764, %v1764
    %v1931 = vlaneseq
    %v1932 = vshrl.u32 %v1931, 7
    %v1933 = vsub.s32 0, %v1932
    %v1934 = vrot.slane %v1929, %v1933
    %v1936 = vpack.i.b16 %v1765, %v1765
    %v1938 = vlaneseq
    %v1939 = vshrl.u32 %v1938, 7
    %v1940 = vsub.s32 0, %v1939
    %v1941 = vrot.slane %v1936, %v1940
    %v1943 = vpack.i.b16 %v1766, %v1766
    %v1945 = vlaneseq
    %v1946 = vshrl.u32 %v1945, 7
    %v1947 = vsub.s32 0, %v1946
    %v1948 = vrot.slane %v1943, %v1947
    %v1950 = vpack.i.b16 %v1767, %v1767
    %v1952 = vlaneseq
    %v1953 = vshrl.u32 %v1952, 7
    %v1954 = vsub.s32 0, %v1953
    %v1955 = vrot.slane %v1950, %v1954
    %v1957 = vpack.i.b16 %v1768, %v1768
    %v1959 = vlaneseq
    %v1960 = vshrl.u32 %v1959, 7
    %v1961 = vsub.s32 0, %v1960
    %v1962 = vrot.slane %v1957, %v1961
    %v1964 = vpack.i.b16 %v1769, %v1769
    %v1966 = vlaneseq
    %v1967 = vshrl.u32 %v1966, 7
    %v1968 = vsub.s32 0, %v1967
    %v1969 = vrot.slane %v1964, %v1968
    %v1971 = vpack.i.b16 %v1770, %v1770
    %v1973 = vlaneseq
    %v1974 = vshrl.u32 %v1973, 7
    %v1975 = vsub.s32 0, %v1974
    %v1976 = vrot.slane %v1971, %v1975
    %v1978 = vpack.i.b16 %v1771, %v1771
    %v1980 = vlaneseq
    %v1981 = vshrl.u32 %v1980, 7
    %v1982 = vsub.s32 0, %v1981
    %v1983 = vrot.slane %v1978, %v1982
    %v1985 = vpack.i.b16 %v1772, %v1772
    %v1987 = vlaneseq
    %v1988 = vshrl.u32 %v1987, 7
    %v1989 = vsub.s32 0, %v1988
    %v1990 = vrot.slane %v1985, %v1989
    %v1992 = vpack.i.b16 %v1773, %v1773
    %v1994 = vlaneseq
    %v1995 = vshrl.u32 %v1994, 7
    %v1996 = vsub.s32 0, %v1995
    %v1997 = vrot.slane %v1992, %v1996
    %v1998 = vadd.bf16 %v1542, %v1780
    %v1999 = vadd.bf16 %v1543, %v1787
    %v2000 = vadd.bf16 %v1544, %v1794
    %v2001 = vadd.bf16 %v1545, %v1801
    %v2002 = vadd.bf16 %v1546, %v1808
    %v2003 = vadd.bf16 %v1547, %v1815
    %v2004 = vadd.bf16 %v1548, %v1822
    %v2005 = vadd.bf16 %v1549, %v1829
    %v2006 = vadd.bf16 %v1550, %v1836
    %v2007 = vadd.bf16 %v1551, %v1843
    %v2008 = vadd.bf16 %v1552, %v1850
    %v2009 = vadd.bf16 %v1553, %v1857
    %v2010 = vadd.bf16 %v1554, %v1864
    %v2011 = vadd.bf16 %v1555, %v1871
    %v2012 = vadd.bf16 %v1556, %v1878
    %v2013 = vadd.bf16 %v1557, %v1885
    %v2014 = vadd.bf16 %v1558, %v1892
    %v2015 = vadd.bf16 %v1559, %v1899
    %v2016 = vadd.bf16 %v1560, %v1906
    %v2017 = vadd.bf16 %v1561, %v1913
    %v2018 = vadd.bf16 %v1562, %v1920
    %v2019 = vadd.bf16 %v1563, %v1927
    %v2020 = vadd.bf16 %v1564, %v1934
    %v2021 = vadd.bf16 %v1565, %v1941
    %v2022 = vadd.bf16 %v1566, %v1948
    %v2023 = vadd.bf16 %v1567, %v1955
    %v2024 = vadd.bf16 %v1568, %v1962
    %v2025 = vadd.bf16 %v1569, %v1969
    %v2026 = vadd.bf16 %v1570, %v1976
    %v2027 = vadd.bf16 %v1571, %v1983
    %v2028 = vadd.bf16 %v1572, %v1990
    %v2029 = vadd.bf16 %v1573, %v1997
    %v2030 = vmax.bf16 %v1998, 0
    %v2031 = vmax.bf16 %v1999, 0
    %v2032 = vmax.bf16 %v2000, 0
    %v2033 = vmax.bf16 %v2001, 0
    %v2034 = vmax.bf16 %v2002, 0
    %v2035 = vmax.bf16 %v2003, 0
    %v2036 = vmax.bf16 %v2004, 0
    %v2037 = vmax.bf16 %v2005, 0
    %v2038 = vmax.bf16 %v2006, 0
    %v2039 = vmax.bf16 %v2007, 0
    %v2040 = vmax.bf16 %v2008, 0
    %v2041 = vmax.bf16 %v2009, 0
    %v2042 = vmax.bf16 %v2010, 0
    %v2043 = vmax.bf16 %v2011, 0
    %v2044 = vmax.bf16 %v2012, 0
    %v2045 = vmax.bf16 %v2013, 0
    %v2046 = vmax.bf16 %v2014, 0
    %v2047 = vmax.bf16 %v2015, 0
    %v2048 = vmax.bf16 %v2016, 0
    %v2049 = vmax.bf16 %v2017, 0
    %v2050 = vmax.bf16 %v2018, 0
    %v2051 = vmax.bf16 %v2019, 0
    %v2052 = vmax.bf16 %v2020, 0
    %v2053 = vmax.bf16 %v2021, 0
    %v2054 = vmax.bf16 %v2022, 0
    %v2055 = vmax.bf16 %v2023, 0
    %v2056 = vmax.bf16 %v2024, 0
    %v2057 = vmax.bf16 %v2025, 0
    %v2058 = vmax.bf16 %v2026, 0
    %v2059 = vmax.bf16 %v2027, 0
    %v2060 = vmax.bf16 %v2028, 0
    %v2061 = vmax.bf16 %v2029, 0
    %v2062 = vld [vmem:[#allocation8] sm:$0xf]
    %v2063 = vld [vmem:[#allocation8 + $0x4] sm:$0xf]
    %v2064 = vld [vmem:[#allocation8 + $0x8] sm:$0xf]
    %v2065 = vld [vmem:[#allocation8 + $0xc] sm:$0xf]
    %v2066 = vld [vmem:[#allocation8 + $0x10] sm:$0xf]
    %v2067 = vld [vmem:[#allocation8 + $0x14] sm:$0xf]
    %v2068 = vld [vmem:[#allocation8 + $0x18] sm:$0xf]
    %v2069 = vld [vmem:[#allocation8 + $0x1c] sm:$0xf]
    %v2070 = vld [vmem:[#allocation8 + $0x20] sm:$0xf]
    %v2071 = vld [vmem:[#allocation8 + $0x24] sm:$0xf]
    %v2072 = vld [vmem:[#allocation8 + $0x28] sm:$0xf]
    %v2073 = vld [vmem:[#allocation8 + $0x2c] sm:$0xf]
    %v2074 = vld [vmem:[#allocation8 + $0x30] sm:$0xf]
    %v2075 = vld [vmem:[#allocation8 + $0x34] sm:$0xf]
    %v2076 = vld [vmem:[#allocation8 + $0x38] sm:$0xf]
    %v2077 = vld [vmem:[#allocation8 + $0x3c] sm:$0xf]
    %v2078 = vld [vmem:[#allocation8 + $0x40] sm:$0xf]
    %v2079 = vld [vmem:[#allocation8 + $0x44] sm:$0xf]
    %v2080 = vld [vmem:[#allocation8 + $0x48] sm:$0xf]
    %v2081 = vld [vmem:[#allocation8 + $0x4c] sm:$0xf]
    %v2082 = vld [vmem:[#allocation8 + $0x50] sm:$0xf]
    %v2083 = vld [vmem:[#allocation8 + $0x54] sm:$0xf]
    %v2084 = vld [vmem:[#allocation8 + $0x58] sm:$0xf]
    %v2085 = vld [vmem:[#allocation8 + $0x5c] sm:$0xf]
    %v2086 = vld [vmem:[#allocation8 + $0x60] sm:$0xf]
    %v2087 = vld [vmem:[#allocation8 + $0x64] sm:$0xf]
    %v2088 = vld [vmem:[#allocation8 + $0x68] sm:$0xf]
    %v2089 = vld [vmem:[#allocation8 + $0x6c] sm:$0xf]
    %v2090 = vld [vmem:[#allocation8 + $0x70] sm:$0xf]
    %v2091 = vld [vmem:[#allocation8 + $0x74] sm:$0xf]
    %v2092 = vld [vmem:[#allocation8 + $0x78] sm:$0xf]
    %v2093 = vld [vmem:[#allocation8 + $0x7c] sm:$0xf]
    %v2094 = vld [vmem:[#allocation8 + $0x80] sm:$0xf]
    %v2095 = vld [vmem:[#allocation8 + $0x84] sm:$0xf]
    %v2096 = vld [vmem:[#allocation8 + $0x88] sm:$0xf]
    %v2097 = vld [vmem:[#allocation8 + $0x8c] sm:$0xf]
    %v2098 = vld [vmem:[#allocation8 + $0x90] sm:$0xf]
    %v2099 = vld [vmem:[#allocation8 + $0x94] sm:$0xf]
    %v2100 = vld [vmem:[#allocation8 + $0x98] sm:$0xf]
    %v2101 = vld [vmem:[#allocation8 + $0x9c] sm:$0xf]
    %v2102 = vld [vmem:[#allocation8 + $0xa0] sm:$0xf]
    %v2103 = vld [vmem:[#allocation8 + $0xa4] sm:$0xf]
    %v2104 = vld [vmem:[#allocation8 + $0xa8] sm:$0xf]
    %v2105 = vld [vmem:[#allocation8 + $0xac] sm:$0xf]
    %v2106 = vld [vmem:[#allocation8 + $0xb0] sm:$0xf]
    %v2107 = vld [vmem:[#allocation8 + $0xb4] sm:$0xf]
    %v2108 = vld [vmem:[#allocation8 + $0xb8] sm:$0xf]
    %v2109 = vld [vmem:[#allocation8 + $0xbc] sm:$0xf]
    %v2110 = vld [vmem:[#allocation8 + $0xc0] sm:$0xf]
    %v2111 = vld [vmem:[#allocation8 + $0xc4] sm:$0xf]
    %v2112 = vld [vmem:[#allocation8 + $0xc8] sm:$0xf]
    %v2113 = vld [vmem:[#allocation8 + $0xcc] sm:$0xf]
    %v2114 = vld [vmem:[#allocation8 + $0xd0] sm:$0xf]
    %v2115 = vld [vmem:[#allocation8 + $0xd4] sm:$0xf]
    %v2116 = vld [vmem:[#allocation8 + $0xd8] sm:$0xf]
    %v2117 = vld [vmem:[#allocation8 + $0xdc] sm:$0xf]
    %v2118 = vld [vmem:[#allocation8 + $0xe0] sm:$0xf]
    %v2119 = vld [vmem:[#allocation8 + $0xe4] sm:$0xf]
    %v2120 = vld [vmem:[#allocation8 + $0xe8] sm:$0xf]
    %v2121 = vld [vmem:[#allocation8 + $0xec] sm:$0xf]
    %v2122 = vld [vmem:[#allocation8 + $0xf0] sm:$0xf]
    %v2123 = vld [vmem:[#allocation8 + $0xf4] sm:$0xf]
    %v2124 = vld [vmem:[#allocation8 + $0xf8] sm:$0xf]
    %v2125 = vld [vmem:[#allocation8 + $0xfc] sm:$0xf]
    %v2126 = vld [vmem:[#allocation8 + $0x100] sm:$0xf]
    %v2127 = vld [vmem:[#allocation8 + $0x104] sm:$0xf]
    %v2128 = vld [vmem:[#allocation8 + $0x108] sm:$0xf]
    %v2129 = vld [vmem:[#allocation8 + $0x10c] sm:$0xf]
    %v2130 = vld [vmem:[#allocation8 + $0x110] sm:$0xf]
    %v2131 = vld [vmem:[#allocation8 + $0x114] sm:$0xf]
    %v2132 = vld [vmem:[#allocation8 + $0x118] sm:$0xf]
    %v2133 = vld [vmem:[#allocation8 + $0x11c] sm:$0xf]
    %v2134 = vld [vmem:[#allocation8 + $0x120] sm:$0xf]
    %v2135 = vld [vmem:[#allocation8 + $0x124] sm:$0xf]
    %v2136 = vld [vmem:[#allocation8 + $0x128] sm:$0xf]
    %v2137 = vld [vmem:[#allocation8 + $0x12c] sm:$0xf]
    %v2138 = vld [vmem:[#allocation8 + $0x130] sm:$0xf]
    %v2139 = vld [vmem:[#allocation8 + $0x134] sm:$0xf]
    %v2140 = vld [vmem:[#allocation8 + $0x138] sm:$0xf]
    %v2141 = vld [vmem:[#allocation8 + $0x13c] sm:$0xf]
    %v2142 = vld [vmem:[#allocation8 + $0x140] sm:$0xf]
    %v2143 = vld [vmem:[#allocation8 + $0x144] sm:$0xf]
    %v2144 = vld [vmem:[#allocation8 + $0x148] sm:$0xf]
    %v2145 = vld [vmem:[#allocation8 + $0x14c] sm:$0xf]
    %v2146 = vld [vmem:[#allocation8 + $0x150] sm:$0xf]
    %v2147 = vld [vmem:[#allocation8 + $0x154] sm:$0xf]
    %v2148 = vld [vmem:[#allocation8 + $0x158] sm:$0xf]
    %v2149 = vld [vmem:[#allocation8 + $0x15c] sm:$0xf]
    %v2150 = vld [vmem:[#allocation8 + $0x160] sm:$0xf]
    %v2151 = vld [vmem:[#allocation8 + $0x164] sm:$0xf]
    %v2152 = vld [vmem:[#allocation8 + $0x168] sm:$0xf]
    %v2153 = vld [vmem:[#allocation8 + $0x16c] sm:$0xf]
    %v2154 = vld [vmem:[#allocation8 + $0x170] sm:$0xf]
    %v2155 = vld [vmem:[#allocation8 + $0x174] sm:$0xf]
    %v2156 = vld [vmem:[#allocation8 + $0x178] sm:$0xf]
    %v2157 = vld [vmem:[#allocation8 + $0x17c] sm:$0xf]
    %v2158 = vld [vmem:[#allocation8 + $0x180] sm:$0xf]
    %v2159 = vld [vmem:[#allocation8 + $0x184] sm:$0xf]
    %v2160 = vld [vmem:[#allocation8 + $0x188] sm:$0xf]
    %v2161 = vld [vmem:[#allocation8 + $0x18c] sm:$0xf]
    %v2162 = vld [vmem:[#allocation8 + $0x190] sm:$0xf]
    %v2163 = vld [vmem:[#allocation8 + $0x194] sm:$0xf]
    %v2164 = vld [vmem:[#allocation8 + $0x198] sm:$0xf]
    %v2165 = vld [vmem:[#allocation8 + $0x19c] sm:$0xf]
    %v2166 = vld [vmem:[#allocation8 + $0x1a0] sm:$0xf]
    %v2167 = vld [vmem:[#allocation8 + $0x1a4] sm:$0xf]
    %v2168 = vld [vmem:[#allocation8 + $0x1a8] sm:$0xf]
    %v2169 = vld [vmem:[#allocation8 + $0x1ac] sm:$0xf]
    %v2170 = vld [vmem:[#allocation8 + $0x1b0] sm:$0xf]
    %v2171 = vld [vmem:[#allocation8 + $0x1b4] sm:$0xf]
    %v2172 = vld [vmem:[#allocation8 + $0x1b8] sm:$0xf]
    %v2173 = vld [vmem:[#allocation8 + $0x1bc] sm:$0xf]
    %v2174 = vld [vmem:[#allocation8 + $0x1c0] sm:$0xf]
    %v2175 = vld [vmem:[#allocation8 + $0x1c4] sm:$0xf]
    %v2176 = vld [vmem:[#allocation8 + $0x1c8] sm:$0xf]
    %v2177 = vld [vmem:[#allocation8 + $0x1cc] sm:$0xf]
    %v2178 = vld [vmem:[#allocation8 + $0x1d0] sm:$0xf]
    %v2179 = vld [vmem:[#allocation8 + $0x1d4] sm:$0xf]
    %v2180 = vld [vmem:[#allocation8 + $0x1d8] sm:$0xf]
    %v2181 = vld [vmem:[#allocation8 + $0x1dc] sm:$0xf]
    %v2182 = vld [vmem:[#allocation8 + $0x1e0] sm:$0xf]
    %v2183 = vld [vmem:[#allocation8 + $0x1e4] sm:$0xf]
    %v2184 = vld [vmem:[#allocation8 + $0x1e8] sm:$0xf]
    %v2185 = vld [vmem:[#allocation8 + $0x1ec] sm:$0xf]
    %v2186 = vld [vmem:[#allocation8 + $0x1f0] sm:$0xf]
    %v2187 = vld [vmem:[#allocation8 + $0x1f4] sm:$0xf]
    %v2188 = vld [vmem:[#allocation8 + $0x1f8] sm:$0xf]
    %v2189 = vld [vmem:[#allocation8 + $0x1fc] sm:$0xf]
    %v2190 = vld [vmem:[#allocation8 + $0x200] sm:$0xf]
    %v2191 = vld [vmem:[#allocation8 + $0x204] sm:$0xf]
    %v2192 = vld [vmem:[#allocation8 + $0x208] sm:$0xf]
    %v2193 = vld [vmem:[#allocation8 + $0x20c] sm:$0xf]
    %v2194 = vld [vmem:[#allocation8 + $0x210] sm:$0xf]
    %v2195 = vld [vmem:[#allocation8 + $0x214] sm:$0xf]
    %v2196 = vld [vmem:[#allocation8 + $0x218] sm:$0xf]
    %v2197 = vld [vmem:[#allocation8 + $0x21c] sm:$0xf]
    %v2198 = vld [vmem:[#allocation8 + $0x220] sm:$0xf]
    %v2199 = vld [vmem:[#allocation8 + $0x224] sm:$0xf]
    %v2200 = vld [vmem:[#allocation8 + $0x228] sm:$0xf]
    %v2201 = vld [vmem:[#allocation8 + $0x22c] sm:$0xf]
    %v2202 = vld [vmem:[#allocation8 + $0x230] sm:$0xf]
    %v2203 = vld [vmem:[#allocation8 + $0x234] sm:$0xf]
    %v2204 = vld [vmem:[#allocation8 + $0x238] sm:$0xf]
    %v2205 = vld [vmem:[#allocation8 + $0x23c] sm:$0xf]
    %v2206 = vld [vmem:[#allocation8 + $0x240] sm:$0xf]
    %v2207 = vld [vmem:[#allocation8 + $0x244] sm:$0xf]
    %v2208 = vld [vmem:[#allocation8 + $0x248] sm:$0xf]
    %v2209 = vld [vmem:[#allocation8 + $0x24c] sm:$0xf]
    %v2210 = vld [vmem:[#allocation8 + $0x250] sm:$0xf]
    %v2211 = vld [vmem:[#allocation8 + $0x254] sm:$0xf]
    %v2212 = vld [vmem:[#allocation8 + $0x258] sm:$0xf]
    %v2213 = vld [vmem:[#allocation8 + $0x25c] sm:$0xf]
    %v2214 = vld [vmem:[#allocation8 + $0x260] sm:$0xf]
    %v2215 = vld [vmem:[#allocation8 + $0x264] sm:$0xf]
    %v2216 = vld [vmem:[#allocation8 + $0x268] sm:$0xf]
    %v2217 = vld [vmem:[#allocation8 + $0x26c] sm:$0xf]
    %v2218 = vld [vmem:[#allocation8 + $0x270] sm:$0xf]
    %v2219 = vld [vmem:[#allocation8 + $0x274] sm:$0xf]
    %v2220 = vld [vmem:[#allocation8 + $0x278] sm:$0xf]
    %v2221 = vld [vmem:[#allocation8 + $0x27c] sm:$0xf]
    %v2222 = vld [vmem:[#allocation8 + $0x280] sm:$0xf]
    %v2223 = vld [vmem:[#allocation8 + $0x284] sm:$0xf]
    %v2224 = vld [vmem:[#allocation8 + $0x288] sm:$0xf]
    %v2225 = vld [vmem:[#allocation8 + $0x28c] sm:$0xf]
    %v2226 = vld [vmem:[#allocation8 + $0x290] sm:$0xf]
    %v2227 = vld [vmem:[#allocation8 + $0x294] sm:$0xf]
    %v2228 = vld [vmem:[#allocation8 + $0x298] sm:$0xf]
    %v2229 = vld [vmem:[#allocation8 + $0x29c] sm:$0xf]
    %v2230 = vld [vmem:[#allocation8 + $0x2a0] sm:$0xf]
    %v2231 = vld [vmem:[#allocation8 + $0x2a4] sm:$0xf]
    %v2232 = vld [vmem:[#allocation8 + $0x2a8] sm:$0xf]
    %v2233 = vld [vmem:[#allocation8 + $0x2ac] sm:$0xf]
    %v2234 = vld [vmem:[#allocation8 + $0x2b0] sm:$0xf]
    %v2235 = vld [vmem:[#allocation8 + $0x2b4] sm:$0xf]
    %v2236 = vld [vmem:[#allocation8 + $0x2b8] sm:$0xf]
    %v2237 = vld [vmem:[#allocation8 + $0x2bc] sm:$0xf]
    %v2238 = vld [vmem:[#allocation8 + $0x2c0] sm:$0xf]
    %v2239 = vld [vmem:[#allocation8 + $0x2c4] sm:$0xf]
    %v2240 = vld [vmem:[#allocation8 + $0x2c8] sm:$0xf]
    %v2241 = vld [vmem:[#allocation8 + $0x2cc] sm:$0xf]
    %v2242 = vld [vmem:[#allocation8 + $0x2d0] sm:$0xf]
    %v2243 = vld [vmem:[#allocation8 + $0x2d4] sm:$0xf]
    %v2244 = vld [vmem:[#allocation8 + $0x2d8] sm:$0xf]
    %v2245 = vld [vmem:[#allocation8 + $0x2dc] sm:$0xf]
    %v2246 = vld [vmem:[#allocation8 + $0x2e0] sm:$0xf]
    %v2247 = vld [vmem:[#allocation8 + $0x2e4] sm:$0xf]
    %v2248 = vld [vmem:[#allocation8 + $0x2e8] sm:$0xf]
    %v2249 = vld [vmem:[#allocation8 + $0x2ec] sm:$0xf]
    %v2250 = vld [vmem:[#allocation8 + $0x2f0] sm:$0xf]
    %v2251 = vld [vmem:[#allocation8 + $0x2f4] sm:$0xf]
    %v2252 = vld [vmem:[#allocation8 + $0x2f8] sm:$0xf]
    %v2253 = vld [vmem:[#allocation8 + $0x2fc] sm:$0xf]
    %v2254 = vld [vmem:[#allocation8 + $0x300] sm:$0xf]
    %v2255 = vld [vmem:[#allocation8 + $0x304] sm:$0xf]
    %v2256 = vld [vmem:[#allocation8 + $0x308] sm:$0xf]
    %v2257 = vld [vmem:[#allocation8 + $0x30c] sm:$0xf]
    %v2258 = vld [vmem:[#allocation8 + $0x310] sm:$0xf]
    %v2259 = vld [vmem:[#allocation8 + $0x314] sm:$0xf]
    %v2260 = vld [vmem:[#allocation8 + $0x318] sm:$0xf]
    %v2261 = vld [vmem:[#allocation8 + $0x31c] sm:$0xf]
    %v2262 = vld [vmem:[#allocation8 + $0x320] sm:$0xf]
    %v2263 = vld [vmem:[#allocation8 + $0x324] sm:$0xf]
    %v2264 = vld [vmem:[#allocation8 + $0x328] sm:$0xf]
    %v2265 = vld [vmem:[#allocation8 + $0x32c] sm:$0xf]
    %v2266 = vld [vmem:[#allocation8 + $0x330] sm:$0xf]
    %v2267 = vld [vmem:[#allocation8 + $0x334] sm:$0xf]
    %v2268 = vld [vmem:[#allocation8 + $0x338] sm:$0xf]
    %v2269 = vld [vmem:[#allocation8 + $0x33c] sm:$0xf]
    %v2270 = vld [vmem:[#allocation8 + $0x340] sm:$0xf]
    %v2271 = vld [vmem:[#allocation8 + $0x344] sm:$0xf]
    %v2272 = vld [vmem:[#allocation8 + $0x348] sm:$0xf]
    %v2273 = vld [vmem:[#allocation8 + $0x34c] sm:$0xf]
    %v2274 = vld [vmem:[#allocation8 + $0x350] sm:$0xf]
    %v2275 = vld [vmem:[#allocation8 + $0x354] sm:$0xf]
    %v2276 = vld [vmem:[#allocation8 + $0x358] sm:$0xf]
    %v2277 = vld [vmem:[#allocation8 + $0x35c] sm:$0xf]
    %v2278 = vld [vmem:[#allocation8 + $0x360] sm:$0xf]
    %v2279 = vld [vmem:[#allocation8 + $0x364] sm:$0xf]
    %v2280 = vld [vmem:[#allocation8 + $0x368] sm:$0xf]
    %v2281 = vld [vmem:[#allocation8 + $0x36c] sm:$0xf]
    %v2282 = vld [vmem:[#allocation8 + $0x370] sm:$0xf]
    %v2283 = vld [vmem:[#allocation8 + $0x374] sm:$0xf]
    %v2284 = vld [vmem:[#allocation8 + $0x378] sm:$0xf]
    %v2285 = vld [vmem:[#allocation8 + $0x37c] sm:$0xf]
    %v2286 = vld [vmem:[#allocation8 + $0x380] sm:$0xf]
    %v2287 = vld [vmem:[#allocation8 + $0x384] sm:$0xf]
    %v2288 = vld [vmem:[#allocation8 + $0x388] sm:$0xf]
    %v2289 = vld [vmem:[#allocation8 + $0x38c] sm:$0xf]
    %v2290 = vld [vmem:[#allocation8 + $0x390] sm:$0xf]
    %v2291 = vld [vmem:[#allocation8 + $0x394] sm:$0xf]
    %v2292 = vld [vmem:[#allocation8 + $0x398] sm:$0xf]
    %v2293 = vld [vmem:[#allocation8 + $0x39c] sm:$0xf]
    %v2294 = vld [vmem:[#allocation8 + $0x3a0] sm:$0xf]
    %v2295 = vld [vmem:[#allocation8 + $0x3a4] sm:$0xf]
    %v2296 = vld [vmem:[#allocation8 + $0x3a8] sm:$0xf]
    %v2297 = vld [vmem:[#allocation8 + $0x3ac] sm:$0xf]
    %v2298 = vld [vmem:[#allocation8 + $0x3b0] sm:$0xf]
    %v2299 = vld [vmem:[#allocation8 + $0x3b4] sm:$0xf]
    %v2300 = vld [vmem:[#allocation8 + $0x3b8] sm:$0xf]
    %v2301 = vld [vmem:[#allocation8 + $0x3bc] sm:$0xf]
    %v2302 = vld [vmem:[#allocation8 + $0x3c0] sm:$0xf]
    %v2303 = vld [vmem:[#allocation8 + $0x3c4] sm:$0xf]
    %v2304 = vld [vmem:[#allocation8 + $0x3c8] sm:$0xf]
    %v2305 = vld [vmem:[#allocation8 + $0x3cc] sm:$0xf]
    %v2306 = vld [vmem:[#allocation8 + $0x3d0] sm:$0xf]
    %v2307 = vld [vmem:[#allocation8 + $0x3d4] sm:$0xf]
    %v2308 = vld [vmem:[#allocation8 + $0x3d8] sm:$0xf]
    %v2309 = vld [vmem:[#allocation8 + $0x3dc] sm:$0xf]
    %v2310 = vld [vmem:[#allocation8 + $0x3e0] sm:$0xf]
    %v2311 = vld [vmem:[#allocation8 + $0x3e4] sm:$0xf]
    %v2312 = vld [vmem:[#allocation8 + $0x3e8] sm:$0xf]
    %v2313 = vld [vmem:[#allocation8 + $0x3ec] sm:$0xf]
    %v2314 = vld [vmem:[#allocation8 + $0x3f0] sm:$0xf]
    %v2315 = vld [vmem:[#allocation8 + $0x3f4] sm:$0xf]
    %v2316 = vld [vmem:[#allocation8 + $0x3f8] sm:$0xf]
    %v2317 = vld [vmem:[#allocation8 + $0x3fc] sm:$0xf]
    %v2318 = vld [vmem:[#allocation8 + $0x400] sm:$0xf]
    %v2319 = vld [vmem:[#allocation8 + $0x404] sm:$0xf]
    %v2320 = vld [vmem:[#allocation8 + $0x408] sm:$0xf]
    %v2321 = vld [vmem:[#allocation8 + $0x40c] sm:$0xf]
    %v2322 = vld [vmem:[#allocation8 + $0x410] sm:$0xf]
    %v2323 = vld [vmem:[#allocation8 + $0x414] sm:$0xf]
    %v2324 = vld [vmem:[#allocation8 + $0x418] sm:$0xf]
    %v2325 = vld [vmem:[#allocation8 + $0x41c] sm:$0xf]
    %v2326 = vld [vmem:[#allocation8 + $0x420] sm:$0xf]
    %v2327 = vld [vmem:[#allocation8 + $0x424] sm:$0xf]
    %v2328 = vld [vmem:[#allocation8 + $0x428] sm:$0xf]
    %v2329 = vld [vmem:[#allocation8 + $0x42c] sm:$0xf]
    %v2330 = vld [vmem:[#allocation8 + $0x430] sm:$0xf]
    %v2331 = vld [vmem:[#allocation8 + $0x434] sm:$0xf]
    %v2332 = vld [vmem:[#allocation8 + $0x438] sm:$0xf]
    %v2333 = vld [vmem:[#allocation8 + $0x43c] sm:$0xf]
    %v2334 = vld [vmem:[#allocation8 + $0x440] sm:$0xf]
    %v2335 = vld [vmem:[#allocation8 + $0x444] sm:$0xf]
    %v2336 = vld [vmem:[#allocation8 + $0x448] sm:$0xf]
    %v2337 = vld [vmem:[#allocation8 + $0x44c] sm:$0xf]
    %v2338 = vld [vmem:[#allocation8 + $0x450] sm:$0xf]
    %v2339 = vld [vmem:[#allocation8 + $0x454] sm:$0xf]
    %v2340 = vld [vmem:[#allocation8 + $0x458] sm:$0xf]
    %v2341 = vld [vmem:[#allocation8 + $0x45c] sm:$0xf]
    %v2342 = vld [vmem:[#allocation8 + $0x460] sm:$0xf]
    %v2343 = vld [vmem:[#allocation8 + $0x464] sm:$0xf]
    %v2344 = vld [vmem:[#allocation8 + $0x468] sm:$0xf]
    %v2345 = vld [vmem:[#allocation8 + $0x46c] sm:$0xf]
    %v2346 = vld [vmem:[#allocation8 + $0x470] sm:$0xf]
    %v2347 = vld [vmem:[#allocation8 + $0x474] sm:$0xf]
    %v2348 = vld [vmem:[#allocation8 + $0x478] sm:$0xf]
    %v2349 = vld [vmem:[#allocation8 + $0x47c] sm:$0xf]
    %v2350 = vld [vmem:[#allocation8 + $0x480] sm:$0xf]
    %v2351 = vld [vmem:[#allocation8 + $0x484] sm:$0xf]
    %v2352 = vld [vmem:[#allocation8 + $0x488] sm:$0xf]
    %v2353 = vld [vmem:[#allocation8 + $0x48c] sm:$0xf]
    %v2354 = vld [vmem:[#allocation8 + $0x490] sm:$0xf]
    %v2355 = vld [vmem:[#allocation8 + $0x494] sm:$0xf]
    %v2356 = vld [vmem:[#allocation8 + $0x498] sm:$0xf]
    %v2357 = vld [vmem:[#allocation8 + $0x49c] sm:$0xf]
    %v2358 = vld [vmem:[#allocation8 + $0x4a0] sm:$0xf]
    %v2359 = vld [vmem:[#allocation8 + $0x4a4] sm:$0xf]
    %v2360 = vld [vmem:[#allocation8 + $0x4a8] sm:$0xf]
    %v2361 = vld [vmem:[#allocation8 + $0x4ac] sm:$0xf]
    %v2362 = vld [vmem:[#allocation8 + $0x4b0] sm:$0xf]
    %v2363 = vld [vmem:[#allocation8 + $0x4b4] sm:$0xf]
    %v2364 = vld [vmem:[#allocation8 + $0x4b8] sm:$0xf]
    %v2365 = vld [vmem:[#allocation8 + $0x4bc] sm:$0xf]
    %v2366 = vld [vmem:[#allocation8 + $0x4c0] sm:$0xf]
    %v2367 = vld [vmem:[#allocation8 + $0x4c4] sm:$0xf]
    %v2368 = vld [vmem:[#allocation8 + $0x4c8] sm:$0xf]
    %v2369 = vld [vmem:[#allocation8 + $0x4cc] sm:$0xf]
    %v2370 = vld [vmem:[#allocation8 + $0x4d0] sm:$0xf]
    %v2371 = vld [vmem:[#allocation8 + $0x4d4] sm:$0xf]
    %v2372 = vld [vmem:[#allocation8 + $0x4d8] sm:$0xf]
    %v2373 = vld [vmem:[#allocation8 + $0x4dc] sm:$0xf]
    %v2374 = vld [vmem:[#allocation8 + $0x4e0] sm:$0xf]
    %v2375 = vld [vmem:[#allocation8 + $0x4e4] sm:$0xf]
    %v2376 = vld [vmem:[#allocation8 + $0x4e8] sm:$0xf]
    %v2377 = vld [vmem:[#allocation8 + $0x4ec] sm:$0xf]
    %v2378 = vld [vmem:[#allocation8 + $0x4f0] sm:$0xf]
    %v2379 = vld [vmem:[#allocation8 + $0x4f4] sm:$0xf]
    %v2380 = vld [vmem:[#allocation8 + $0x4f8] sm:$0xf]
    %v2381 = vld [vmem:[#allocation8 + $0x4fc] sm:$0xf]
    %v2382 = vld [vmem:[#allocation8 + $0x500] sm:$0xf]
    %v2383 = vld [vmem:[#allocation8 + $0x504] sm:$0xf]
    %v2384 = vld [vmem:[#allocation8 + $0x508] sm:$0xf]
    %v2385 = vld [vmem:[#allocation8 + $0x50c] sm:$0xf]
    %v2386 = vld [vmem:[#allocation8 + $0x510] sm:$0xf]
    %v2387 = vld [vmem:[#allocation8 + $0x514] sm:$0xf]
    %v2388 = vld [vmem:[#allocation8 + $0x518] sm:$0xf]
    %v2389 = vld [vmem:[#allocation8 + $0x51c] sm:$0xf]
    %v2390 = vld [vmem:[#allocation8 + $0x520] sm:$0xf]
    %v2391 = vld [vmem:[#allocation8 + $0x524] sm:$0xf]
    %v2392 = vld [vmem:[#allocation8 + $0x528] sm:$0xf]
    %v2393 = vld [vmem:[#allocation8 + $0x52c] sm:$0xf]
    %v2394 = vld [vmem:[#allocation8 + $0x530] sm:$0xf]
    %v2395 = vld [vmem:[#allocation8 + $0x534] sm:$0xf]
    %v2396 = vld [vmem:[#allocation8 + $0x538] sm:$0xf]
    %v2397 = vld [vmem:[#allocation8 + $0x53c] sm:$0xf]
    %v2398 = vld [vmem:[#allocation8 + $0x540] sm:$0xf]
    %v2399 = vld [vmem:[#allocation8 + $0x544] sm:$0xf]
    %v2400 = vld [vmem:[#allocation8 + $0x548] sm:$0xf]
    %v2401 = vld [vmem:[#allocation8 + $0x54c] sm:$0xf]
    %v2402 = vld [vmem:[#allocation8 + $0x550] sm:$0xf]
    %v2403 = vld [vmem:[#allocation8 + $0x554] sm:$0xf]
    %v2404 = vld [vmem:[#allocation8 + $0x558] sm:$0xf]
    %v2405 = vld [vmem:[#allocation8 + $0x55c] sm:$0xf]
    %v2406 = vld [vmem:[#allocation8 + $0x560] sm:$0xf]
    %v2407 = vld [vmem:[#allocation8 + $0x564] sm:$0xf]
    %v2408 = vld [vmem:[#allocation8 + $0x568] sm:$0xf]
    %v2409 = vld [vmem:[#allocation8 + $0x56c] sm:$0xf]
    %v2410 = vld [vmem:[#allocation8 + $0x570] sm:$0xf]
    %v2411 = vld [vmem:[#allocation8 + $0x574] sm:$0xf]
    %v2412 = vld [vmem:[#allocation8 + $0x578] sm:$0xf]
    %v2413 = vld [vmem:[#allocation8 + $0x57c] sm:$0xf]
    %v2414 = vld [vmem:[#allocation8 + $0x580] sm:$0xf]
    %v2415 = vld [vmem:[#allocation8 + $0x584] sm:$0xf]
    %v2416 = vld [vmem:[#allocation8 + $0x588] sm:$0xf]
    %v2417 = vld [vmem:[#allocation8 + $0x58c] sm:$0xf]
    %v2418 = vld [vmem:[#allocation8 + $0x590] sm:$0xf]
    %v2419 = vld [vmem:[#allocation8 + $0x594] sm:$0xf]
    %v2420 = vld [vmem:[#allocation8 + $0x598] sm:$0xf]
    %v2421 = vld [vmem:[#allocation8 + $0x59c] sm:$0xf]
    %v2422 = vld [vmem:[#allocation8 + $0x5a0] sm:$0xf]
    %v2423 = vld [vmem:[#allocation8 + $0x5a4] sm:$0xf]
    %v2424 = vld [vmem:[#allocation8 + $0x5a8] sm:$0xf]
    %v2425 = vld [vmem:[#allocation8 + $0x5ac] sm:$0xf]
    %v2426 = vld [vmem:[#allocation8 + $0x5b0] sm:$0xf]
    %v2427 = vld [vmem:[#allocation8 + $0x5b4] sm:$0xf]
    %v2428 = vld [vmem:[#allocation8 + $0x5b8] sm:$0xf]
    %v2429 = vld [vmem:[#allocation8 + $0x5bc] sm:$0xf]
    %v2430 = vld [vmem:[#allocation8 + $0x5c0] sm:$0xf]
    %v2431 = vld [vmem:[#allocation8 + $0x5c4] sm:$0xf]
    %v2432 = vld [vmem:[#allocation8 + $0x5c8] sm:$0xf]
    %v2433 = vld [vmem:[#allocation8 + $0x5cc] sm:$0xf]
    %v2434 = vld [vmem:[#allocation8 + $0x5d0] sm:$0xf]
    %v2435 = vld [vmem:[#allocation8 + $0x5d4] sm:$0xf]
    %v2436 = vld [vmem:[#allocation8 + $0x5d8] sm:$0xf]
    %v2437 = vld [vmem:[#allocation8 + $0x5dc] sm:$0xf]
    %v2438 = vld [vmem:[#allocation8 + $0x5e0] sm:$0xf]
    %v2439 = vld [vmem:[#allocation8 + $0x5e4] sm:$0xf]
    %v2440 = vld [vmem:[#allocation8 + $0x5e8] sm:$0xf]
    %v2441 = vld [vmem:[#allocation8 + $0x5ec] sm:$0xf]
    %v2442 = vld [vmem:[#allocation8 + $0x5f0] sm:$0xf]
    %v2443 = vld [vmem:[#allocation8 + $0x5f4] sm:$0xf]
    %v2444 = vld [vmem:[#allocation8 + $0x5f8] sm:$0xf]
    %v2445 = vld [vmem:[#allocation8 + $0x5fc] sm:$0xf]
    %v2446 = vld [vmem:[#allocation8 + $0x600] sm:$0xf]
    %v2447 = vld [vmem:[#allocation8 + $0x604] sm:$0xf]
    %v2448 = vld [vmem:[#allocation8 + $0x608] sm:$0xf]
    %v2449 = vld [vmem:[#allocation8 + $0x60c] sm:$0xf]
    %v2450 = vld [vmem:[#allocation8 + $0x610] sm:$0xf]
    %v2451 = vld [vmem:[#allocation8 + $0x614] sm:$0xf]
    %v2452 = vld [vmem:[#allocation8 + $0x618] sm:$0xf]
    %v2453 = vld [vmem:[#allocation8 + $0x61c] sm:$0xf]
    %v2454 = vld [vmem:[#allocation8 + $0x620] sm:$0xf]
    %v2455 = vld [vmem:[#allocation8 + $0x624] sm:$0xf]
    %v2456 = vld [vmem:[#allocation8 + $0x628] sm:$0xf]
    %v2457 = vld [vmem:[#allocation8 + $0x62c] sm:$0xf]
    %v2458 = vld [vmem:[#allocation8 + $0x630] sm:$0xf]
    %v2459 = vld [vmem:[#allocation8 + $0x634] sm:$0xf]
    %v2460 = vld [vmem:[#allocation8 + $0x638] sm:$0xf]
    %v2461 = vld [vmem:[#allocation8 + $0x63c] sm:$0xf]
    %v2462 = vld [vmem:[#allocation8 + $0x640] sm:$0xf]
    %v2463 = vld [vmem:[#allocation8 + $0x644] sm:$0xf]
    %v2464 = vld [vmem:[#allocation8 + $0x648] sm:$0xf]
    %v2465 = vld [vmem:[#allocation8 + $0x64c] sm:$0xf]
    %v2466 = vld [vmem:[#allocation8 + $0x650] sm:$0xf]
    %v2467 = vld [vmem:[#allocation8 + $0x654] sm:$0xf]
    %v2468 = vld [vmem:[#allocation8 + $0x658] sm:$0xf]
    %v2469 = vld [vmem:[#allocation8 + $0x65c] sm:$0xf]
    %v2470 = vld [vmem:[#allocation8 + $0x660] sm:$0xf]
    %v2471 = vld [vmem:[#allocation8 + $0x664] sm:$0xf]
    %v2472 = vld [vmem:[#allocation8 + $0x668] sm:$0xf]
    %v2473 = vld [vmem:[#allocation8 + $0x66c] sm:$0xf]
    %v2474 = vld [vmem:[#allocation8 + $0x670] sm:$0xf]
    %v2475 = vld [vmem:[#allocation8 + $0x674] sm:$0xf]
    %v2476 = vld [vmem:[#allocation8 + $0x678] sm:$0xf]
    %v2477 = vld [vmem:[#allocation8 + $0x67c] sm:$0xf]
    %v2478 = vld [vmem:[#allocation8 + $0x680] sm:$0xf]
    %v2479 = vld [vmem:[#allocation8 + $0x684] sm:$0xf]
    %v2480 = vld [vmem:[#allocation8 + $0x688] sm:$0xf]
    %v2481 = vld [vmem:[#allocation8 + $0x68c] sm:$0xf]
    %v2482 = vld [vmem:[#allocation8 + $0x690] sm:$0xf]
    %v2483 = vld [vmem:[#allocation8 + $0x694] sm:$0xf]
    %v2484 = vld [vmem:[#allocation8 + $0x698] sm:$0xf]
    %v2485 = vld [vmem:[#allocation8 + $0x69c] sm:$0xf]
    %v2486 = vld [vmem:[#allocation8 + $0x6a0] sm:$0xf]
    %v2487 = vld [vmem:[#allocation8 + $0x6a4] sm:$0xf]
    %v2488 = vld [vmem:[#allocation8 + $0x6a8] sm:$0xf]
    %v2489 = vld [vmem:[#allocation8 + $0x6ac] sm:$0xf]
    %v2490 = vld [vmem:[#allocation8 + $0x6b0] sm:$0xf]
    %v2491 = vld [vmem:[#allocation8 + $0x6b4] sm:$0xf]
    %v2492 = vld [vmem:[#allocation8 + $0x6b8] sm:$0xf]
    %v2493 = vld [vmem:[#allocation8 + $0x6bc] sm:$0xf]
    %v2494 = vld [vmem:[#allocation8 + $0x6c0] sm:$0xf]
    %v2495 = vld [vmem:[#allocation8 + $0x6c4] sm:$0xf]
    %v2496 = vld [vmem:[#allocation8 + $0x6c8] sm:$0xf]
    %v2497 = vld [vmem:[#allocation8 + $0x6cc] sm:$0xf]
    %v2498 = vld [vmem:[#allocation8 + $0x6d0] sm:$0xf]
    %v2499 = vld [vmem:[#allocation8 + $0x6d4] sm:$0xf]
    %v2500 = vld [vmem:[#allocation8 + $0x6d8] sm:$0xf]
    %v2501 = vld [vmem:[#allocation8 + $0x6dc] sm:$0xf]
    %v2502 = vld [vmem:[#allocation8 + $0x6e0] sm:$0xf]
    %v2503 = vld [vmem:[#allocation8 + $0x6e4] sm:$0xf]
    %v2504 = vld [vmem:[#allocation8 + $0x6e8] sm:$0xf]
    %v2505 = vld [vmem:[#allocation8 + $0x6ec] sm:$0xf]
    %v2506 = vld [vmem:[#allocation8 + $0x6f0] sm:$0xf]
    %v2507 = vld [vmem:[#allocation8 + $0x6f4] sm:$0xf]
    %v2508 = vld [vmem:[#allocation8 + $0x6f8] sm:$0xf]
    %v2509 = vld [vmem:[#allocation8 + $0x6fc] sm:$0xf]
    %v2510 = vld [vmem:[#allocation8 + $0x700] sm:$0xf]
    %v2511 = vld [vmem:[#allocation8 + $0x704] sm:$0xf]
    %v2512 = vld [vmem:[#allocation8 + $0x708] sm:$0xf]
    %v2513 = vld [vmem:[#allocation8 + $0x70c] sm:$0xf]
    %v2514 = vld [vmem:[#allocation8 + $0x710] sm:$0xf]
    %v2515 = vld [vmem:[#allocation8 + $0x714] sm:$0xf]
    %v2516 = vld [vmem:[#allocation8 + $0x718] sm:$0xf]
    %v2517 = vld [vmem:[#allocation8 + $0x71c] sm:$0xf]
    %v2518 = vld [vmem:[#allocation8 + $0x720] sm:$0xf]
    %v2519 = vld [vmem:[#allocation8 + $0x724] sm:$0xf]
    %v2520 = vld [vmem:[#allocation8 + $0x728] sm:$0xf]
    %v2521 = vld [vmem:[#allocation8 + $0x72c] sm:$0xf]
    %v2522 = vld [vmem:[#allocation8 + $0x730] sm:$0xf]
    %v2523 = vld [vmem:[#allocation8 + $0x734] sm:$0xf]
    %v2524 = vld [vmem:[#allocation8 + $0x738] sm:$0xf]
    %v2525 = vld [vmem:[#allocation8 + $0x73c] sm:$0xf]
    %v2526 = vld [vmem:[#allocation8 + $0x740] sm:$0xf]
    %v2527 = vld [vmem:[#allocation8 + $0x744] sm:$0xf]
    %v2528 = vld [vmem:[#allocation8 + $0x748] sm:$0xf]
    %v2529 = vld [vmem:[#allocation8 + $0x74c] sm:$0xf]
    %v2530 = vld [vmem:[#allocation8 + $0x750] sm:$0xf]
    %v2531 = vld [vmem:[#allocation8 + $0x754] sm:$0xf]
    %v2532 = vld [vmem:[#allocation8 + $0x758] sm:$0xf]
    %v2533 = vld [vmem:[#allocation8 + $0x75c] sm:$0xf]
    %v2534 = vld [vmem:[#allocation8 + $0x760] sm:$0xf]
    %v2535 = vld [vmem:[#allocation8 + $0x764] sm:$0xf]
    %v2536 = vld [vmem:[#allocation8 + $0x768] sm:$0xf]
    %v2537 = vld [vmem:[#allocation8 + $0x76c] sm:$0xf]
    %v2538 = vld [vmem:[#allocation8 + $0x770] sm:$0xf]
    %v2539 = vld [vmem:[#allocation8 + $0x774] sm:$0xf]
    %v2540 = vld [vmem:[#allocation8 + $0x778] sm:$0xf]
    %v2541 = vld [vmem:[#allocation8 + $0x77c] sm:$0xf]
    %v2542 = vld [vmem:[#allocation8 + $0x780] sm:$0xf]
    %v2543 = vld [vmem:[#allocation8 + $0x784] sm:$0xf]
    %v2544 = vld [vmem:[#allocation8 + $0x788] sm:$0xf]
    %v2545 = vld [vmem:[#allocation8 + $0x78c] sm:$0xf]
    %v2546 = vld [vmem:[#allocation8 + $0x790] sm:$0xf]
    %v2547 = vld [vmem:[#allocation8 + $0x794] sm:$0xf]
    %v2548 = vld [vmem:[#allocation8 + $0x798] sm:$0xf]
    %v2549 = vld [vmem:[#allocation8 + $0x79c] sm:$0xf]
    %v2550 = vld [vmem:[#allocation8 + $0x7a0] sm:$0xf]
    %v2551 = vld [vmem:[#allocation8 + $0x7a4] sm:$0xf]
    %v2552 = vld [vmem:[#allocation8 + $0x7a8] sm:$0xf]
    %v2553 = vld [vmem:[#allocation8 + $0x7ac] sm:$0xf]
    %v2554 = vld [vmem:[#allocation8 + $0x7b0] sm:$0xf]
    %v2555 = vld [vmem:[#allocation8 + $0x7b4] sm:$0xf]
    %v2556 = vld [vmem:[#allocation8 + $0x7b8] sm:$0xf]
    %v2557 = vld [vmem:[#allocation8 + $0x7bc] sm:$0xf]
    %v2558 = vld [vmem:[#allocation8 + $0x7c0] sm:$0xf]
    %v2559 = vld [vmem:[#allocation8 + $0x7c4] sm:$0xf]
    %v2560 = vld [vmem:[#allocation8 + $0x7c8] sm:$0xf]
    %v2561 = vld [vmem:[#allocation8 + $0x7cc] sm:$0xf]
    %v2562 = vld [vmem:[#allocation8 + $0x7d0] sm:$0xf]
    %v2563 = vld [vmem:[#allocation8 + $0x7d4] sm:$0xf]
    %v2564 = vld [vmem:[#allocation8 + $0x7d8] sm:$0xf]
    %v2565 = vld [vmem:[#allocation8 + $0x7dc] sm:$0xf]
    %v2566 = vld [vmem:[#allocation8 + $0x7e0] sm:$0xf]
    %v2567 = vld [vmem:[#allocation8 + $0x7e4] sm:$0xf]
    %v2568 = vld [vmem:[#allocation8 + $0x7e8] sm:$0xf]
    %v2569 = vld [vmem:[#allocation8 + $0x7ec] sm:$0xf]
    %v2570 = vld [vmem:[#allocation8 + $0x7f0] sm:$0xf]
    %v2571 = vld [vmem:[#allocation8 + $0x7f4] sm:$0xf]
    %v2572 = vld [vmem:[#allocation8 + $0x7f8] sm:$0xf]
    %v2573 = vld [vmem:[#allocation8 + $0x7fc] sm:$0xf]
    %v2574 = vld [vmem:[%s4] sm:$0x1]
    %v2576 = vlaneseq
    %v2577 = vshrl.u32 %v2576, 7
    %v2578 = vsub.s32 0, %v2577
    %v2579 = vrot.slane %v2574, %v2578
    %v3093 = vunpack.c.l.b16 %v2062
    %v3094 = vunpack.c.l.b16 %v2063
    %v3095 = vunpack.c.l.b16 %v2064
    %v3096 = vunpack.c.l.b16 %v2065
    %v3097 = vunpack.c.l.b16 %v2066
    %v3098 = vunpack.c.l.b16 %v2067
    %v3099 = vunpack.c.l.b16 %v2068
    %v3100 = vunpack.c.l.b16 %v2069
    %v3101 = vunpack.c.l.b16 %v2070
    %v3102 = vunpack.c.l.b16 %v2071
    %v3103 = vunpack.c.l.b16 %v2072
    %v3104 = vunpack.c.l.b16 %v2073
    %v3105 = vunpack.c.l.b16 %v2074
    %v3106 = vunpack.c.l.b16 %v2075
    %v3107 = vunpack.c.l.b16 %v2076
    %v3108 = vunpack.c.l.b16 %v2077
    %v3109 = vunpack.c.l.b16 %v2078
    %v3110 = vunpack.c.l.b16 %v2079
    %v3111 = vunpack.c.l.b16 %v2080
    %v3112 = vunpack.c.l.b16 %v2081
    %v3113 = vunpack.c.l.b16 %v2082
    %v3114 = vunpack.c.l.b16 %v2083
    %v3115 = vunpack.c.l.b16 %v2084
    %v3116 = vunpack.c.l.b16 %v2085
    %v3117 = vunpack.c.l.b16 %v2086
    %v3118 = vunpack.c.l.b16 %v2087
    %v3119 = vunpack.c.l.b16 %v2088
    %v3120 = vunpack.c.l.b16 %v2089
    %v3121 = vunpack.c.l.b16 %v2090
    %v3122 = vunpack.c.l.b16 %v2091
    %v3123 = vunpack.c.l.b16 %v2092
    %v3124 = vunpack.c.l.b16 %v2093
    %v3125 = vunpack.c.l.b16 %v2094
    %v3126 = vunpack.c.l.b16 %v2095
    %v3127 = vunpack.c.l.b16 %v2096
    %v3128 = vunpack.c.l.b16 %v2097
    %v3129 = vunpack.c.l.b16 %v2098
    %v3130 = vunpack.c.l.b16 %v2099
    %v3131 = vunpack.c.l.b16 %v2100
    %v3132 = vunpack.c.l.b16 %v2101
    %v3133 = vunpack.c.l.b16 %v2102
    %v3134 = vunpack.c.l.b16 %v2103
    %v3135 = vunpack.c.l.b16 %v2104
    %v3136 = vunpack.c.l.b16 %v2105
    %v3137 = vunpack.c.l.b16 %v2106
    %v3138 = vunpack.c.l.b16 %v2107
    %v3139 = vunpack.c.l.b16 %v2108
    %v3140 = vunpack.c.l.b16 %v2109
    %v3141 = vunpack.c.l.b16 %v2110
    %v3142 = vunpack.c.l.b16 %v2111
    %v3143 = vunpack.c.l.b16 %v2112
    %v3144 = vunpack.c.l.b16 %v2113
    %v3145 = vunpack.c.l.b16 %v2114
    %v3146 = vunpack.c.l.b16 %v2115
    %v3147 = vunpack.c.l.b16 %v2116
    %v3148 = vunpack.c.l.b16 %v2117
    %v3149 = vunpack.c.l.b16 %v2118
    %v3150 = vunpack.c.l.b16 %v2119
    %v3151 = vunpack.c.l.b16 %v2120
    %v3152 = vunpack.c.l.b16 %v2121
    %v3153 = vunpack.c.l.b16 %v2122
    %v3154 = vunpack.c.l.b16 %v2123
    %v3155 = vunpack.c.l.b16 %v2124
    %v3156 = vunpack.c.l.b16 %v2125
    %v3157 = vunpack.c.l.b16 %v2126
    %v3158 = vunpack.c.l.b16 %v2127
    %v3159 = vunpack.c.l.b16 %v2128
    %v3160 = vunpack.c.l.b16 %v2129
    %v3161 = vunpack.c.l.b16 %v2130
    %v3162 = vunpack.c.l.b16 %v2131
    %v3163 = vunpack.c.l.b16 %v2132
    %v3164 = vunpack.c.l.b16 %v2133
    %v3165 = vunpack.c.l.b16 %v2134
    %v3166 = vunpack.c.l.b16 %v2135
    %v3167 = vunpack.c.l.b16 %v2136
    %v3168 = vunpack.c.l.b16 %v2137
    %v3169 = vunpack.c.l.b16 %v2138
    %v3170 = vunpack.c.l.b16 %v2139
    %v3171 = vunpack.c.l.b16 %v2140
    %v3172 = vunpack.c.l.b16 %v2141
    %v3173 = vunpack.c.l.b16 %v2142
    %v3174 = vunpack.c.l.b16 %v2143
    %v3175 = vunpack.c.l.b16 %v2144
    %v3176 = vunpack.c.l.b16 %v2145
    %v3177 = vunpack.c.l.b16 %v2146
    %v3178 = vunpack.c.l.b16 %v2147
    %v3179 = vunpack.c.l.b16 %v2148
    %v3180 = vunpack.c.l.b16 %v2149
    %v3181 = vunpack.c.l.b16 %v2150
    %v3182 = vunpack.c.l.b16 %v2151
    %v3183 = vunpack.c.l.b16 %v2152
    %v3184 = vunpack.c.l.b16 %v2153
    %v3185 = vunpack.c.l.b16 %v2154
    %v3186 = vunpack.c.l.b16 %v2155
    %v3187 = vunpack.c.l.b16 %v2156
    %v3188 = vunpack.c.l.b16 %v2157
    %v3189 = vunpack.c.l.b16 %v2158
    %v3190 = vunpack.c.l.b16 %v2159
    %v3191 = vunpack.c.l.b16 %v2160
    %v3192 = vunpack.c.l.b16 %v2161
    %v3193 = vunpack.c.l.b16 %v2162
    %v3194 = vunpack.c.l.b16 %v2163
    %v3195 = vunpack.c.l.b16 %v2164
    %v3196 = vunpack.c.l.b16 %v2165
    %v3197 = vunpack.c.l.b16 %v2166
    %v3198 = vunpack.c.l.b16 %v2167
    %v3199 = vunpack.c.l.b16 %v2168
    %v3200 = vunpack.c.l.b16 %v2169
    %v3201 = vunpack.c.l.b16 %v2170
    %v3202 = vunpack.c.l.b16 %v2171
    %v3203 = vunpack.c.l.b16 %v2172
    %v3204 = vunpack.c.l.b16 %v2173
    %v3205 = vunpack.c.l.b16 %v2174
    %v3206 = vunpack.c.l.b16 %v2175
    %v3207 = vunpack.c.l.b16 %v2176
    %v3208 = vunpack.c.l.b16 %v2177
    %v3209 = vunpack.c.l.b16 %v2178
    %v3210 = vunpack.c.l.b16 %v2179
    %v3211 = vunpack.c.l.b16 %v2180
    %v3212 = vunpack.c.l.b16 %v2181
    %v3213 = vunpack.c.l.b16 %v2182
    %v3214 = vunpack.c.l.b16 %v2183
    %v3215 = vunpack.c.l.b16 %v2184
    %v3216 = vunpack.c.l.b16 %v2185
    %v3217 = vunpack.c.l.b16 %v2186
    %v3218 = vunpack.c.l.b16 %v2187
    %v3219 = vunpack.c.l.b16 %v2188
    %v3220 = vunpack.c.l.b16 %v2189
    %v3221 = vunpack.c.l.b16 %v2190
    %v3222 = vunpack.c.l.b16 %v2191
    %v3223 = vunpack.c.l.b16 %v2192
    %v3224 = vunpack.c.l.b16 %v2193
    %v3225 = vunpack.c.l.b16 %v2194
    %v3226 = vunpack.c.l.b16 %v2195
    %v3227 = vunpack.c.l.b16 %v2196
    %v3228 = vunpack.c.l.b16 %v2197
    %v3229 = vunpack.c.l.b16 %v2198
    %v3230 = vunpack.c.l.b16 %v2199
    %v3231 = vunpack.c.l.b16 %v2200
    %v3232 = vunpack.c.l.b16 %v2201
    %v3233 = vunpack.c.l.b16 %v2202
    %v3234 = vunpack.c.l.b16 %v2203
    %v3235 = vunpack.c.l.b16 %v2204
    %v3236 = vunpack.c.l.b16 %v2205
    %v3237 = vunpack.c.l.b16 %v2206
    %v3238 = vunpack.c.l.b16 %v2207
    %v3239 = vunpack.c.l.b16 %v2208
    %v3240 = vunpack.c.l.b16 %v2209
    %v3241 = vunpack.c.l.b16 %v2210
    %v3242 = vunpack.c.l.b16 %v2211
    %v3243 = vunpack.c.l.b16 %v2212
    %v3244 = vunpack.c.l.b16 %v2213
    %v3245 = vunpack.c.l.b16 %v2214
    %v3246 = vunpack.c.l.b16 %v2215
    %v3247 = vunpack.c.l.b16 %v2216
    %v3248 = vunpack.c.l.b16 %v2217
    %v3249 = vunpack.c.l.b16 %v2218
    %v3250 = vunpack.c.l.b16 %v2219
    %v3251 = vunpack.c.l.b16 %v2220
    %v3252 = vunpack.c.l.b16 %v2221
    %v3253 = vunpack.c.l.b16 %v2222
    %v3254 = vunpack.c.l.b16 %v2223
    %v3255 = vunpack.c.l.b16 %v2224
    %v3256 = vunpack.c.l.b16 %v2225
    %v3257 = vunpack.c.l.b16 %v2226
    %v3258 = vunpack.c.l.b16 %v2227
    %v3259 = vunpack.c.l.b16 %v2228
    %v3260 = vunpack.c.l.b16 %v2229
    %v3261 = vunpack.c.l.b16 %v2230
    %v3262 = vunpack.c.l.b16 %v2231
    %v3263 = vunpack.c.l.b16 %v2232
    %v3264 = vunpack.c.l.b16 %v2233
    %v3265 = vunpack.c.l.b16 %v2234
    %v3266 = vunpack.c.l.b16 %v2235
    %v3267 = vunpack.c.l.b16 %v2236
    %v3268 = vunpack.c.l.b16 %v2237
    %v3269 = vunpack.c.l.b16 %v2238
    %v3270 = vunpack.c.l.b16 %v2239
    %v3271 = vunpack.c.l.b16 %v2240
    %v3272 = vunpack.c.l.b16 %v2241
    %v3273 = vunpack.c.l.b16 %v2242
    %v3274 = vunpack.c.l.b16 %v2243
    %v3275 = vunpack.c.l.b16 %v2244
    %v3276 = vunpack.c.l.b16 %v2245
    %v3277 = vunpack.c.l.b16 %v2246
    %v3278 = vunpack.c.l.b16 %v2247
    %v3279 = vunpack.c.l.b16 %v2248
    %v3280 = vunpack.c.l.b16 %v2249
    %v3281 = vunpack.c.l.b16 %v2250
    %v3282 = vunpack.c.l.b16 %v2251
    %v3283 = vunpack.c.l.b16 %v2252
    %v3284 = vunpack.c.l.b16 %v2253
    %v3285 = vunpack.c.l.b16 %v2254
    %v3286 = vunpack.c.l.b16 %v2255
    %v3287 = vunpack.c.l.b16 %v2256
    %v3288 = vunpack.c.l.b16 %v2257
    %v3289 = vunpack.c.l.b16 %v2258
    %v3290 = vunpack.c.l.b16 %v2259
    %v3291 = vunpack.c.l.b16 %v2260
    %v3292 = vunpack.c.l.b16 %v2261
    %v3293 = vunpack.c.l.b16 %v2262
    %v3294 = vunpack.c.l.b16 %v2263
    %v3295 = vunpack.c.l.b16 %v2264
    %v3296 = vunpack.c.l.b16 %v2265
    %v3297 = vunpack.c.l.b16 %v2266
    %v3298 = vunpack.c.l.b16 %v2267
    %v3299 = vunpack.c.l.b16 %v2268
    %v3300 = vunpack.c.l.b16 %v2269
    %v3301 = vunpack.c.l.b16 %v2270
    %v3302 = vunpack.c.l.b16 %v2271
    %v3303 = vunpack.c.l.b16 %v2272
    %v3304 = vunpack.c.l.b16 %v2273
    %v3305 = vunpack.c.l.b16 %v2274
    %v3306 = vunpack.c.l.b16 %v2275
    %v3307 = vunpack.c.l.b16 %v2276
    %v3308 = vunpack.c.l.b16 %v2277
    %v3309 = vunpack.c.l.b16 %v2278
    %v3310 = vunpack.c.l.b16 %v2279
    %v3311 = vunpack.c.l.b16 %v2280
    %v3312 = vunpack.c.l.b16 %v2281
    %v3313 = vunpack.c.l.b16 %v2282
    %v3314 = vunpack.c.l.b16 %v2283
    %v3315 = vunpack.c.l.b16 %v2284
    %v3316 = vunpack.c.l.b16 %v2285
    %v3317 = vunpack.c.l.b16 %v2286
    %v3318 = vunpack.c.l.b16 %v2287
    %v3319 = vunpack.c.l.b16 %v2288
    %v3320 = vunpack.c.l.b16 %v2289
    %v3321 = vunpack.c.l.b16 %v2290
    %v3322 = vunpack.c.l.b16 %v2291
    %v3323 = vunpack.c.l.b16 %v2292
    %v3324 = vunpack.c.l.b16 %v2293
    %v3325 = vunpack.c.l.b16 %v2294
    %v3326 = vunpack.c.l.b16 %v2295
    %v3327 = vunpack.c.l.b16 %v2296
    %v3328 = vunpack.c.l.b16 %v2297
    %v3329 = vunpack.c.l.b16 %v2298
    %v3330 = vunpack.c.l.b16 %v2299
    %v3331 = vunpack.c.l.b16 %v2300
    %v3332 = vunpack.c.l.b16 %v2301
    %v3333 = vunpack.c.l.b16 %v2302
    %v3334 = vunpack.c.l.b16 %v2303
    %v3335 = vunpack.c.l.b16 %v2304
    %v3336 = vunpack.c.l.b16 %v2305
    %v3337 = vunpack.c.l.b16 %v2306
    %v3338 = vunpack.c.l.b16 %v2307
    %v3339 = vunpack.c.l.b16 %v2308
    %v3340 = vunpack.c.l.b16 %v2309
    %v3341 = vunpack.c.l.b16 %v2310
    %v3342 = vunpack.c.l.b16 %v2311
    %v3343 = vunpack.c.l.b16 %v2312
    %v3344 = vunpack.c.l.b16 %v2313
    %v3345 = vunpack.c.l.b16 %v2314
    %v3346 = vunpack.c.l.b16 %v2315
    %v3347 = vunpack.c.l.b16 %v2316
    %v3348 = vunpack.c.l.b16 %v2317
    %v3349 = vunpack.c.l.b16 %v2318
    %v3350 = vunpack.c.l.b16 %v2319
    %v3351 = vunpack.c.l.b16 %v2320
    %v3352 = vunpack.c.l.b16 %v2321
    %v3353 = vunpack.c.l.b16 %v2322
    %v3354 = vunpack.c.l.b16 %v2323
    %v3355 = vunpack.c.l.b16 %v2324
    %v3356 = vunpack.c.l.b16 %v2325
    %v3357 = vunpack.c.l.b16 %v2326
    %v3358 = vunpack.c.l.b16 %v2327
    %v3359 = vunpack.c.l.b16 %v2328
    %v3360 = vunpack.c.l.b16 %v2329
    %v3361 = vunpack.c.l.b16 %v2330
    %v3362 = vunpack.c.l.b16 %v2331
    %v3363 = vunpack.c.l.b16 %v2332
    %v3364 = vunpack.c.l.b16 %v2333
    %v3365 = vunpack.c.l.b16 %v2334
    %v3366 = vunpack.c.l.b16 %v2335
    %v3367 = vunpack.c.l.b16 %v2336
    %v3368 = vunpack.c.l.b16 %v2337
    %v3369 = vunpack.c.l.b16 %v2338
    %v3370 = vunpack.c.l.b16 %v2339
    %v3371 = vunpack.c.l.b16 %v2340
    %v3372 = vunpack.c.l.b16 %v2341
    %v3373 = vunpack.c.l.b16 %v2342
    %v3374 = vunpack.c.l.b16 %v2343
    %v3375 = vunpack.c.l.b16 %v2344
    %v3376 = vunpack.c.l.b16 %v2345
    %v3377 = vunpack.c.l.b16 %v2346
    %v3378 = vunpack.c.l.b16 %v2347
    %v3379 = vunpack.c.l.b16 %v2348
    %v3380 = vunpack.c.l.b16 %v2349
    %v3381 = vunpack.c.l.b16 %v2350
    %v3382 = vunpack.c.l.b16 %v2351
    %v3383 = vunpack.c.l.b16 %v2352
    %v3384 = vunpack.c.l.b16 %v2353
    %v3385 = vunpack.c.l.b16 %v2354
    %v3386 = vunpack.c.l.b16 %v2355
    %v3387 = vunpack.c.l.b16 %v2356
    %v3388 = vunpack.c.l.b16 %v2357
    %v3389 = vunpack.c.l.b16 %v2358
    %v3390 = vunpack.c.l.b16 %v2359
    %v3391 = vunpack.c.l.b16 %v2360
    %v3392 = vunpack.c.l.b16 %v2361
    %v3393 = vunpack.c.l.b16 %v2362
    %v3394 = vunpack.c.l.b16 %v2363
    %v3395 = vunpack.c.l.b16 %v2364
    %v3396 = vunpack.c.l.b16 %v2365
    %v3397 = vunpack.c.l.b16 %v2366
    %v3398 = vunpack.c.l.b16 %v2367
    %v3399 = vunpack.c.l.b16 %v2368
    %v3400 = vunpack.c.l.b16 %v2369
    %v3401 = vunpack.c.l.b16 %v2370
    %v3402 = vunpack.c.l.b16 %v2371
    %v3403 = vunpack.c.l.b16 %v2372
    %v3404 = vunpack.c.l.b16 %v2373
    %v3405 = vunpack.c.l.b16 %v2374
    %v3406 = vunpack.c.l.b16 %v2375
    %v3407 = vunpack.c.l.b16 %v2376
    %v3408 = vunpack.c.l.b16 %v2377
    %v3409 = vunpack.c.l.b16 %v2378
    %v3410 = vunpack.c.l.b16 %v2379
    %v3411 = vunpack.c.l.b16 %v2380
    %v3412 = vunpack.c.l.b16 %v2381
    %v3413 = vunpack.c.l.b16 %v2382
    %v3414 = vunpack.c.l.b16 %v2383
    %v3415 = vunpack.c.l.b16 %v2384
    %v3416 = vunpack.c.l.b16 %v2385
    %v3417 = vunpack.c.l.b16 %v2386
    %v3418 = vunpack.c.l.b16 %v2387
    %v3419 = vunpack.c.l.b16 %v2388
    %v3420 = vunpack.c.l.b16 %v2389
    %v3421 = vunpack.c.l.b16 %v2390
    %v3422 = vunpack.c.l.b16 %v2391
    %v3423 = vunpack.c.l.b16 %v2392
    %v3424 = vunpack.c.l.b16 %v2393
    %v3425 = vunpack.c.l.b16 %v2394
    %v3426 = vunpack.c.l.b16 %v2395
    %v3427 = vunpack.c.l.b16 %v2396
    %v3428 = vunpack.c.l.b16 %v2397
    %v3429 = vunpack.c.l.b16 %v2398
    %v3430 = vunpack.c.l.b16 %v2399
    %v3431 = vunpack.c.l.b16 %v2400
    %v3432 = vunpack.c.l.b16 %v2401
    %v3433 = vunpack.c.l.b16 %v2402
    %v3434 = vunpack.c.l.b16 %v2403
    %v3435 = vunpack.c.l.b16 %v2404
    %v3436 = vunpack.c.l.b16 %v2405
    %v3437 = vunpack.c.l.b16 %v2406
    %v3438 = vunpack.c.l.b16 %v2407
    %v3439 = vunpack.c.l.b16 %v2408
    %v3440 = vunpack.c.l.b16 %v2409
    %v3441 = vunpack.c.l.b16 %v2410
    %v3442 = vunpack.c.l.b16 %v2411
    %v3443 = vunpack.c.l.b16 %v2412
    %v3444 = vunpack.c.l.b16 %v2413
    %v3445 = vunpack.c.l.b16 %v2414
    %v3446 = vunpack.c.l.b16 %v2415
    %v3447 = vunpack.c.l.b16 %v2416
    %v3448 = vunpack.c.l.b16 %v2417
    %v3449 = vunpack.c.l.b16 %v2418
    %v3450 = vunpack.c.l.b16 %v2419
    %v3451 = vunpack.c.l.b16 %v2420
    %v3452 = vunpack.c.l.b16 %v2421
    %v3453 = vunpack.c.l.b16 %v2422
    %v3454 = vunpack.c.l.b16 %v2423
    %v3455 = vunpack.c.l.b16 %v2424
    %v3456 = vunpack.c.l.b16 %v2425
    %v3457 = vunpack.c.l.b16 %v2426
    %v3458 = vunpack.c.l.b16 %v2427
    %v3459 = vunpack.c.l.b16 %v2428
    %v3460 = vunpack.c.l.b16 %v2429
    %v3461 = vunpack.c.l.b16 %v2430
    %v3462 = vunpack.c.l.b16 %v2431
    %v3463 = vunpack.c.l.b16 %v2432
    %v3464 = vunpack.c.l.b16 %v2433
    %v3465 = vunpack.c.l.b16 %v2434
    %v3466 = vunpack.c.l.b16 %v2435
    %v3467 = vunpack.c.l.b16 %v2436
    %v3468 = vunpack.c.l.b16 %v2437
    %v3469 = vunpack.c.l.b16 %v2438
    %v3470 = vunpack.c.l.b16 %v2439
    %v3471 = vunpack.c.l.b16 %v2440
    %v3472 = vunpack.c.l.b16 %v2441
    %v3473 = vunpack.c.l.b16 %v2442
    %v3474 = vunpack.c.l.b16 %v2443
    %v3475 = vunpack.c.l.b16 %v2444
    %v3476 = vunpack.c.l.b16 %v2445
    %v3477 = vunpack.c.l.b16 %v2446
    %v3478 = vunpack.c.l.b16 %v2447
    %v3479 = vunpack.c.l.b16 %v2448
    %v3480 = vunpack.c.l.b16 %v2449
    %v3481 = vunpack.c.l.b16 %v2450
    %v3482 = vunpack.c.l.b16 %v2451
    %v3483 = vunpack.c.l.b16 %v2452
    %v3484 = vunpack.c.l.b16 %v2453
    %v3485 = vunpack.c.l.b16 %v2454
    %v3486 = vunpack.c.l.b16 %v2455
    %v3487 = vunpack.c.l.b16 %v2456
    %v3488 = vunpack.c.l.b16 %v2457
    %v3489 = vunpack.c.l.b16 %v2458
    %v3490 = vunpack.c.l.b16 %v2459
    %v3491 = vunpack.c.l.b16 %v2460
    %v3492 = vunpack.c.l.b16 %v2461
    %v3493 = vunpack.c.l.b16 %v2462
    %v3494 = vunpack.c.l.b16 %v2463
    %v3495 = vunpack.c.l.b16 %v2464
    %v3496 = vunpack.c.l.b16 %v2465
    %v3497 = vunpack.c.l.b16 %v2466
    %v3498 = vunpack.c.l.b16 %v2467
    %v3499 = vunpack.c.l.b16 %v2468
    %v3500 = vunpack.c.l.b16 %v2469
    %v3501 = vunpack.c.l.b16 %v2470
    %v3502 = vunpack.c.l.b16 %v2471
    %v3503 = vunpack.c.l.b16 %v2472
    %v3504 = vunpack.c.l.b16 %v2473
    %v3505 = vunpack.c.l.b16 %v2474
    %v3506 = vunpack.c.l.b16 %v2475
    %v3507 = vunpack.c.l.b16 %v2476
    %v3508 = vunpack.c.l.b16 %v2477
    %v3509 = vunpack.c.l.b16 %v2478
    %v3510 = vunpack.c.l.b16 %v2479
    %v3511 = vunpack.c.l.b16 %v2480
    %v3512 = vunpack.c.l.b16 %v2481
    %v3513 = vunpack.c.l.b16 %v2482
    %v3514 = vunpack.c.l.b16 %v2483
    %v3515 = vunpack.c.l.b16 %v2484
    %v3516 = vunpack.c.l.b16 %v2485
    %v3517 = vunpack.c.l.b16 %v2486
    %v3518 = vunpack.c.l.b16 %v2487
    %v3519 = vunpack.c.l.b16 %v2488
    %v3520 = vunpack.c.l.b16 %v2489
    %v3521 = vunpack.c.l.b16 %v2490
    %v3522 = vunpack.c.l.b16 %v2491
    %v3523 = vunpack.c.l.b16 %v2492
    %v3524 = vunpack.c.l.b16 %v2493
    %v3525 = vunpack.c.l.b16 %v2494
    %v3526 = vunpack.c.l.b16 %v2495
    %v3527 = vunpack.c.l.b16 %v2496
    %v3528 = vunpack.c.l.b16 %v2497
    %v3529 = vunpack.c.l.b16 %v2498
    %v3530 = vunpack.c.l.b16 %v2499
    %v3531 = vunpack.c.l.b16 %v2500
    %v3532 = vunpack.c.l.b16 %v2501
    %v3533 = vunpack.c.l.b16 %v2502
    %v3534 = vunpack.c.l.b16 %v2503
    %v3535 = vunpack.c.l.b16 %v2504
    %v3536 = vunpack.c.l.b16 %v2505
    %v3537 = vunpack.c.l.b16 %v2506
    %v3538 = vunpack.c.l.b16 %v2507
    %v3539 = vunpack.c.l.b16 %v2508
    %v3540 = vunpack.c.l.b16 %v2509
    %v3541 = vunpack.c.l.b16 %v2510
    %v3542 = vunpack.c.l.b16 %v2511
    %v3543 = vunpack.c.l.b16 %v2512
    %v3544 = vunpack.c.l.b16 %v2513
    %v3545 = vunpack.c.l.b16 %v2514
    %v3546 = vunpack.c.l.b16 %v2515
    %v3547 = vunpack.c.l.b16 %v2516
    %v3548 = vunpack.c.l.b16 %v2517
    %v3549 = vunpack.c.l.b16 %v2518
    %v3550 = vunpack.c.l.b16 %v2519
    %v3551 = vunpack.c.l.b16 %v2520
    %v3552 = vunpack.c.l.b16 %v2521
    %v3553 = vunpack.c.l.b16 %v2522
    %v3554 = vunpack.c.l.b16 %v2523
    %v3555 = vunpack.c.l.b16 %v2524
    %v3556 = vunpack.c.l.b16 %v2525
    %v3557 = vunpack.c.l.b16 %v2526
    %v3558 = vunpack.c.l.b16 %v2527
    %v3559 = vunpack.c.l.b16 %v2528
    %v3560 = vunpack.c.l.b16 %v2529
    %v3561 = vunpack.c.l.b16 %v2530
    %v3562 = vunpack.c.l.b16 %v2531
    %v3563 = vunpack.c.l.b16 %v2532
    %v3564 = vunpack.c.l.b16 %v2533
    %v3565 = vunpack.c.l.b16 %v2534
    %v3566 = vunpack.c.l.b16 %v2535
    %v3567 = vunpack.c.l.b16 %v2536
    %v3568 = vunpack.c.l.b16 %v2537
    %v3569 = vunpack.c.l.b16 %v2538
    %v3570 = vunpack.c.l.b16 %v2539
    %v3571 = vunpack.c.l.b16 %v2540
    %v3572 = vunpack.c.l.b16 %v2541
    %v3573 = vunpack.c.l.b16 %v2542
    %v3574 = vunpack.c.l.b16 %v2543
    %v3575 = vunpack.c.l.b16 %v2544
    %v3576 = vunpack.c.l.b16 %v2545
    %v3577 = vunpack.c.l.b16 %v2546
    %v3578 = vunpack.c.l.b16 %v2547
    %v3579 = vunpack.c.l.b16 %v2548
    %v3580 = vunpack.c.l.b16 %v2549
    %v3581 = vunpack.c.l.b16 %v2550
    %v3582 = vunpack.c.l.b16 %v2551
    %v3583 = vunpack.c.l.b16 %v2552
    %v3584 = vunpack.c.l.b16 %v2553
    %v3585 = vunpack.c.l.b16 %v2554
    %v3586 = vunpack.c.l.b16 %v2555
    %v3587 = vunpack.c.l.b16 %v2556
    %v3588 = vunpack.c.l.b16 %v2557
    %v3589 = vunpack.c.l.b16 %v2558
    %v3590 = vunpack.c.l.b16 %v2559
    %v3591 = vunpack.c.l.b16 %v2560
    %v3592 = vunpack.c.l.b16 %v2561
    %v3593 = vunpack.c.l.b16 %v2562
    %v3594 = vunpack.c.l.b16 %v2563
    %v3595 = vunpack.c.l.b16 %v2564
    %v3596 = vunpack.c.l.b16 %v2565
    %v3597 = vunpack.c.l.b16 %v2566
    %v3598 = vunpack.c.l.b16 %v2567
    %v3599 = vunpack.c.l.b16 %v2568
    %v3600 = vunpack.c.l.b16 %v2569
    %v3601 = vunpack.c.l.b16 %v2570
    %v3602 = vunpack.c.l.b16 %v2571
    %v3603 = vunpack.c.l.b16 %v2572
    %v3604 = vunpack.c.l.b16 %v2573
    %v3605 = vpack.c.b16 %v3094, %v3093
    %v3606 = vpack.c.b16 %v3096, %v3095
    %v3607 = vpack.c.b16 %v3098, %v3097
    %v3608 = vpack.c.b16 %v3100, %v3099
    %v3609 = vpack.c.b16 %v3102, %v3101
    %v3610 = vpack.c.b16 %v3104, %v3103
    %v3611 = vpack.c.b16 %v3106, %v3105
    %v3612 = vpack.c.b16 %v3108, %v3107
    %v3613 = vpack.c.b16 %v3110, %v3109
    %v3614 = vpack.c.b16 %v3112, %v3111
    %v3615 = vpack.c.b16 %v3114, %v3113
    %v3616 = vpack.c.b16 %v3116, %v3115
    %v3617 = vpack.c.b16 %v3118, %v3117
    %v3618 = vpack.c.b16 %v3120, %v3119
    %v3619 = vpack.c.b16 %v3122, %v3121
    %v3620 = vpack.c.b16 %v3124, %v3123
    %v3621 = vpack.c.b16 %v3126, %v3125
    %v3622 = vpack.c.b16 %v3128, %v3127
    %v3623 = vpack.c.b16 %v3130, %v3129
    %v3624 = vpack.c.b16 %v3132, %v3131
    %v3625 = vpack.c.b16 %v3134, %v3133
    %v3626 = vpack.c.b16 %v3136, %v3135
    %v3627 = vpack.c.b16 %v3138, %v3137
    %v3628 = vpack.c.b16 %v3140, %v3139
    %v3629 = vpack.c.b16 %v3142, %v3141
    %v3630 = vpack.c.b16 %v3144, %v3143
    %v3631 = vpack.c.b16 %v3146, %v3145
    %v3632 = vpack.c.b16 %v3148, %v3147
    %v3633 = vpack.c.b16 %v3150, %v3149
    %v3634 = vpack.c.b16 %v3152, %v3151
    %v3635 = vpack.c.b16 %v3154, %v3153
    %v3636 = vpack.c.b16 %v3156, %v3155
    %v3637 = vpack.c.b16 %v3158, %v3157
    %v3638 = vpack.c.b16 %v3160, %v3159
    %v3639 = vpack.c.b16 %v3162, %v3161
    %v3640 = vpack.c.b16 %v3164, %v3163
    %v3641 = vpack.c.b16 %v3166, %v3165
    %v3642 = vpack.c.b16 %v3168, %v3167
    %v3643 = vpack.c.b16 %v3170, %v3169
    %v3644 = vpack.c.b16 %v3172, %v3171
    %v3645 = vpack.c.b16 %v3174, %v3173
    %v3646 = vpack.c.b16 %v3176, %v3175
    %v3647 = vpack.c.b16 %v3178, %v3177
    %v3648 = vpack.c.b16 %v3180, %v3179
    %v3649 = vpack.c.b16 %v3182, %v3181
    %v3650 = vpack.c.b16 %v3184, %v3183
    %v3651 = vpack.c.b16 %v3186, %v3185
    %v3652 = vpack.c.b16 %v3188, %v3187
    %v3653 = vpack.c.b16 %v3190, %v3189
    %v3654 = vpack.c.b16 %v3192, %v3191
    %v3655 = vpack.c.b16 %v3194, %v3193
    %v3656 = vpack.c.b16 %v3196, %v3195
    %v3657 = vpack.c.b16 %v3198, %v3197
    %v3658 = vpack.c.b16 %v3200, %v3199
    %v3659 = vpack.c.b16 %v3202, %v3201
    %v3660 = vpack.c.b16 %v3204, %v3203
    %v3661 = vpack.c.b16 %v3206, %v3205
    %v3662 = vpack.c.b16 %v3208, %v3207
    %v3663 = vpack.c.b16 %v3210, %v3209
    %v3664 = vpack.c.b16 %v3212, %v3211
    %v3665 = vpack.c.b16 %v3214, %v3213
    %v3666 = vpack.c.b16 %v3216, %v3215
    %v3667 = vpack.c.b16 %v3218, %v3217
    %v3668 = vpack.c.b16 %v3220, %v3219
    %v3669 = vpack.c.b16 %v3222, %v3221
    %v3670 = vpack.c.b16 %v3224, %v3223
    %v3671 = vpack.c.b16 %v3226, %v3225
    %v3672 = vpack.c.b16 %v3228, %v3227
    %v3673 = vpack.c.b16 %v3230, %v3229
    %v3674 = vpack.c.b16 %v3232, %v3231
    %v3675 = vpack.c.b16 %v3234, %v3233
    %v3676 = vpack.c.b16 %v3236, %v3235
    %v3677 = vpack.c.b16 %v3238, %v3237
    %v3678 = vpack.c.b16 %v3240, %v3239
    %v3679 = vpack.c.b16 %v3242, %v3241
    %v3680 = vpack.c.b16 %v3244, %v3243
    %v3681 = vpack.c.b16 %v3246, %v3245
    %v3682 = vpack.c.b16 %v3248, %v3247
    %v3683 = vpack.c.b16 %v3250, %v3249
    %v3684 = vpack.c.b16 %v3252, %v3251
    %v3685 = vpack.c.b16 %v3254, %v3253
    %v3686 = vpack.c.b16 %v3256, %v3255
    %v3687 = vpack.c.b16 %v3258, %v3257
    %v3688 = vpack.c.b16 %v3260, %v3259
    %v3689 = vpack.c.b16 %v3262, %v3261
    %v3690 = vpack.c.b16 %v3264, %v3263
    %v3691 = vpack.c.b16 %v3266, %v3265
    %v3692 = vpack.c.b16 %v3268, %v3267
    %v3693 = vpack.c.b16 %v3270, %v3269
    %v3694 = vpack.c.b16 %v3272, %v3271
    %v3695 = vpack.c.b16 %v3274, %v3273
    %v3696 = vpack.c.b16 %v3276, %v3275
    %v3697 = vpack.c.b16 %v3278, %v3277
    %v3698 = vpack.c.b16 %v3280, %v3279
    %v3699 = vpack.c.b16 %v3282, %v3281
    %v3700 = vpack.c.b16 %v3284, %v3283
    %v3701 = vpack.c.b16 %v3286, %v3285
    %v3702 = vpack.c.b16 %v3288, %v3287
    %v3703 = vpack.c.b16 %v3290, %v3289
    %v3704 = vpack.c.b16 %v3292, %v3291
    %v3705 = vpack.c.b16 %v3294, %v3293
    %v3706 = vpack.c.b16 %v3296, %v3295
    %v3707 = vpack.c.b16 %v3298, %v3297
    %v3708 = vpack.c.b16 %v3300, %v3299
    %v3709 = vpack.c.b16 %v3302, %v3301
    %v3710 = vpack.c.b16 %v3304, %v3303
    %v3711 = vpack.c.b16 %v3306, %v3305
    %v3712 = vpack.c.b16 %v3308, %v3307
    %v3713 = vpack.c.b16 %v3310, %v3309
    %v3714 = vpack.c.b16 %v3312, %v3311
    %v3715 = vpack.c.b16 %v3314, %v3313
    %v3716 = vpack.c.b16 %v3316, %v3315
    %v3717 = vpack.c.b16 %v3318, %v3317
    %v3718 = vpack.c.b16 %v3320, %v3319
    %v3719 = vpack.c.b16 %v3322, %v3321
    %v3720 = vpack.c.b16 %v3324, %v3323
    %v3721 = vpack.c.b16 %v3326, %v3325
    %v3722 = vpack.c.b16 %v3328, %v3327
    %v3723 = vpack.c.b16 %v3330, %v3329
    %v3724 = vpack.c.b16 %v3332, %v3331
    %v3725 = vpack.c.b16 %v3334, %v3333
    %v3726 = vpack.c.b16 %v3336, %v3335
    %v3727 = vpack.c.b16 %v3338, %v3337
    %v3728 = vpack.c.b16 %v3340, %v3339
    %v3729 = vpack.c.b16 %v3342, %v3341
    %v3730 = vpack.c.b16 %v3344, %v3343
    %v3731 = vpack.c.b16 %v3346, %v3345
    %v3732 = vpack.c.b16 %v3348, %v3347
    %v3733 = vpack.c.b16 %v3350, %v3349
    %v3734 = vpack.c.b16 %v3352, %v3351
    %v3735 = vpack.c.b16 %v3354, %v3353
    %v3736 = vpack.c.b16 %v3356, %v3355
    %v3737 = vpack.c.b16 %v3358, %v3357
    %v3738 = vpack.c.b16 %v3360, %v3359
    %v3739 = vpack.c.b16 %v3362, %v3361
    %v3740 = vpack.c.b16 %v3364, %v3363
    %v3741 = vpack.c.b16 %v3366, %v3365
    %v3742 = vpack.c.b16 %v3368, %v3367
    %v3743 = vpack.c.b16 %v3370, %v3369
    %v3744 = vpack.c.b16 %v3372, %v3371
    %v3745 = vpack.c.b16 %v3374, %v3373
    %v3746 = vpack.c.b16 %v3376, %v3375
    %v3747 = vpack.c.b16 %v3378, %v3377
    %v3748 = vpack.c.b16 %v3380, %v3379
    %v3749 = vpack.c.b16 %v3382, %v3381
    %v3750 = vpack.c.b16 %v3384, %v3383
    %v3751 = vpack.c.b16 %v3386, %v3385
    %v3752 = vpack.c.b16 %v3388, %v3387
    %v3753 = vpack.c.b16 %v3390, %v3389
    %v3754 = vpack.c.b16 %v3392, %v3391
    %v3755 = vpack.c.b16 %v3394, %v3393
    %v3756 = vpack.c.b16 %v3396, %v3395
    %v3757 = vpack.c.b16 %v3398, %v3397
    %v3758 = vpack.c.b16 %v3400, %v3399
    %v3759 = vpack.c.b16 %v3402, %v3401
    %v3760 = vpack.c.b16 %v3404, %v3403
    %v3761 = vpack.c.b16 %v3406, %v3405
    %v3762 = vpack.c.b16 %v3408, %v3407
    %v3763 = vpack.c.b16 %v3410, %v3409
    %v3764 = vpack.c.b16 %v3412, %v3411
    %v3765 = vpack.c.b16 %v3414, %v3413
    %v3766 = vpack.c.b16 %v3416, %v3415
    %v3767 = vpack.c.b16 %v3418, %v3417
    %v3768 = vpack.c.b16 %v3420, %v3419
    %v3769 = vpack.c.b16 %v3422, %v3421
    %v3770 = vpack.c.b16 %v3424, %v3423
    %v3771 = vpack.c.b16 %v3426, %v3425
    %v3772 = vpack.c.b16 %v3428, %v3427
    %v3773 = vpack.c.b16 %v3430, %v3429
    %v3774 = vpack.c.b16 %v3432, %v3431
    %v3775 = vpack.c.b16 %v3434, %v3433
    %v3776 = vpack.c.b16 %v3436, %v3435
    %v3777 = vpack.c.b16 %v3438, %v3437
    %v3778 = vpack.c.b16 %v3440, %v3439
    %v3779 = vpack.c.b16 %v3442, %v3441
    %v3780 = vpack.c.b16 %v3444, %v3443
    %v3781 = vpack.c.b16 %v3446, %v3445
    %v3782 = vpack.c.b16 %v3448, %v3447
    %v3783 = vpack.c.b16 %v3450, %v3449
    %v3784 = vpack.c.b16 %v3452, %v3451
    %v3785 = vpack.c.b16 %v3454, %v3453
    %v3786 = vpack.c.b16 %v3456, %v3455
    %v3787 = vpack.c.b16 %v3458, %v3457
    %v3788 = vpack.c.b16 %v3460, %v3459
    %v3789 = vpack.c.b16 %v3462, %v3461
    %v3790 = vpack.c.b16 %v3464, %v3463
    %v3791 = vpack.c.b16 %v3466, %v3465
    %v3792 = vpack.c.b16 %v3468, %v3467
    %v3793 = vpack.c.b16 %v3470, %v3469
    %v3794 = vpack.c.b16 %v3472, %v3471
    %v3795 = vpack.c.b16 %v3474, %v3473
    %v3796 = vpack.c.b16 %v3476, %v3475
    %v3797 = vpack.c.b16 %v3478, %v3477
    %v3798 = vpack.c.b16 %v3480, %v3479
    %v3799 = vpack.c.b16 %v3482, %v3481
    %v3800 = vpack.c.b16 %v3484, %v3483
    %v3801 = vpack.c.b16 %v3486, %v3485
    %v3802 = vpack.c.b16 %v3488, %v3487
    %v3803 = vpack.c.b16 %v3490, %v3489
    %v3804 = vpack.c.b16 %v3492, %v3491
    %v3805 = vpack.c.b16 %v3494, %v3493
    %v3806 = vpack.c.b16 %v3496, %v3495
    %v3807 = vpack.c.b16 %v3498, %v3497
    %v3808 = vpack.c.b16 %v3500, %v3499
    %v3809 = vpack.c.b16 %v3502, %v3501
    %v3810 = vpack.c.b16 %v3504, %v3503
    %v3811 = vpack.c.b16 %v3506, %v3505
    %v3812 = vpack.c.b16 %v3508, %v3507
    %v3813 = vpack.c.b16 %v3510, %v3509
    %v3814 = vpack.c.b16 %v3512, %v3511
    %v3815 = vpack.c.b16 %v3514, %v3513
    %v3816 = vpack.c.b16 %v3516, %v3515
    %v3817 = vpack.c.b16 %v3518, %v3517
    %v3818 = vpack.c.b16 %v3520, %v3519
    %v3819 = vpack.c.b16 %v3522, %v3521
    %v3820 = vpack.c.b16 %v3524, %v3523
    %v3821 = vpack.c.b16 %v3526, %v3525
    %v3822 = vpack.c.b16 %v3528, %v3527
    %v3823 = vpack.c.b16 %v3530, %v3529
    %v3824 = vpack.c.b16 %v3532, %v3531
    %v3825 = vpack.c.b16 %v3534, %v3533
    %v3826 = vpack.c.b16 %v3536, %v3535
    %v3827 = vpack.c.b16 %v3538, %v3537
    %v3828 = vpack.c.b16 %v3540, %v3539
    %v3829 = vpack.c.b16 %v3542, %v3541
    %v3830 = vpack.c.b16 %v3544, %v3543
    %v3831 = vpack.c.b16 %v3546, %v3545
    %v3832 = vpack.c.b16 %v3548, %v3547
    %v3833 = vpack.c.b16 %v3550, %v3549
    %v3834 = vpack.c.b16 %v3552, %v3551
    %v3835 = vpack.c.b16 %v3554, %v3553
    %v3836 = vpack.c.b16 %v3556, %v3555
    %v3837 = vpack.c.b16 %v3558, %v3557
    %v3838 = vpack.c.b16 %v3560, %v3559
    %v3839 = vpack.c.b16 %v3562, %v3561
    %v3840 = vpack.c.b16 %v3564, %v3563
    %v3841 = vpack.c.b16 %v3566, %v3565
    %v3842 = vpack.c.b16 %v3568, %v3567
    %v3843 = vpack.c.b16 %v3570, %v3569
    %v3844 = vpack.c.b16 %v3572, %v3571
    %v3845 = vpack.c.b16 %v3574, %v3573
    %v3846 = vpack.c.b16 %v3576, %v3575
    %v3847 = vpack.c.b16 %v3578, %v3577
    %v3848 = vpack.c.b16 %v3580, %v3579
    %v3849 = vpack.c.b16 %v3582, %v3581
    %v3850 = vpack.c.b16 %v3584, %v3583
    %v3851 = vpack.c.b16 %v3586, %v3585
    %v3852 = vpack.c.b16 %v3588, %v3587
    %v3853 = vpack.c.b16 %v3590, %v3589
    %v3854 = vpack.c.b16 %v3592, %v3591
    %v3855 = vpack.c.b16 %v3594, %v3593
    %v3856 = vpack.c.b16 %v3596, %v3595
    %v3857 = vpack.c.b16 %v3598, %v3597
    %v3858 = vpack.c.b16 %v3600, %v3599
    %v3859 = vpack.c.b16 %v3602, %v3601
    %v3860 = vpack.c.b16 %v3604, %v3603
    %4117 = vmatprep.subr.bf16.mxu0 0
    %4118 = vmatpush1.bf16.msra.mxu0 %v3612
    %4119 = vmatprep.subr.bf16.mxu0 0
    %4120 = vmatpush1.bf16.msra.mxu0 %v3611
    %4121 = vmatprep.subr.bf16.mxu0 0
    %4122 = vmatpush1.bf16.msra.mxu0 %v3610
    %4123 = vmatprep.subr.bf16.mxu0 0
    %4124 = vmatpush1.bf16.msra.mxu0 %v3609
    %4125 = vmatprep.subr.bf16.mxu0 0
    %4126 = vmatpush1.bf16.msra.mxu0 %v3608
    %4127 = vmatprep.subr.bf16.mxu0 0
    %4128 = vmatpush1.bf16.msra.mxu0 %v3607
    %4129 = vmatprep.subr.bf16.mxu0 0
    %4130 = vmatpush1.bf16.msra.mxu0 %v3606
    %4131 = vmatprep.subr.bf16.mxu0 0
    %4132 = vmatpush1.bf16.msra.mxu0 %v3605
    %4133 = vmatprep.subr.bf16.mxu0 0
    %4134 = vmatpush2.bf16.msra.mxu0 %v3620
    %4135 = vmatprep.subr.bf16.mxu0 0
    %4136 = vmatpush2.bf16.msra.mxu0 %v3619
    %4137 = vmatprep.subr.bf16.mxu0 0
    %4138 = vmatpush2.bf16.msra.mxu0 %v3618
    %4139 = vmatprep.subr.bf16.mxu0 0
    %4140 = vmatpush2.bf16.msra.mxu0 %v3617
    %4141 = vmatprep.subr.bf16.mxu0 0
    %4142 = vmatpush2.bf16.msra.mxu0 %v3616
    %4143 = vmatprep.subr.bf16.mxu0 0
    %4144 = vmatpush2.bf16.msra.mxu0 %v3615
    %4145 = vmatprep.subr.bf16.mxu0 0
    %4146 = vmatpush2.bf16.msra.mxu0 %v3614
    %4147 = vmatprep.subr.bf16.mxu0 0
    %4148 = vmatpush2.bf16.msra.mxu0 %v3613
    %4149 = vmatprep.mubr.bf16.mxu0 %v2031
    %4150 = vmatmul.mubr.bf16.gmra.mxu0 %v2030
    %v4151 = vpop.f32.mrf.mxu0
    %v4152 = vadd.f32 %v2579, %v4151
    %v4153 = vpop.f32.mrf.mxu0
    %v4154 = vpop.f32.mrf.mxu0
    %v4155 = vadd.f32 %v2579, %v4154
    %v4156 = vpop.f32.mrf.mxu0
    %4157 = vdwg.mxu0
    %4158 = vmatprep.subr.bf16.mxu0 0
    %4159 = vmatpush1.bf16.msra.mxu0 %v3628
    %4160 = vmatprep.subr.bf16.mxu0 0
    %4161 = vmatpush1.bf16.msra.mxu0 %v3627
    %4162 = vmatprep.subr.bf16.mxu0 0
    %4163 = vmatpush1.bf16.msra.mxu0 %v3626
    %4164 = vmatprep.subr.bf16.mxu0 0
    %4165 = vmatpush1.bf16.msra.mxu0 %v3625
    %4166 = vmatprep.subr.bf16.mxu0 0
    %4167 = vmatpush1.bf16.msra.mxu0 %v3624
    %4168 = vmatprep.subr.bf16.mxu0 0
    %4169 = vmatpush1.bf16.msra.mxu0 %v3623
    %4170 = vmatprep.subr.bf16.mxu0 0
    %4171 = vmatpush1.bf16.msra.mxu0 %v3622
    %4172 = vmatprep.subr.bf16.mxu0 0
    %4173 = vmatpush1.bf16.msra.mxu0 %v3621
    %4174 = vmatprep.subr.bf16.mxu0 0
    %4175 = vmatpush2.bf16.msra.mxu0 %v3636
    %4176 = vmatprep.subr.bf16.mxu0 0
    %4177 = vmatpush2.bf16.msra.mxu0 %v3635
    %4178 = vmatprep.subr.bf16.mxu0 0
    %4179 = vmatpush2.bf16.msra.mxu0 %v3634
    %4180 = vmatprep.subr.bf16.mxu0 0
    %4181 = vmatpush2.bf16.msra.mxu0 %v3633
    %4182 = vmatprep.subr.bf16.mxu0 0
    %4183 = vmatpush2.bf16.msra.mxu0 %v3632
    %4184 = vmatprep.subr.bf16.mxu0 0
    %4185 = vmatpush2.bf16.msra.mxu0 %v3631
    %4186 = vmatprep.subr.bf16.mxu0 0
    %4187 = vmatpush2.bf16.msra.mxu0 %v3630
    %4188 = vmatprep.subr.bf16.mxu0 0
    %4189 = vmatpush2.bf16.msra.mxu0 %v3629
    %4190 = vmatprep.mubr.bf16.mxu0 %v2033
    %4191 = vmatmul.mubr.bf16.gmra.mxu0 %v2032
    %v4192 = vpop.f32.mrf.mxu0
    %v4193 = vadd.f32 %v4152, %v4192
    %v4194 = vpop.f32.mrf.mxu0
    %v4195 = vpop.f32.mrf.mxu0
    %v4196 = vadd.f32 %v4155, %v4195
    %v4197 = vpop.f32.mrf.mxu0
    %4198 = vdwg.mxu0
    %4199 = vmatprep.subr.bf16.mxu0 0
    %4200 = vmatpush1.bf16.msra.mxu0 %v3644
    %4201 = vmatprep.subr.bf16.mxu0 0
    %4202 = vmatpush1.bf16.msra.mxu0 %v3643
    %4203 = vmatprep.subr.bf16.mxu0 0
    %4204 = vmatpush1.bf16.msra.mxu0 %v3642
    %4205 = vmatprep.subr.bf16.mxu0 0
    %4206 = vmatpush1.bf16.msra.mxu0 %v3641
    %4207 = vmatprep.subr.bf16.mxu0 0
    %4208 = vmatpush1.bf16.msra.mxu0 %v3640
    %4209 = vmatprep.subr.bf16.mxu0 0
    %4210 = vmatpush1.bf16.msra.mxu0 %v3639
    %4211 = vmatprep.subr.bf16.mxu0 0
    %4212 = vmatpush1.bf16.msra.mxu0 %v3638
    %4213 = vmatprep.subr.bf16.mxu0 0
    %4214 = vmatpush1.bf16.msra.mxu0 %v3637
    %4215 = vmatprep.subr.bf16.mxu0 0
    %4216 = vmatpush2.bf16.msra.mxu0 %v3652
    %4217 = vmatprep.subr.bf16.mxu0 0
    %4218 = vmatpush2.bf16.msra.mxu0 %v3651
    %4219 = vmatprep.subr.bf16.mxu0 0
    %4220 = vmatpush2.bf16.msra.mxu0 %v3650
    %4221 = vmatprep.subr.bf16.mxu0 0
    %4222 = vmatpush2.bf16.msra.mxu0 %v3649
    %4223 = vmatprep.subr.bf16.mxu0 0
    %4224 = vmatpush2.bf16.msra.mxu0 %v3648
    %4225 = vmatprep.subr.bf16.mxu0 0
    %4226 = vmatpush2.bf16.msra.mxu0 %v3647
    %4227 = vmatprep.subr.bf16.mxu0 0
    %4228 = vmatpush2.bf16.msra.mxu0 %v3646
    %4229 = vmatprep.subr.bf16.mxu0 0
    %4230 = vmatpush2.bf16.msra.mxu0 %v3645
    %4231 = vmatprep.mubr.bf16.mxu0 %v2035
    %4232 = vmatmul.mubr.bf16.gmra.mxu0 %v2034
    %v4233 = vpop.f32.mrf.mxu0
    %v4234 = vadd.f32 %v4193, %v4233
    %v4235 = vpop.f32.mrf.mxu0
    %v4236 = vpop.f32.mrf.mxu0
    %v4237 = vadd.f32 %v4196, %v4236
    %v4238 = vpop.f32.mrf.mxu0
    %4239 = vdwg.mxu0
    %4240 = vmatprep.subr.bf16.mxu0 0
    %4241 = vmatpush1.bf16.msra.mxu0 %v3660
    %4242 = vmatprep.subr.bf16.mxu0 0
    %4243 = vmatpush1.bf16.msra.mxu0 %v3659
    %4244 = vmatprep.subr.bf16.mxu0 0
    %4245 = vmatpush1.bf16.msra.mxu0 %v3658
    %4246 = vmatprep.subr.bf16.mxu0 0
    %4247 = vmatpush1.bf16.msra.mxu0 %v3657
    %4248 = vmatprep.subr.bf16.mxu0 0
    %4249 = vmatpush1.bf16.msra.mxu0 %v3656
    %4250 = vmatprep.subr.bf16.mxu0 0
    %4251 = vmatpush1.bf16.msra.mxu0 %v3655
    %4252 = vmatprep.subr.bf16.mxu0 0
    %4253 = vmatpush1.bf16.msra.mxu0 %v3654
    %4254 = vmatprep.subr.bf16.mxu0 0
    %4255 = vmatpush1.bf16.msra.mxu0 %v3653
    %4256 = vmatprep.subr.bf16.mxu0 0
    %4257 = vmatpush2.bf16.msra.mxu0 %v3668
    %4258 = vmatprep.subr.bf16.mxu0 0
    %4259 = vmatpush2.bf16.msra.mxu0 %v3667
    %4260 = vmatprep.subr.bf16.mxu0 0
    %4261 = vmatpush2.bf16.msra.mxu0 %v3666
    %4262 = vmatprep.subr.bf16.mxu0 0
    %4263 = vmatpush2.bf16.msra.mxu0 %v3665
    %4264 = vmatprep.subr.bf16.mxu0 0
    %4265 = vmatpush2.bf16.msra.mxu0 %v3664
    %4266 = vmatprep.subr.bf16.mxu0 0
    %4267 = vmatpush2.bf16.msra.mxu0 %v3663
    %4268 = vmatprep.subr.bf16.mxu0 0
    %4269 = vmatpush2.bf16.msra.mxu0 %v3662
    %4270 = vmatprep.subr.bf16.mxu0 0
    %4271 = vmatpush2.bf16.msra.mxu0 %v3661
    %4272 = vmatprep.mubr.bf16.mxu0 %v2037
    %4273 = vmatmul.mubr.bf16.gmra.mxu0 %v2036
    %v4274 = vpop.f32.mrf.mxu0
    %v4275 = vadd.f32 %v4234, %v4274
    %v4276 = vpop.f32.mrf.mxu0
    %v4277 = vpop.f32.mrf.mxu0
    %v4278 = vadd.f32 %v4237, %v4277
    %v4279 = vpop.f32.mrf.mxu0
    %4280 = vdwg.mxu0
    %4281 = vmatprep.subr.bf16.mxu0 0
    %4282 = vmatpush1.bf16.msra.mxu0 %v3676
    %4283 = vmatprep.subr.bf16.mxu0 0
    %4284 = vmatpush1.bf16.msra.mxu0 %v3675
    %4285 = vmatprep.subr.bf16.mxu0 0
    %4286 = vmatpush1.bf16.msra.mxu0 %v3674
    %4287 = vmatprep.subr.bf16.mxu0 0
    %4288 = vmatpush1.bf16.msra.mxu0 %v3673
    %4289 = vmatprep.subr.bf16.mxu0 0
    %4290 = vmatpush1.bf16.msra.mxu0 %v3672
    %4291 = vmatprep.subr.bf16.mxu0 0
    %4292 = vmatpush1.bf16.msra.mxu0 %v3671
    %4293 = vmatprep.subr.bf16.mxu0 0
    %4294 = vmatpush1.bf16.msra.mxu0 %v3670
    %4295 = vmatprep.subr.bf16.mxu0 0
    %4296 = vmatpush1.bf16.msra.mxu0 %v3669
    %4297 = vmatprep.subr.bf16.mxu0 0
    %4298 = vmatpush2.bf16.msra.mxu0 %v3684
    %4299 = vmatprep.subr.bf16.mxu0 0
    %4300 = vmatpush2.bf16.msra.mxu0 %v3683
    %4301 = vmatprep.subr.bf16.mxu0 0
    %4302 = vmatpush2.bf16.msra.mxu0 %v3682
    %4303 = vmatprep.subr.bf16.mxu0 0
    %4304 = vmatpush2.bf16.msra.mxu0 %v3681
    %4305 = vmatprep.subr.bf16.mxu0 0
    %4306 = vmatpush2.bf16.msra.mxu0 %v3680
    %4307 = vmatprep.subr.bf16.mxu0 0
    %4308 = vmatpush2.bf16.msra.mxu0 %v3679
    %4309 = vmatprep.subr.bf16.mxu0 0
    %4310 = vmatpush2.bf16.msra.mxu0 %v3678
    %4311 = vmatprep.subr.bf16.mxu0 0
    %4312 = vmatpush2.bf16.msra.mxu0 %v3677
    %4313 = vmatprep.mubr.bf16.mxu0 %v2039
    %4314 = vmatmul.mubr.bf16.gmra.mxu0 %v2038
    %v4315 = vpop.f32.mrf.mxu0
    %v4316 = vadd.f32 %v4275, %v4315
    %v4317 = vpop.f32.mrf.mxu0
    %v4318 = vpop.f32.mrf.mxu0
    %v4319 = vadd.f32 %v4278, %v4318
    %v4320 = vpop.f32.mrf.mxu0
    %4321 = vdwg.mxu0
    %4322 = vmatprep.subr.bf16.mxu0 0
    %4323 = vmatpush1.bf16.msra.mxu0 %v3692
    %4324 = vmatprep.subr.bf16.mxu0 0
    %4325 = vmatpush1.bf16.msra.mxu0 %v3691
    %4326 = vmatprep.subr.bf16.mxu0 0
    %4327 = vmatpush1.bf16.msra.mxu0 %v3690
    %4328 = vmatprep.subr.bf16.mxu0 0
    %4329 = vmatpush1.bf16.msra.mxu0 %v3689
    %4330 = vmatprep.subr.bf16.mxu0 0
    %4331 = vmatpush1.bf16.msra.mxu0 %v3688
    %4332 = vmatprep.subr.bf16.mxu0 0
    %4333 = vmatpush1.bf16.msra.mxu0 %v3687
    %4334 = vmatprep.subr.bf16.mxu0 0
    %4335 = vmatpush1.bf16.msra.mxu0 %v3686
    %4336 = vmatprep.subr.bf16.mxu0 0
    %4337 = vmatpush1.bf16.msra.mxu0 %v3685
    %4338 = vmatprep.subr.bf16.mxu0 0
    %4339 = vmatpush2.bf16.msra.mxu0 %v3700
    %4340 = vmatprep.subr.bf16.mxu0 0
    %4341 = vmatpush2.bf16.msra.mxu0 %v3699
    %4342 = vmatprep.subr.bf16.mxu0 0
    %4343 = vmatpush2.bf16.msra.mxu0 %v3698
    %4344 = vmatprep.subr.bf16.mxu0 0
    %4345 = vmatpush2.bf16.msra.mxu0 %v3697
    %4346 = vmatprep.subr.bf16.mxu0 0
    %4347 = vmatpush2.bf16.msra.mxu0 %v3696
    %4348 = vmatprep.subr.bf16.mxu0 0
    %4349 = vmatpush2.bf16.msra.mxu0 %v3695
    %4350 = vmatprep.subr.bf16.mxu0 0
    %4351 = vmatpush2.bf16.msra.mxu0 %v3694
    %4352 = vmatprep.subr.bf16.mxu0 0
    %4353 = vmatpush2.bf16.msra.mxu0 %v3693
    %4354 = vmatprep.mubr.bf16.mxu0 %v2041
    %4355 = vmatmul.mubr.bf16.gmra.mxu0 %v2040
    %v4356 = vpop.f32.mrf.mxu0
    %v4357 = vadd.f32 %v4316, %v4356
    %v4358 = vpop.f32.mrf.mxu0
    %v4359 = vpop.f32.mrf.mxu0
    %v4360 = vadd.f32 %v4319, %v4359
    %v4361 = vpop.f32.mrf.mxu0
    %4362 = vdwg.mxu0
    %4363 = vmatprep.subr.bf16.mxu0 0
    %4364 = vmatpush1.bf16.msra.mxu0 %v3708
    %4365 = vmatprep.subr.bf16.mxu0 0
    %4366 = vmatpush1.bf16.msra.mxu0 %v3707
    %4367 = vmatprep.subr.bf16.mxu0 0
    %4368 = vmatpush1.bf16.msra.mxu0 %v3706
    %4369 = vmatprep.subr.bf16.mxu0 0
    %4370 = vmatpush1.bf16.msra.mxu0 %v3705
    %4371 = vmatprep.subr.bf16.mxu0 0
    %4372 = vmatpush1.bf16.msra.mxu0 %v3704
    %4373 = vmatprep.subr.bf16.mxu0 0
    %4374 = vmatpush1.bf16.msra.mxu0 %v3703
    %4375 = vmatprep.subr.bf16.mxu0 0
    %4376 = vmatpush1.bf16.msra.mxu0 %v3702
    %4377 = vmatprep.subr.bf16.mxu0 0
    %4378 = vmatpush1.bf16.msra.mxu0 %v3701
    %4379 = vmatprep.subr.bf16.mxu0 0
    %4380 = vmatpush2.bf16.msra.mxu0 %v3716
    %4381 = vmatprep.subr.bf16.mxu0 0
    %4382 = vmatpush2.bf16.msra.mxu0 %v3715
    %4383 = vmatprep.subr.bf16.mxu0 0
    %4384 = vmatpush2.bf16.msra.mxu0 %v3714
    %4385 = vmatprep.subr.bf16.mxu0 0
    %4386 = vmatpush2.bf16.msra.mxu0 %v3713
    %4387 = vmatprep.subr.bf16.mxu0 0
    %4388 = vmatpush2.bf16.msra.mxu0 %v3712
    %4389 = vmatprep.subr.bf16.mxu0 0
    %4390 = vmatpush2.bf16.msra.mxu0 %v3711
    %4391 = vmatprep.subr.bf16.mxu0 0
    %4392 = vmatpush2.bf16.msra.mxu0 %v3710
    %4393 = vmatprep.subr.bf16.mxu0 0
    %4394 = vmatpush2.bf16.msra.mxu0 %v3709
    %4395 = vmatprep.mubr.bf16.mxu0 %v2043
    %4396 = vmatmul.mubr.bf16.gmra.mxu0 %v2042
    %v4397 = vpop.f32.mrf.mxu0
    %v4398 = vadd.f32 %v4357, %v4397
    %v4399 = vpop.f32.mrf.mxu0
    %v4400 = vpop.f32.mrf.mxu0
    %v4401 = vadd.f32 %v4360, %v4400
    %v4402 = vpop.f32.mrf.mxu0
    %4403 = vdwg.mxu0
    %4404 = vmatprep.subr.bf16.mxu0 0
    %4405 = vmatpush1.bf16.msra.mxu0 %v3724
    %4406 = vmatprep.subr.bf16.mxu0 0
    %4407 = vmatpush1.bf16.msra.mxu0 %v3723
    %4408 = vmatprep.subr.bf16.mxu0 0
    %4409 = vmatpush1.bf16.msra.mxu0 %v3722
    %4410 = vmatprep.subr.bf16.mxu0 0
    %4411 = vmatpush1.bf16.msra.mxu0 %v3721
    %4412 = vmatprep.subr.bf16.mxu0 0
    %4413 = vmatpush1.bf16.msra.mxu0 %v3720
    %4414 = vmatprep.subr.bf16.mxu0 0
    %4415 = vmatpush1.bf16.msra.mxu0 %v3719
    %4416 = vmatprep.subr.bf16.mxu0 0
    %4417 = vmatpush1.bf16.msra.mxu0 %v3718
    %4418 = vmatprep.subr.bf16.mxu0 0
    %4419 = vmatpush1.bf16.msra.mxu0 %v3717
    %4420 = vmatprep.subr.bf16.mxu0 0
    %4421 = vmatpush2.bf16.msra.mxu0 %v3732
    %4422 = vmatprep.subr.bf16.mxu0 0
    %4423 = vmatpush2.bf16.msra.mxu0 %v3731
    %4424 = vmatprep.subr.bf16.mxu0 0
    %4425 = vmatpush2.bf16.msra.mxu0 %v3730
    %4426 = vmatprep.subr.bf16.mxu0 0
    %4427 = vmatpush2.bf16.msra.mxu0 %v3729
    %4428 = vmatprep.subr.bf16.mxu0 0
    %4429 = vmatpush2.bf16.msra.mxu0 %v3728
    %4430 = vmatprep.subr.bf16.mxu0 0
    %4431 = vmatpush2.bf16.msra.mxu0 %v3727
    %4432 = vmatprep.subr.bf16.mxu0 0
    %4433 = vmatpush2.bf16.msra.mxu0 %v3726
    %4434 = vmatprep.subr.bf16.mxu0 0
    %4435 = vmatpush2.bf16.msra.mxu0 %v3725
    %4436 = vmatprep.mubr.bf16.mxu0 %v2045
    %4437 = vmatmul.mubr.bf16.gmra.mxu0 %v2044
    %v4438 = vpop.f32.mrf.mxu0
    %v4439 = vadd.f32 %v4398, %v4438
    %v4440 = vpop.f32.mrf.mxu0
    %v4441 = vpop.f32.mrf.mxu0
    %v4442 = vadd.f32 %v4401, %v4441
    %v4443 = vpop.f32.mrf.mxu0
    %4444 = vdwg.mxu0
    %4445 = vmatprep.subr.bf16.mxu0 0
    %4446 = vmatpush1.bf16.msra.mxu0 %v3740
    %4447 = vmatprep.subr.bf16.mxu0 0
    %4448 = vmatpush1.bf16.msra.mxu0 %v3739
    %4449 = vmatprep.subr.bf16.mxu0 0
    %4450 = vmatpush1.bf16.msra.mxu0 %v3738
    %4451 = vmatprep.subr.bf16.mxu0 0
    %4452 = vmatpush1.bf16.msra.mxu0 %v3737
    %4453 = vmatprep.subr.bf16.mxu0 0
    %4454 = vmatpush1.bf16.msra.mxu0 %v3736
    %4455 = vmatprep.subr.bf16.mxu0 0
    %4456 = vmatpush1.bf16.msra.mxu0 %v3735
    %4457 = vmatprep.subr.bf16.mxu0 0
    %4458 = vmatpush1.bf16.msra.mxu0 %v3734
    %4459 = vmatprep.subr.bf16.mxu0 0
    %4460 = vmatpush1.bf16.msra.mxu0 %v3733
    %4461 = vmatprep.subr.bf16.mxu0 0
    %4462 = vmatpush2.bf16.msra.mxu0 %v3748
    %4463 = vmatprep.subr.bf16.mxu0 0
    %4464 = vmatpush2.bf16.msra.mxu0 %v3747
    %4465 = vmatprep.subr.bf16.mxu0 0
    %4466 = vmatpush2.bf16.msra.mxu0 %v3746
    %4467 = vmatprep.subr.bf16.mxu0 0
    %4468 = vmatpush2.bf16.msra.mxu0 %v3745
    %4469 = vmatprep.subr.bf16.mxu0 0
    %4470 = vmatpush2.bf16.msra.mxu0 %v3744
    %4471 = vmatprep.subr.bf16.mxu0 0
    %4472 = vmatpush2.bf16.msra.mxu0 %v3743
    %4473 = vmatprep.subr.bf16.mxu0 0
    %4474 = vmatpush2.bf16.msra.mxu0 %v3742
    %4475 = vmatprep.subr.bf16.mxu0 0
    %4476 = vmatpush2.bf16.msra.mxu0 %v3741
    %4477 = vmatprep.mubr.bf16.mxu0 %v2047
    %4478 = vmatmul.mubr.bf16.gmra.mxu0 %v2046
    %v4479 = vpop.f32.mrf.mxu0
    %v4480 = vadd.f32 %v4439, %v4479
    %v4481 = vpop.f32.mrf.mxu0
    %v4482 = vpop.f32.mrf.mxu0
    %v4483 = vadd.f32 %v4442, %v4482
    %v4484 = vpop.f32.mrf.mxu0
    %4485 = vdwg.mxu0
    %4486 = vmatprep.subr.bf16.mxu0 0
    %4487 = vmatpush1.bf16.msra.mxu0 %v3756
    %4488 = vmatprep.subr.bf16.mxu0 0
    %4489 = vmatpush1.bf16.msra.mxu0 %v3755
    %4490 = vmatprep.subr.bf16.mxu0 0
    %4491 = vmatpush1.bf16.msra.mxu0 %v3754
    %4492 = vmatprep.subr.bf16.mxu0 0
    %4493 = vmatpush1.bf16.msra.mxu0 %v3753
    %4494 = vmatprep.subr.bf16.mxu0 0
    %4495 = vmatpush1.bf16.msra.mxu0 %v3752
    %4496 = vmatprep.subr.bf16.mxu0 0
    %4497 = vmatpush1.bf16.msra.mxu0 %v3751
    %4498 = vmatprep.subr.bf16.mxu0 0
    %4499 = vmatpush1.bf16.msra.mxu0 %v3750
    %4500 = vmatprep.subr.bf16.mxu0 0
    %4501 = vmatpush1.bf16.msra.mxu0 %v3749
    %4502 = vmatprep.subr.bf16.mxu0 0
    %4503 = vmatpush2.bf16.msra.mxu0 %v3764
    %4504 = vmatprep.subr.bf16.mxu0 0
    %4505 = vmatpush2.bf16.msra.mxu0 %v3763
    %4506 = vmatprep.subr.bf16.mxu0 0
    %4507 = vmatpush2.bf16.msra.mxu0 %v3762
    %4508 = vmatprep.subr.bf16.mxu0 0
    %4509 = vmatpush2.bf16.msra.mxu0 %v3761
    %4510 = vmatprep.subr.bf16.mxu0 0
    %4511 = vmatpush2.bf16.msra.mxu0 %v3760
    %4512 = vmatprep.subr.bf16.mxu0 0
    %4513 = vmatpush2.bf16.msra.mxu0 %v3759
    %4514 = vmatprep.subr.bf16.mxu0 0
    %4515 = vmatpush2.bf16.msra.mxu0 %v3758
    %4516 = vmatprep.subr.bf16.mxu0 0
    %4517 = vmatpush2.bf16.msra.mxu0 %v3757
    %4518 = vmatprep.mubr.bf16.mxu0 %v2049
    %4519 = vmatmul.mubr.bf16.gmra.mxu0 %v2048
    %v4520 = vpop.f32.mrf.mxu0
    %v4521 = vadd.f32 %v4480, %v4520
    %v4522 = vpop.f32.mrf.mxu0
    %v4523 = vpop.f32.mrf.mxu0
    %v4524 = vadd.f32 %v4483, %v4523
    %v4525 = vpop.f32.mrf.mxu0
    %4526 = vdwg.mxu0
    %4527 = vmatprep.subr.bf16.mxu0 0
    %4528 = vmatpush1.bf16.msra.mxu0 %v3772
    %4529 = vmatprep.subr.bf16.mxu0 0
    %4530 = vmatpush1.bf16.msra.mxu0 %v3771
    %4531 = vmatprep.subr.bf16.mxu0 0
    %4532 = vmatpush1.bf16.msra.mxu0 %v3770
    %4533 = vmatprep.subr.bf16.mxu0 0
    %4534 = vmatpush1.bf16.msra.mxu0 %v3769
    %4535 = vmatprep.subr.bf16.mxu0 0
    %4536 = vmatpush1.bf16.msra.mxu0 %v3768
    %4537 = vmatprep.subr.bf16.mxu0 0
    %4538 = vmatpush1.bf16.msra.mxu0 %v3767
    %4539 = vmatprep.subr.bf16.mxu0 0
    %4540 = vmatpush1.bf16.msra.mxu0 %v3766
    %4541 = vmatprep.subr.bf16.mxu0 0
    %4542 = vmatpush1.bf16.msra.mxu0 %v3765
    %4543 = vmatprep.subr.bf16.mxu0 0
    %4544 = vmatpush2.bf16.msra.mxu0 %v3780
    %4545 = vmatprep.subr.bf16.mxu0 0
    %4546 = vmatpush2.bf16.msra.mxu0 %v3779
    %4547 = vmatprep.subr.bf16.mxu0 0
    %4548 = vmatpush2.bf16.msra.mxu0 %v3778
    %4549 = vmatprep.subr.bf16.mxu0 0
    %4550 = vmatpush2.bf16.msra.mxu0 %v3777
    %4551 = vmatprep.subr.bf16.mxu0 0
    %4552 = vmatpush2.bf16.msra.mxu0 %v3776
    %4553 = vmatprep.subr.bf16.mxu0 0
    %4554 = vmatpush2.bf16.msra.mxu0 %v3775
    %4555 = vmatprep.subr.bf16.mxu0 0
    %4556 = vmatpush2.bf16.msra.mxu0 %v3774
    %4557 = vmatprep.subr.bf16.mxu0 0
    %4558 = vmatpush2.bf16.msra.mxu0 %v3773
    %4559 = vmatprep.mubr.bf16.mxu0 %v2051
    %4560 = vmatmul.mubr.bf16.gmra.mxu0 %v2050
    %v4561 = vpop.f32.mrf.mxu0
    %v4562 = vadd.f32 %v4521, %v4561
    %v4563 = vpop.f32.mrf.mxu0
    %v4564 = vpop.f32.mrf.mxu0
    %v4565 = vadd.f32 %v4524, %v4564
    %v4566 = vpop.f32.mrf.mxu0
    %4567 = vdwg.mxu0
    %4568 = vmatprep.subr.bf16.mxu0 0
    %4569 = vmatpush1.bf16.msra.mxu0 %v3788
    %4570 = vmatprep.subr.bf16.mxu0 0
    %4571 = vmatpush1.bf16.msra.mxu0 %v3787
    %4572 = vmatprep.subr.bf16.mxu0 0
    %4573 = vmatpush1.bf16.msra.mxu0 %v3786
    %4574 = vmatprep.subr.bf16.mxu0 0
    %4575 = vmatpush1.bf16.msra.mxu0 %v3785
    %4576 = vmatprep.subr.bf16.mxu0 0
    %4577 = vmatpush1.bf16.msra.mxu0 %v3784
    %4578 = vmatprep.subr.bf16.mxu0 0
    %4579 = vmatpush1.bf16.msra.mxu0 %v3783
    %4580 = vmatprep.subr.bf16.mxu0 0
    %4581 = vmatpush1.bf16.msra.mxu0 %v3782
    %4582 = vmatprep.subr.bf16.mxu0 0
    %4583 = vmatpush1.bf16.msra.mxu0 %v3781
    %4584 = vmatprep.subr.bf16.mxu0 0
    %4585 = vmatpush2.bf16.msra.mxu0 %v3796
    %4586 = vmatprep.subr.bf16.mxu0 0
    %4587 = vmatpush2.bf16.msra.mxu0 %v3795
    %4588 = vmatprep.subr.bf16.mxu0 0
    %4589 = vmatpush2.bf16.msra.mxu0 %v3794
    %4590 = vmatprep.subr.bf16.mxu0 0
    %4591 = vmatpush2.bf16.msra.mxu0 %v3793
    %4592 = vmatprep.subr.bf16.mxu0 0
    %4593 = vmatpush2.bf16.msra.mxu0 %v3792
    %4594 = vmatprep.subr.bf16.mxu0 0
    %4595 = vmatpush2.bf16.msra.mxu0 %v3791
    %4596 = vmatprep.subr.bf16.mxu0 0
    %4597 = vmatpush2.bf16.msra.mxu0 %v3790
    %4598 = vmatprep.subr.bf16.mxu0 0
    %4599 = vmatpush2.bf16.msra.mxu0 %v3789
    %4600 = vmatprep.mubr.bf16.mxu0 %v2053
    %4601 = vmatmul.mubr.bf16.gmra.mxu0 %v2052
    %v4602 = vpop.f32.mrf.mxu0
    %v4603 = vadd.f32 %v4562, %v4602
    %v4604 = vpop.f32.mrf.mxu0
    %v4605 = vpop.f32.mrf.mxu0
    %v4606 = vadd.f32 %v4565, %v4605
    %v4607 = vpop.f32.mrf.mxu0
    %4608 = vdwg.mxu0
    %4609 = vmatprep.subr.bf16.mxu0 0
    %4610 = vmatpush1.bf16.msra.mxu0 %v3804
    %4611 = vmatprep.subr.bf16.mxu0 0
    %4612 = vmatpush1.bf16.msra.mxu0 %v3803
    %4613 = vmatprep.subr.bf16.mxu0 0
    %4614 = vmatpush1.bf16.msra.mxu0 %v3802
    %4615 = vmatprep.subr.bf16.mxu0 0
    %4616 = vmatpush1.bf16.msra.mxu0 %v3801
    %4617 = vmatprep.subr.bf16.mxu0 0
    %4618 = vmatpush1.bf16.msra.mxu0 %v3800
    %4619 = vmatprep.subr.bf16.mxu0 0
    %4620 = vmatpush1.bf16.msra.mxu0 %v3799
    %4621 = vmatprep.subr.bf16.mxu0 0
    %4622 = vmatpush1.bf16.msra.mxu0 %v3798
    %4623 = vmatprep.subr.bf16.mxu0 0
    %4624 = vmatpush1.bf16.msra.mxu0 %v3797
    %4625 = vmatprep.subr.bf16.mxu0 0
    %4626 = vmatpush2.bf16.msra.mxu0 %v3812
    %4627 = vmatprep.subr.bf16.mxu0 0
    %4628 = vmatpush2.bf16.msra.mxu0 %v3811
    %4629 = vmatprep.subr.bf16.mxu0 0
    %4630 = vmatpush2.bf16.msra.mxu0 %v3810
    %4631 = vmatprep.subr.bf16.mxu0 0
    %4632 = vmatpush2.bf16.msra.mxu0 %v3809
    %4633 = vmatprep.subr.bf16.mxu0 0
    %4634 = vmatpush2.bf16.msra.mxu0 %v3808
    %4635 = vmatprep.subr.bf16.mxu0 0
    %4636 = vmatpush2.bf16.msra.mxu0 %v3807
    %4637 = vmatprep.subr.bf16.mxu0 0
    %4638 = vmatpush2.bf16.msra.mxu0 %v3806
    %4639 = vmatprep.subr.bf16.mxu0 0
    %4640 = vmatpush2.bf16.msra.mxu0 %v3805
    %4641 = vmatprep.mubr.bf16.mxu0 %v2055
    %4642 = vmatmul.mubr.bf16.gmra.mxu0 %v2054
    %v4643 = vpop.f32.mrf.mxu0
    %v4644 = vadd.f32 %v4603, %v4643
    %v4645 = vpop.f32.mrf.mxu0
    %v4646 = vpop.f32.mrf.mxu0
    %v4647 = vadd.f32 %v4606, %v4646
    %v4648 = vpop.f32.mrf.mxu0
    %4649 = vdwg.mxu0
    %4650 = vmatprep.subr.bf16.mxu0 0
    %4651 = vmatpush1.bf16.msra.mxu0 %v3820
    %4652 = vmatprep.subr.bf16.mxu0 0
    %4653 = vmatpush1.bf16.msra.mxu0 %v3819
    %4654 = vmatprep.subr.bf16.mxu0 0
    %4655 = vmatpush1.bf16.msra.mxu0 %v3818
    %4656 = vmatprep.subr.bf16.mxu0 0
    %4657 = vmatpush1.bf16.msra.mxu0 %v3817
    %4658 = vmatprep.subr.bf16.mxu0 0
    %4659 = vmatpush1.bf16.msra.mxu0 %v3816
    %4660 = vmatprep.subr.bf16.mxu0 0
    %4661 = vmatpush1.bf16.msra.mxu0 %v3815
    %4662 = vmatprep.subr.bf16.mxu0 0
    %4663 = vmatpush1.bf16.msra.mxu0 %v3814
    %4664 = vmatprep.subr.bf16.mxu0 0
    %4665 = vmatpush1.bf16.msra.mxu0 %v3813
    %4666 = vmatprep.subr.bf16.mxu0 0
    %4667 = vmatpush2.bf16.msra.mxu0 %v3828
    %4668 = vmatprep.subr.bf16.mxu0 0
    %4669 = vmatpush2.bf16.msra.mxu0 %v3827
    %4670 = vmatprep.subr.bf16.mxu0 0
    %4671 = vmatpush2.bf16.msra.mxu0 %v3826
    %4672 = vmatprep.subr.bf16.mxu0 0
    %4673 = vmatpush2.bf16.msra.mxu0 %v3825
    %4674 = vmatprep.subr.bf16.mxu0 0
    %4675 = vmatpush2.bf16.msra.mxu0 %v3824
    %4676 = vmatprep.subr.bf16.mxu0 0
    %4677 = vmatpush2.bf16.msra.mxu0 %v3823
    %4678 = vmatprep.subr.bf16.mxu0 0
    %4679 = vmatpush2.bf16.msra.mxu0 %v3822
    %4680 = vmatprep.subr.bf16.mxu0 0
    %4681 = vmatpush2.bf16.msra.mxu0 %v3821
    %4682 = vmatprep.mubr.bf16.mxu0 %v2057
    %4683 = vmatmul.mubr.bf16.gmra.mxu0 %v2056
    %v4684 = vpop.f32.mrf.mxu0
    %v4685 = vadd.f32 %v4644, %v4684
    %v4686 = vpop.f32.mrf.mxu0
    %v4687 = vpop.f32.mrf.mxu0
    %v4688 = vadd.f32 %v4647, %v4687
    %v4689 = vpop.f32.mrf.mxu0
    %4690 = vdwg.mxu0
    %4691 = vmatprep.subr.bf16.mxu0 0
    %4692 = vmatpush1.bf16.msra.mxu0 %v3836
    %4693 = vmatprep.subr.bf16.mxu0 0
    %4694 = vmatpush1.bf16.msra.mxu0 %v3835
    %4695 = vmatprep.subr.bf16.mxu0 0
    %4696 = vmatpush1.bf16.msra.mxu0 %v3834
    %4697 = vmatprep.subr.bf16.mxu0 0
    %4698 = vmatpush1.bf16.msra.mxu0 %v3833
    %4699 = vmatprep.subr.bf16.mxu0 0
    %4700 = vmatpush1.bf16.msra.mxu0 %v3832
    %4701 = vmatprep.subr.bf16.mxu0 0
    %4702 = vmatpush1.bf16.msra.mxu0 %v3831
    %4703 = vmatprep.subr.bf16.mxu0 0
    %4704 = vmatpush1.bf16.msra.mxu0 %v3830
    %4705 = vmatprep.subr.bf16.mxu0 0
    %4706 = vmatpush1.bf16.msra.mxu0 %v3829
    %4707 = vmatprep.subr.bf16.mxu0 0
    %4708 = vmatpush2.bf16.msra.mxu0 %v3844
    %4709 = vmatprep.subr.bf16.mxu0 0
    %4710 = vmatpush2.bf16.msra.mxu0 %v3843
    %4711 = vmatprep.subr.bf16.mxu0 0
    %4712 = vmatpush2.bf16.msra.mxu0 %v3842
    %4713 = vmatprep.subr.bf16.mxu0 0
    %4714 = vmatpush2.bf16.msra.mxu0 %v3841
    %4715 = vmatprep.subr.bf16.mxu0 0
    %4716 = vmatpush2.bf16.msra.mxu0 %v3840
    %4717 = vmatprep.subr.bf16.mxu0 0
    %4718 = vmatpush2.bf16.msra.mxu0 %v3839
    %4719 = vmatprep.subr.bf16.mxu0 0
    %4720 = vmatpush2.bf16.msra.mxu0 %v3838
    %4721 = vmatprep.subr.bf16.mxu0 0
    %4722 = vmatpush2.bf16.msra.mxu0 %v3837
    %4723 = vmatprep.mubr.bf16.mxu0 %v2059
    %4724 = vmatmul.mubr.bf16.gmra.mxu0 %v2058
    %v4725 = vpop.f32.mrf.mxu0
    %v4726 = vadd.f32 %v4685, %v4725
    %v4727 = vpop.f32.mrf.mxu0
    %v4728 = vpop.f32.mrf.mxu0
    %v4729 = vadd.f32 %v4688, %v4728
    %v4730 = vpop.f32.mrf.mxu0
    %4731 = vdwg.mxu0
    %4732 = vmatprep.subr.bf16.mxu0 0
    %4733 = vmatpush1.bf16.msra.mxu0 %v3852
    %4734 = vmatprep.subr.bf16.mxu0 0
    %4735 = vmatpush1.bf16.msra.mxu0 %v3851
    %4736 = vmatprep.subr.bf16.mxu0 0
    %4737 = vmatpush1.bf16.msra.mxu0 %v3850
    %4738 = vmatprep.subr.bf16.mxu0 0
    %4739 = vmatpush1.bf16.msra.mxu0 %v3849
    %4740 = vmatprep.subr.bf16.mxu0 0
    %4741 = vmatpush1.bf16.msra.mxu0 %v3848
    %4742 = vmatprep.subr.bf16.mxu0 0
    %4743 = vmatpush1.bf16.msra.mxu0 %v3847
    %4744 = vmatprep.subr.bf16.mxu0 0
    %4745 = vmatpush1.bf16.msra.mxu0 %v3846
    %4746 = vmatprep.subr.bf16.mxu0 0
    %4747 = vmatpush1.bf16.msra.mxu0 %v3845
    %4748 = vmatprep.subr.bf16.mxu0 0
    %4749 = vmatpush2.bf16.msra.mxu0 %v3860
    %4750 = vmatprep.subr.bf16.mxu0 0
    %4751 = vmatpush2.bf16.msra.mxu0 %v3859
    %4752 = vmatprep.subr.bf16.mxu0 0
    %4753 = vmatpush2.bf16.msra.mxu0 %v3858
    %4754 = vmatprep.subr.bf16.mxu0 0
    %4755 = vmatpush2.bf16.msra.mxu0 %v3857
    %4756 = vmatprep.subr.bf16.mxu0 0
    %4757 = vmatpush2.bf16.msra.mxu0 %v3856
    %4758 = vmatprep.subr.bf16.mxu0 0
    %4759 = vmatpush2.bf16.msra.mxu0 %v3855
    %4760 = vmatprep.subr.bf16.mxu0 0
    %4761 = vmatpush2.bf16.msra.mxu0 %v3854
    %4762 = vmatprep.subr.bf16.mxu0 0
    %4763 = vmatpush2.bf16.msra.mxu0 %v3853
    %4764 = vmatprep.mubr.bf16.mxu0 %v2061
    %4765 = vmatmul.mubr.bf16.gmra.mxu0 %v2060
    %v4766 = vpop.f32.mrf.mxu0
    %v4767 = vadd.f32 %v4726, %v4766
    %v4768 = vpop.f32.mrf.mxu0
    %v4769 = vpop.f32.mrf.mxu0
    %v4770 = vadd.f32 %v4729, %v4769
    %v4771 = vpop.f32.mrf.mxu0
    %4772 = vdwg.mxu0
    %4773 = vst [vmem:[#allocation10] sm:$0xff] %v4767
    %4774 = vst [vmem:[#allocation10 + $0x8] sm:$0xff] %v4770
    // Predicated region
    $region38: #{tpu_custom_call.1} parent=1 // pred_check
      _
    $region39: #{tpu_custom_call.1} parent=1 // pred_check_branch
      %4776 = sbr.rel (0) target = $region41
    $region40: #{tpu_custom_call.1} parent=1 // pred_region
      %s4778 = ssub.s32 256, 256
      %4779 = vsyncadd [#allocation4], %s4778
      %s4780 = sshll.u32 [#allocation10], 4
      %s4781 = int_to_ptr.vmem [resolvable:$true] %s4780
      %4786 = dma.vmem_to_hbm [thread:$0]  %s4781, 256, %s5, [#allocation4], 128, 128, 8
    $region41: #{tpu_custom_call.1} parent=1 // pred_fallthru
      _
    // Predicated region
    $region42: #{tpu_custom_call.1} parent=1 // pred_check
      _
    $region43: #{tpu_custom_call.1} parent=1 // pred_check_branch
      %4788 = sbr.rel (0) target = $region45
    $region44: #{tpu_custom_call.1} parent=1 // pred_region
      %4789 = dma.done [#allocation4], 256
    $region45: #{tpu_custom_call.1} parent=1 // pred_fallthru
      _
    %4790 = vsyncpa [#allocation3], 1
    %4791 = vsyncpa [#allocation6], 1
    %4792 = vsyncpa [#allocation9], 1
    %4793 = vsyncpa [#allocation4], 1

</llo_original>
